<compile_context>
chip_gen: v5e
topology: v5e:2x2
jax: 0.10.0
libtpu: 0.0.40
codegen_flags: <defaults>
</compile_context>

<pallas_src>
import functools

import jax
import jax.numpy as jnp
from jax.experimental import pallas as pl
from jax.experimental.pallas import tpu as pltpu

VMEM_SPEC = pl.BlockSpec(memory_space=pltpu.MemorySpace.VMEM)

# ----------------------------- config (synthetic, small) -----------------------------
STATE_DIM = 6        # args.state_dim
NF_PARTICLE = 32     # args.nf_particle
NF_EFFECT = 32       # args.nf_effect
POSITION_DIM = 3     # args.position_dim
NUM_HEADS = 4        # args.trans_num_heads
NUM_LAYERS = 2       # args.trans_num_layers
FFN_DIM = NF_EFFECT  # TransformerInteractor(dim_feedforward=nf_effect)
N_PARTICLES = 16
INSTANCE_IDX = [0, 8, 16]
MATERIALS = ["rigid", "fluid"]
DT = 0.01            # args.dt * args.training_fpt


# ----------------------------- fused Pallas kernel -----------------------------
def _fused_forward_kernel(*refs, num_heads, num_layers, rigid_slices):
    """Encoder -> num_layers pre-LN transformer layers -> fluid & rigid predictors.

    All inputs/outputs live wholly in VMEM; activations never touch HBM between
    stages. rigid_slices is a static tuple of (start, end) particle ranges.
    """
    i = 0
    state_ref = refs[i]; i += 1
    ew1, eb1, ew2, eb2 = refs[i:i + 4]; i += 4
    layers = []
    for _ in range(num_layers):
        layers.append(refs[i:i + 12]); i += 12
    rw0, rb0, rw1, rb1, rw2, rb2 = refs[i:i + 6]; i += 6
    fw0, fb0, fw1, fb1, fw2, fb2 = refs[i:i + 6]; i += 6
    fluid_out_ref, rigid_out_ref = refs[i], refs[i + 1]

    def dense(v, w_ref, b_ref):
        return jnp.dot(v, w_ref[...], preferred_element_type=jnp.float32) + b_ref[...]

    def layer_norm(v, g_ref, b_ref):
        mu = jnp.mean(v, axis=-1, keepdims=True)
        var = jnp.mean((v - mu) ** 2, axis=-1, keepdims=True)
        return (v - mu) * jax.lax.rsqrt(var + 1e-5) * g_ref[...] + b_ref[...]

    def predictor(v, w0, b0, w1, b1, w2, b2):
        h = jnp.maximum(dense(v, w0, b0), 0.0)
        h = jnp.maximum(dense(h, w1, b1), 0.0)
        return dense(h, w2, b2)

    x = state_ref[...].astype(jnp.float32)

    # --- ParticleEncoder: relu(relu(x @ W1 + b1) @ W2 + b2) ---
    h = jnp.maximum(dense(x, ew1, eb1), 0.0)
    eff = jnp.maximum(dense(h, ew2, eb2), 0.0)                 # [n, e]

    n, e = eff.shape
    dh = e // num_heads
    scale = float(dh) ** -0.5                                  # static python scalar

    # --- TransformerEncoder (pre-LN, relu FFN, no final norm) ---
    for (g1, be1, wqkv_r, bqkv_r, wo_r, bo_r,
         g2, be2, wf1_r, bf1_r, wf2_r, bf2_r) in layers:
        # self-attention block: x = x + MHA(LN1(x))
        hn = layer_norm(eff, g1, be1)
        qkv = dense(hn, wqkv_r, bqkv_r)                        # [n, 3e]
        wo = wo_r[...]                                         # [e, e]
        attn = jnp.zeros((n, e), jnp.float32)
        for hd in range(num_heads):                            # static unroll
            q_h = qkv[:, hd * dh:(hd + 1) * dh]
            k_h = qkv[:, e + hd * dh:e + (hd + 1) * dh]
            v_h = qkv[:, 2 * e + hd * dh:2 * e + (hd + 1) * dh]
            s = jnp.dot(q_h, k_h.T, preferred_element_type=jnp.float32) * scale
            s = s - jnp.max(s, axis=-1, keepdims=True)
            p = jnp.exp(s)
            a = p * pl.reciprocal(jnp.sum(p, axis=-1, keepdims=True), approx=True)
            ctx_h = jnp.dot(a, v_h, preferred_element_type=jnp.float32)   # [n, dh]
            # fold head into output projection via a SUBLANE slice of wo
            # (no lane-axis concatenate of head contexts).
            attn = attn + jnp.dot(ctx_h, wo[hd * dh:(hd + 1) * dh, :],
                                  preferred_element_type=jnp.float32)
        eff = eff + attn + bo_r[...]

        # feed-forward block: x = x + FFN(LN2(x))
        hn2 = layer_norm(eff, g2, be2)
        f = jnp.maximum(dense(hn2, wf1_r, bf1_r), 0.0)
        eff = eff + dense(f, wf2_r, bf2_r)

    # --- fluid predictor over ALL particles (same MXU cost as any slice) ---
    fluid_out_ref[...] = predictor(eff, fw0, fb0, fw1, fb1, fw2, fb2).astype(
        fluid_out_ref.dtype)

    # --- rigid predictor on per-instance row means ---
    if rigid_slices:
        means = [jnp.mean(eff[st:ed], axis=0, keepdims=True) for st, ed in rigid_slices]
        rin = means[0] if len(means) == 1 else jnp.concatenate(means, axis=0)
        rigid_out_ref[...] = predictor(rin, rw0, rb0, rw1, rb1, rw2, rb2).astype(
            rigid_out_ref.dtype)
    else:
        rigid_out_ref[...] = jnp.zeros_like(rigid_out_ref)


# ----------------------------- wrapper -----------------------------
def fused_forward(state, params, instance_idx, materials):
    rigid_slices = tuple(
        (int(instance_idx[i]), int(instance_idx[i + 1]))
        for i in range(len(materials)) if materials[i] == "rigid")

    args = [state]
    args += list(params["encoder"])
    for lp in params["transformer"]:
        args += [lp["g1"], lp["b1"], lp["wqkv"], lp["bqkv"], lp["wo"], lp["bo"],
                 lp["g2"], lp["b2"], lp["wf1"], lp["bf1"], lp["wf2"], lp["bf2"]]
    args += list(params["rigid"])
    args += list(params["fluid"])

    n = state.shape[0]
    e = NF_EFFECT
    pos_dim = params["fluid"][-2].shape[-1]
    n_rigid = max(1, len(rigid_slices))
    num_layers = len(params["transformer"])

    # advisory cost estimate (tiny kernel -> tell XLA not to over-schedule around it)
    per_layer_flops = (2 * n * e * 3 * e                       # qkv proj
                       + NUM_HEADS * (4 * n * n * (e // NUM_HEADS))  # scores + ctx
                       + 2 * n * e * e                         # out proj (accumulated)
                       + 4 * n * e * FFN_DIM)                  # ffn
    flops = (2 * n * (STATE_DIM * NF_PARTICLE + NF_PARTICLE * e)
             + num_layers * per_layer_flops
             + 2 * n * (e * e + e * e + e * pos_dim)
             + 2 * n_rigid * (e * e + e * e + e * 7))
    transcendentals = num_layers * NUM_HEADS * n * n
    bytes_accessed = sum(int(a.nbytes) for a in args) + (n * pos_dim + n_rigid * 7) * 4

    kernel = functools.partial(
        _fused_forward_kernel,
        num_heads=NUM_HEADS, num_layers=num_layers, rigid_slices=rigid_slices)

    fluid_all, rigid_t = pl.pallas_call(
        kernel,
        out_shape=(jax.ShapeDtypeStruct((n, pos_dim), state.dtype),
                   jax.ShapeDtypeStruct((n_rigid, 7), state.dtype)),
        in_specs=[VMEM_SPEC] * len(args),
        out_specs=(VMEM_SPEC, VMEM_SPEC),
        cost_estimate=pl.CostEstimate(flops=flops,
                                      transcendentals=transcendentals,
                                      bytes_accessed=bytes_accessed),
    )(*args)
    return fluid_all, rigid_t


def rotation_matrix_from_quaternion(q):
    q = q / jnp.linalg.norm(q)
    w, x, y, z = q[0], q[1], q[2], q[3]
    row0 = jnp.stack([1.0 - 2 * y * y - 2 * z * z, 2 * x * y + 2 * z * w, 2 * x * z - 2 * y * w])
    row1 = jnp.stack([2 * x * y - 2 * z * w, 1.0 - 2 * x * x - 2 * z * z, 2 * y * z + 2 * x * w])
    row2 = jnp.stack([2 * x * z + 2 * y * w, 2 * y * z - 2 * x * w, 1.0 - 2 * x * x - 2 * y * y])
    return jnp.stack([row0, row1, row2], axis=0)


def mymodel5_forward(state, params, consts, instance_idx, materials):
    # one fused Pallas kernel: encoder + transformer + both predictors
    fluid_all, rigid_t = fused_forward(state, params, instance_idx, materials)

    preds = []
    rigid_row = 0
    for i in range(len(instance_idx) - 1):
        st, ed = instance_idx[i], instance_idx[i + 1]
        if materials[i] == "rigid":
            t = rigid_t[rigid_row]
            rigid_row += 1
            R = rotation_matrix_from_quaternion(t[:4] + consts["quat_offset"])
            b = t[4:] * consts["std_p"]
            p_0 = state[st:ed, :3] * consts["std_p"] + consts["mean_p"]
            c = jnp.mean(p_0, axis=0)
            p_1 = jnp.dot(p_0 - c, R) + b + c
            v = (p_1 - p_0) / consts["dt"]
            preds.append((v - consts["mean_v"]) / consts["std_v"])
        elif materials[i] in ("fluid", "cloth"):
            preds.append(fluid_all[st:ed])
    return jnp.concatenate(preds, axis=0)


# ----------------------------- deterministic parameter init -----------------------------
def dense_init(key, fan_in, fan_out):
    """PyTorch nn.Linear default init; weight stored [in, out], bias stored [1, out]."""
    k1, k2 = jax.random.split(key)
    lim = 1.0 / jnp.sqrt(jnp.float32(fan_in))
    w = jax.random.uniform(k1, (fan_in, fan_out), jnp.float32, -lim, lim)
    b = jax.random.uniform(k2, (1, fan_out), jnp.float32, -lim, lim)
    return w, b


def init_params(key):
    keys = jax.random.split(key, 16)
    # ParticleEncoder(state_dim -> nf_particle -> nf_effect)
    w1, b1 = dense_init(keys[0], STATE_DIM, NF_PARTICLE)
    w2, b2 = dense_init(keys[1], NF_PARTICLE, NF_EFFECT)
    encoder = (w1, b1, w2, b2)

    # TransformerEncoder layers (pre-LN), LN params stored (1, E)
    transformer = []
    for li in range(NUM_LAYERS):
        lk = jax.random.split(keys[2 + li], 4)
        wqkv, bqkv = dense_init(lk[0], NF_EFFECT, 3 * NF_EFFECT)
        wo, bo = dense_init(lk[1], NF_EFFECT, NF_EFFECT)
        wf1, bf1 = dense_init(lk[2], NF_EFFECT, FFN_DIM)
        wf2, bf2 = dense_init(lk[3], FFN_DIM, NF_EFFECT)
        transformer.append(dict(
            g1=jnp.ones((1, NF_EFFECT), jnp.float32), b1=jnp.zeros((1, NF_EFFECT), jnp.float32),
            wqkv=wqkv, bqkv=bqkv, wo=wo, bo=bo,
            g2=jnp.ones((1, NF_EFFECT), jnp.float32), b2=jnp.zeros((1, NF_EFFECT), jnp.float32),
            wf1=wf1, bf1=bf1, wf2=wf2, bf2=bf2))

    # rigid predictor: nf_effect -> nf_effect -> nf_effect -> 7
    rw0, rb0 = dense_init(keys[10], NF_EFFECT, NF_EFFECT)
    rw1, rb1 = dense_init(keys[11], NF_EFFECT, NF_EFFECT)
    rw2, rb2 = dense_init(keys[12], NF_EFFECT, 7)
    rigid = (rw0, rb0, rw1, rb1, rw2, rb2)

    # fluid predictor: nf_effect -> nf_effect -> nf_effect -> position_dim
    fw0, fb0 = dense_init(keys[13], NF_EFFECT, NF_EFFECT)
    fw1, fb1 = dense_init(keys[14], NF_EFFECT, NF_EFFECT)
    fw2, fb2 = dense_init(keys[15], NF_EFFECT, POSITION_DIM)
    fluid = (fw0, fb0, fw1, fb1, fw2, fb2)

    return dict(encoder=encoder, transformer=transformer, rigid=rigid, fluid=fluid)


if __name__ == "__main__":
    key = jax.random.PRNGKey(0)
    k_state, k_params = jax.random.split(key)

    # state: [n_particles, state_dim]
    state = jax.random.normal(k_state, (N_PARTICLES, STATE_DIM), jnp.float32)
    params = init_params(k_params)

    # stat-derived constants (synthetic, nonzero std)
    consts = dict(
        quat_offset=jnp.array([1.0, 0.0, 0.0, 0.0], jnp.float32),
        mean_p=jnp.array([0.1, 0.2, 0.3], jnp.float32),
        std_p=jnp.array([1.0, 1.1, 0.9], jnp.float32),
        mean_v=jnp.array([0.0, 0.05, -0.05], jnp.float32),
        std_v=jnp.array([0.5, 0.6, 0.7], jnp.float32),
        dt=jnp.float32(DT),
    )

    fwd = jax.jit(lambda s, p, c: mymodel5_forward(s, p, c, INSTANCE_IDX, MATERIALS))
    pred = fwd(state, params, consts)
    pred = jax.block_until_ready(pred)
    assert pred.shape == (N_PARTICLES, POSITION_DIM), pred.shape
    assert jnp.all(jnp.isfinite(pred))
    print("KERNEL_OK")
</pallas_src>

<mosaic_0001>
module attributes {stable_mosaic.version = 11 : i64} {
  func.func @_fused_forward_kernel(%arg0: memref<16x6xf32, #tpu.memory_space<vmem>>, %arg1: memref<6x32xf32, #tpu.memory_space<vmem>>, %arg2: memref<1x32xf32, #tpu.memory_space<vmem>>, %arg3: memref<32x32xf32, #tpu.memory_space<vmem>>, %arg4: memref<1x32xf32, #tpu.memory_space<vmem>>, %arg5: memref<1x32xf32, #tpu.memory_space<vmem>>, %arg6: memref<1x32xf32, #tpu.memory_space<vmem>>, %arg7: memref<32x96xf32, #tpu.memory_space<vmem>>, %arg8: memref<1x96xf32, #tpu.memory_space<vmem>>, %arg9: memref<32x32xf32, #tpu.memory_space<vmem>>, %arg10: memref<1x32xf32, #tpu.memory_space<vmem>>, %arg11: memref<1x32xf32, #tpu.memory_space<vmem>>, %arg12: memref<1x32xf32, #tpu.memory_space<vmem>>, %arg13: memref<32x32xf32, #tpu.memory_space<vmem>>, %arg14: memref<1x32xf32, #tpu.memory_space<vmem>>, %arg15: memref<32x32xf32, #tpu.memory_space<vmem>>, %arg16: memref<1x32xf32, #tpu.memory_space<vmem>>, %arg17: memref<1x32xf32, #tpu.memory_space<vmem>>, %arg18: memref<1x32xf32, #tpu.memory_space<vmem>>, %arg19: memref<32x96xf32, #tpu.memory_space<vmem>>, %arg20: memref<1x96xf32, #tpu.memory_space<vmem>>, %arg21: memref<32x32xf32, #tpu.memory_space<vmem>>, %arg22: memref<1x32xf32, #tpu.memory_space<vmem>>, %arg23: memref<1x32xf32, #tpu.memory_space<vmem>>, %arg24: memref<1x32xf32, #tpu.memory_space<vmem>>, %arg25: memref<32x32xf32, #tpu.memory_space<vmem>>, %arg26: memref<1x32xf32, #tpu.memory_space<vmem>>, %arg27: memref<32x32xf32, #tpu.memory_space<vmem>>, %arg28: memref<1x32xf32, #tpu.memory_space<vmem>>, %arg29: memref<32x32xf32, #tpu.memory_space<vmem>>, %arg30: memref<1x32xf32, #tpu.memory_space<vmem>>, %arg31: memref<32x32xf32, #tpu.memory_space<vmem>>, %arg32: memref<1x32xf32, #tpu.memory_space<vmem>>, %arg33: memref<32x7xf32, #tpu.memory_space<vmem>>, %arg34: memref<1x7xf32, #tpu.memory_space<vmem>>, %arg35: memref<32x32xf32, #tpu.memory_space<vmem>>, %arg36: memref<1x32xf32, #tpu.memory_space<vmem>>, %arg37: memref<32x32xf32, #tpu.memory_space<vmem>>, %arg38: memref<1x32xf32, #tpu.memory_space<vmem>>, %arg39: memref<32x3xf32, #tpu.memory_space<vmem>>, %arg40: memref<1x3xf32, #tpu.memory_space<vmem>>, %arg41: memref<16x3xf32, #tpu.memory_space<vmem>>, %arg42: memref<1x7xf32, #tpu.memory_space<vmem>>) attributes {dimension_semantics = [], scalar_prefetch = 0 : i64, scratch_operands = 0 : i64, tpu.core_type = #tpu.core_type<tc>} {
    %c0 = arith.constant 0 : index
    %c0_0 = arith.constant 0 : index
    %0 = vector.load %arg0[%c0, %c0_0] : memref<16x6xf32, #tpu.memory_space<vmem>>, vector<16x6xf32>
    %c0_1 = arith.constant 0 : index
    %c0_2 = arith.constant 0 : index
    %1 = vector.load %arg1[%c0_1, %c0_2] : memref<6x32xf32, #tpu.memory_space<vmem>>, vector<6x32xf32>
    %cst = arith.constant dense<0.000000e+00> : vector<16x32xf32>
    %2 = tpu.matmul %0, %1, %cst {dimension_numbers = #tpu.dot_dimension_numbers<[1], [0], [0], [1], [0, 0, 1, 1], [], []>} : vector<16x6xf32>, vector<6x32xf32>, vector<16x32xf32> -> vector<16x32xf32>
    %c0_3 = arith.constant 0 : index
    %c0_4 = arith.constant 0 : index
    %3 = vector.load %arg2[%c0_3, %c0_4] : memref<1x32xf32, #tpu.memory_space<vmem>>, vector<1x32xf32>
    %4 = vector.broadcast %3 : vector<1x32xf32> to vector<16x32xf32>
    %5 = arith.addf %2, %4 : vector<16x32xf32>
    %cst_5 = arith.constant 0.000000e+00 : f32
    %6 = vector.broadcast %cst_5 : f32 to vector<16x32xf32>
    %7 = arith.maximumf %5, %6 : vector<16x32xf32>
    %c0_6 = arith.constant 0 : index
    %c0_7 = arith.constant 0 : index
    %8 = vector.load %arg3[%c0_6, %c0_7] : memref<32x32xf32, #tpu.memory_space<vmem>>, vector<32x32xf32>
    %cst_8 = arith.constant dense<0.000000e+00> : vector<16x32xf32>
    %9 = tpu.matmul %7, %8, %cst_8 {dimension_numbers = #tpu.dot_dimension_numbers<[1], [0], [0], [1], [0, 0, 1, 1], [], []>} : vector<16x32xf32>, vector<32x32xf32>, vector<16x32xf32> -> vector<16x32xf32>
    %c0_9 = arith.constant 0 : index
    %c0_10 = arith.constant 0 : index
    %10 = vector.load %arg4[%c0_9, %c0_10] : memref<1x32xf32, #tpu.memory_space<vmem>>, vector<1x32xf32>
    %11 = vector.broadcast %10 : vector<1x32xf32> to vector<16x32xf32>
    %12 = arith.addf %9, %11 : vector<16x32xf32>
    %cst_11 = arith.constant 0.000000e+00 : f32
    %13 = vector.broadcast %cst_11 : f32 to vector<16x32xf32>
    %14 = arith.maximumf %12, %13 : vector<16x32xf32>
    %cst_12 = arith.constant dense<0.000000e+00> : vector<16xf32>
    %15 = vector.multi_reduction <add>, %14, %cst_12 [1] : vector<16x32xf32> to vector<16xf32>
    %16 = vector.shape_cast %15 : vector<16xf32> to vector<16x1xf32>
    %cst_13 = arith.constant 3.200000e+01 : f32
    %17 = vector.broadcast %cst_13 : f32 to vector<16x1xf32>
    %18 = arith.divf %16, %17 : vector<16x1xf32>
    %19 = vector.broadcast %18 : vector<16x1xf32> to vector<16x32xf32>
    %20 = arith.subf %14, %19 : vector<16x32xf32>
    %21 = arith.mulf %20, %20 : vector<16x32xf32>
    %cst_14 = arith.constant dense<0.000000e+00> : vector<16xf32>
    %22 = vector.multi_reduction <add>, %21, %cst_14 [1] : vector<16x32xf32> to vector<16xf32>
    %23 = vector.shape_cast %22 : vector<16xf32> to vector<16x1xf32>
    %cst_15 = arith.constant 3.200000e+01 : f32
    %24 = vector.broadcast %cst_15 : f32 to vector<16x1xf32>
    %25 = arith.divf %23, %24 : vector<16x1xf32>
    %26 = vector.broadcast %18 : vector<16x1xf32> to vector<16x32xf32>
    %27 = arith.subf %14, %26 : vector<16x32xf32>
    %cst_16 = arith.constant 9.99999974E-6 : f32
    %28 = vector.broadcast %cst_16 : f32 to vector<16x1xf32>
    %29 = arith.addf %25, %28 : vector<16x1xf32>
    %30 = math.rsqrt %29 : vector<16x1xf32>
    %31 = vector.broadcast %30 : vector<16x1xf32> to vector<16x32xf32>
    %32 = arith.mulf %27, %31 : vector<16x32xf32>
    %c0_17 = arith.constant 0 : index
    %c0_18 = arith.constant 0 : index
    %33 = vector.load %arg5[%c0_17, %c0_18] : memref<1x32xf32, #tpu.memory_space<vmem>>, vector<1x32xf32>
    %34 = vector.broadcast %33 : vector<1x32xf32> to vector<16x32xf32>
    %35 = arith.mulf %32, %34 : vector<16x32xf32>
    %c0_19 = arith.constant 0 : index
    %c0_20 = arith.constant 0 : index
    %36 = vector.load %arg6[%c0_19, %c0_20] : memref<1x32xf32, #tpu.memory_space<vmem>>, vector<1x32xf32>
    %37 = vector.broadcast %36 : vector<1x32xf32> to vector<16x32xf32>
    %38 = arith.addf %35, %37 : vector<16x32xf32>
    %c0_21 = arith.constant 0 : index
    %c0_22 = arith.constant 0 : index
    %39 = vector.load %arg7[%c0_21, %c0_22] : memref<32x96xf32, #tpu.memory_space<vmem>>, vector<32x96xf32>
    %cst_23 = arith.constant dense<0.000000e+00> : vector<16x96xf32>
    %40 = tpu.matmul %38, %39, %cst_23 {dimension_numbers = #tpu.dot_dimension_numbers<[1], [0], [0], [1], [0, 0, 1, 1], [], []>} : vector<16x32xf32>, vector<32x96xf32>, vector<16x96xf32> -> vector<16x96xf32>
    %c0_24 = arith.constant 0 : index
    %c0_25 = arith.constant 0 : index
    %41 = vector.load %arg8[%c0_24, %c0_25] : memref<1x96xf32, #tpu.memory_space<vmem>>, vector<1x96xf32>
    %42 = vector.broadcast %41 : vector<1x96xf32> to vector<16x96xf32>
    %43 = arith.addf %40, %42 : vector<16x96xf32>
    %c0_26 = arith.constant 0 : index
    %c0_27 = arith.constant 0 : index
    %44 = vector.load %arg9[%c0_26, %c0_27] : memref<32x32xf32, #tpu.memory_space<vmem>>, vector<32x32xf32>
    %cst_28 = arith.constant 0.000000e+00 : f32
    %45 = vector.broadcast %cst_28 : f32 to vector<16x32xf32>
    %46 = vector.extract_strided_slice %43 {offsets = [0, 0], sizes = [16, 8], strides = [1, 1]} : vector<16x96xf32> to vector<16x8xf32>
    %47 = vector.extract_strided_slice %43 {offsets = [0, 32], sizes = [16, 8], strides = [1, 1]} : vector<16x96xf32> to vector<16x8xf32>
    %48 = vector.extract_strided_slice %43 {offsets = [0, 64], sizes = [16, 8], strides = [1, 1]} : vector<16x96xf32> to vector<16x8xf32>
    %49 = tpu.transpose %47, [1, 0] : vector<16x8xf32> -> vector<8x16xf32>
    %cst_29 = arith.constant dense<0.000000e+00> : vector<16x16xf32>
    %50 = tpu.matmul %46, %49, %cst_29 {dimension_numbers = #tpu.dot_dimension_numbers<[1], [0], [0], [1], [0, 0, 1, 1], [], []>} : vector<16x8xf32>, vector<8x16xf32>, vector<16x16xf32> -> vector<16x16xf32>
    %cst_30 = arith.constant 0.353553385 : f32
    %51 = vector.broadcast %cst_30 : f32 to vector<16x16xf32>
    %52 = arith.mulf %50, %51 : vector<16x16xf32>
    %cst_31 = arith.constant dense<0xFF800000> : vector<16xf32>
    %53 = vector.multi_reduction <maximumf>, %52, %cst_31 [1] : vector<16x16xf32> to vector<16xf32>
    %54 = vector.shape_cast %53 : vector<16xf32> to vector<16x1xf32>
    %55 = vector.broadcast %54 : vector<16x1xf32> to vector<16x16xf32>
    %56 = arith.subf %52, %55 : vector<16x16xf32>
    %57 = math.exp %56 : vector<16x16xf32>
    %cst_32 = arith.constant dense<0.000000e+00> : vector<16xf32>
    %58 = vector.multi_reduction <add>, %57, %cst_32 [1] : vector<16x16xf32> to vector<16xf32>
    %59 = vector.shape_cast %58 : vector<16xf32> to vector<16x1xf32>
    %60 = tpu.reciprocal %59 {approx = true} : vector<16x1xf32> -> vector<16x1xf32>
    %61 = vector.broadcast %60 : vector<16x1xf32> to vector<16x16xf32>
    %62 = arith.mulf %57, %61 : vector<16x16xf32>
    %cst_33 = arith.constant dense<0.000000e+00> : vector<16x8xf32>
    %63 = tpu.matmul %62, %48, %cst_33 {dimension_numbers = #tpu.dot_dimension_numbers<[1], [0], [0], [1], [0, 0, 1, 1], [], []>} : vector<16x16xf32>, vector<16x8xf32>, vector<16x8xf32> -> vector<16x8xf32>
    %64 = vector.extract_strided_slice %44 {offsets = [0, 0], sizes = [8, 32], strides = [1, 1]} : vector<32x32xf32> to vector<8x32xf32>
    %cst_34 = arith.constant dense<0.000000e+00> : vector<16x32xf32>
    %65 = tpu.matmul %63, %64, %cst_34 {dimension_numbers = #tpu.dot_dimension_numbers<[1], [0], [0], [1], [0, 0, 1, 1], [], []>} : vector<16x8xf32>, vector<8x32xf32>, vector<16x32xf32> -> vector<16x32xf32>
    %66 = arith.addf %45, %65 : vector<16x32xf32>
    %67 = vector.extract_strided_slice %43 {offsets = [0, 8], sizes = [16, 8], strides = [1, 1]} : vector<16x96xf32> to vector<16x8xf32>
    %68 = vector.extract_strided_slice %43 {offsets = [0, 40], sizes = [16, 8], strides = [1, 1]} : vector<16x96xf32> to vector<16x8xf32>
    %69 = vector.extract_strided_slice %43 {offsets = [0, 72], sizes = [16, 8], strides = [1, 1]} : vector<16x96xf32> to vector<16x8xf32>
    %70 = tpu.transpose %68, [1, 0] : vector<16x8xf32> -> vector<8x16xf32>
    %cst_35 = arith.constant dense<0.000000e+00> : vector<16x16xf32>
    %71 = tpu.matmul %67, %70, %cst_35 {dimension_numbers = #tpu.dot_dimension_numbers<[1], [0], [0], [1], [0, 0, 1, 1], [], []>} : vector<16x8xf32>, vector<8x16xf32>, vector<16x16xf32> -> vector<16x16xf32>
    %cst_36 = arith.constant 0.353553385 : f32
    %72 = vector.broadcast %cst_36 : f32 to vector<16x16xf32>
    %73 = arith.mulf %71, %72 : vector<16x16xf32>
    %cst_37 = arith.constant dense<0xFF800000> : vector<16xf32>
    %74 = vector.multi_reduction <maximumf>, %73, %cst_37 [1] : vector<16x16xf32> to vector<16xf32>
    %75 = vector.shape_cast %74 : vector<16xf32> to vector<16x1xf32>
    %76 = vector.broadcast %75 : vector<16x1xf32> to vector<16x16xf32>
    %77 = arith.subf %73, %76 : vector<16x16xf32>
    %78 = math.exp %77 : vector<16x16xf32>
    %cst_38 = arith.constant dense<0.000000e+00> : vector<16xf32>
    %79 = vector.multi_reduction <add>, %78, %cst_38 [1] : vector<16x16xf32> to vector<16xf32>
    %80 = vector.shape_cast %79 : vector<16xf32> to vector<16x1xf32>
    %81 = tpu.reciprocal %80 {approx = true} : vector<16x1xf32> -> vector<16x1xf32>
    %82 = vector.broadcast %81 : vector<16x1xf32> to vector<16x16xf32>
    %83 = arith.mulf %78, %82 : vector<16x16xf32>
    %cst_39 = arith.constant dense<0.000000e+00> : vector<16x8xf32>
    %84 = tpu.matmul %83, %69, %cst_39 {dimension_numbers = #tpu.dot_dimension_numbers<[1], [0], [0], [1], [0, 0, 1, 1], [], []>} : vector<16x16xf32>, vector<16x8xf32>, vector<16x8xf32> -> vector<16x8xf32>
    %85 = vector.extract_strided_slice %44 {offsets = [8, 0], sizes = [8, 32], strides = [1, 1]} : vector<32x32xf32> to vector<8x32xf32>
    %cst_40 = arith.constant dense<0.000000e+00> : vector<16x32xf32>
    %86 = tpu.matmul %84, %85, %cst_40 {dimension_numbers = #tpu.dot_dimension_numbers<[1], [0], [0], [1], [0, 0, 1, 1], [], []>} : vector<16x8xf32>, vector<8x32xf32>, vector<16x32xf32> -> vector<16x32xf32>
    %87 = arith.addf %66, %86 : vector<16x32xf32>
    %88 = vector.extract_strided_slice %43 {offsets = [0, 16], sizes = [16, 8], strides = [1, 1]} : vector<16x96xf32> to vector<16x8xf32>
    %89 = vector.extract_strided_slice %43 {offsets = [0, 48], sizes = [16, 8], strides = [1, 1]} : vector<16x96xf32> to vector<16x8xf32>
    %90 = vector.extract_strided_slice %43 {offsets = [0, 80], sizes = [16, 8], strides = [1, 1]} : vector<16x96xf32> to vector<16x8xf32>
    %91 = tpu.transpose %89, [1, 0] : vector<16x8xf32> -> vector<8x16xf32>
    %cst_41 = arith.constant dense<0.000000e+00> : vector<16x16xf32>
    %92 = tpu.matmul %88, %91, %cst_41 {dimension_numbers = #tpu.dot_dimension_numbers<[1], [0], [0], [1], [0, 0, 1, 1], [], []>} : vector<16x8xf32>, vector<8x16xf32>, vector<16x16xf32> -> vector<16x16xf32>
    %cst_42 = arith.constant 0.353553385 : f32
    %93 = vector.broadcast %cst_42 : f32 to vector<16x16xf32>
    %94 = arith.mulf %92, %93 : vector<16x16xf32>
    %cst_43 = arith.constant dense<0xFF800000> : vector<16xf32>
    %95 = vector.multi_reduction <maximumf>, %94, %cst_43 [1] : vector<16x16xf32> to vector<16xf32>
    %96 = vector.shape_cast %95 : vector<16xf32> to vector<16x1xf32>
    %97 = vector.broadcast %96 : vector<16x1xf32> to vector<16x16xf32>
    %98 = arith.subf %94, %97 : vector<16x16xf32>
    %99 = math.exp %98 : vector<16x16xf32>
    %cst_44 = arith.constant dense<0.000000e+00> : vector<16xf32>
    %100 = vector.multi_reduction <add>, %99, %cst_44 [1] : vector<16x16xf32> to vector<16xf32>
    %101 = vector.shape_cast %100 : vector<16xf32> to vector<16x1xf32>
    %102 = tpu.reciprocal %101 {approx = true} : vector<16x1xf32> -> vector<16x1xf32>
    %103 = vector.broadcast %102 : vector<16x1xf32> to vector<16x16xf32>
    %104 = arith.mulf %99, %103 : vector<16x16xf32>
    %cst_45 = arith.constant dense<0.000000e+00> : vector<16x8xf32>
    %105 = tpu.matmul %104, %90, %cst_45 {dimension_numbers = #tpu.dot_dimension_numbers<[1], [0], [0], [1], [0, 0, 1, 1], [], []>} : vector<16x16xf32>, vector<16x8xf32>, vector<16x8xf32> -> vector<16x8xf32>
    %106 = vector.extract_strided_slice %44 {offsets = [16, 0], sizes = [8, 32], strides = [1, 1]} : vector<32x32xf32> to vector<8x32xf32>
    %cst_46 = arith.constant dense<0.000000e+00> : vector<16x32xf32>
    %107 = tpu.matmul %105, %106, %cst_46 {dimension_numbers = #tpu.dot_dimension_numbers<[1], [0], [0], [1], [0, 0, 1, 1], [], []>} : vector<16x8xf32>, vector<8x32xf32>, vector<16x32xf32> -> vector<16x32xf32>
    %108 = arith.addf %87, %107 : vector<16x32xf32>
    %109 = vector.extract_strided_slice %43 {offsets = [0, 24], sizes = [16, 8], strides = [1, 1]} : vector<16x96xf32> to vector<16x8xf32>
    %110 = vector.extract_strided_slice %43 {offsets = [0, 56], sizes = [16, 8], strides = [1, 1]} : vector<16x96xf32> to vector<16x8xf32>
    %111 = vector.extract_strided_slice %43 {offsets = [0, 88], sizes = [16, 8], strides = [1, 1]} : vector<16x96xf32> to vector<16x8xf32>
    %112 = tpu.transpose %110, [1, 0] : vector<16x8xf32> -> vector<8x16xf32>
    %cst_47 = arith.constant dense<0.000000e+00> : vector<16x16xf32>
    %113 = tpu.matmul %109, %112, %cst_47 {dimension_numbers = #tpu.dot_dimension_numbers<[1], [0], [0], [1], [0, 0, 1, 1], [], []>} : vector<16x8xf32>, vector<8x16xf32>, vector<16x16xf32> -> vector<16x16xf32>
    %cst_48 = arith.constant 0.353553385 : f32
    %114 = vector.broadcast %cst_48 : f32 to vector<16x16xf32>
    %115 = arith.mulf %113, %114 : vector<16x16xf32>
    %cst_49 = arith.constant dense<0xFF800000> : vector<16xf32>
    %116 = vector.multi_reduction <maximumf>, %115, %cst_49 [1] : vector<16x16xf32> to vector<16xf32>
    %117 = vector.shape_cast %116 : vector<16xf32> to vector<16x1xf32>
    %118 = vector.broadcast %117 : vector<16x1xf32> to vector<16x16xf32>
    %119 = arith.subf %115, %118 : vector<16x16xf32>
    %120 = math.exp %119 : vector<16x16xf32>
    %cst_50 = arith.constant dense<0.000000e+00> : vector<16xf32>
    %121 = vector.multi_reduction <add>, %120, %cst_50 [1] : vector<16x16xf32> to vector<16xf32>
    %122 = vector.shape_cast %121 : vector<16xf32> to vector<16x1xf32>
    %123 = tpu.reciprocal %122 {approx = true} : vector<16x1xf32> -> vector<16x1xf32>
    %124 = vector.broadcast %123 : vector<16x1xf32> to vector<16x16xf32>
    %125 = arith.mulf %120, %124 : vector<16x16xf32>
    %cst_51 = arith.constant dense<0.000000e+00> : vector<16x8xf32>
    %126 = tpu.matmul %125, %111, %cst_51 {dimension_numbers = #tpu.dot_dimension_numbers<[1], [0], [0], [1], [0, 0, 1, 1], [], []>} : vector<16x16xf32>, vector<16x8xf32>, vector<16x8xf32> -> vector<16x8xf32>
    %127 = vector.extract_strided_slice %44 {offsets = [24, 0], sizes = [8, 32], strides = [1, 1]} : vector<32x32xf32> to vector<8x32xf32>
    %cst_52 = arith.constant dense<0.000000e+00> : vector<16x32xf32>
    %128 = tpu.matmul %126, %127, %cst_52 {dimension_numbers = #tpu.dot_dimension_numbers<[1], [0], [0], [1], [0, 0, 1, 1], [], []>} : vector<16x8xf32>, vector<8x32xf32>, vector<16x32xf32> -> vector<16x32xf32>
    %129 = arith.addf %108, %128 : vector<16x32xf32>
    %130 = arith.addf %14, %129 : vector<16x32xf32>
    %c0_53 = arith.constant 0 : index
    %c0_54 = arith.constant 0 : index
    %131 = vector.load %arg10[%c0_53, %c0_54] : memref<1x32xf32, #tpu.memory_space<vmem>>, vector<1x32xf32>
    %132 = vector.broadcast %131 : vector<1x32xf32> to vector<16x32xf32>
    %133 = arith.addf %130, %132 : vector<16x32xf32>
    %cst_55 = arith.constant dense<0.000000e+00> : vector<16xf32>
    %134 = vector.multi_reduction <add>, %133, %cst_55 [1] : vector<16x32xf32> to vector<16xf32>
    %135 = vector.shape_cast %134 : vector<16xf32> to vector<16x1xf32>
    %cst_56 = arith.constant 3.200000e+01 : f32
    %136 = vector.broadcast %cst_56 : f32 to vector<16x1xf32>
    %137 = arith.divf %135, %136 : vector<16x1xf32>
    %138 = vector.broadcast %137 : vector<16x1xf32> to vector<16x32xf32>
    %139 = arith.subf %133, %138 : vector<16x32xf32>
    %140 = arith.mulf %139, %139 : vector<16x32xf32>
    %cst_57 = arith.constant dense<0.000000e+00> : vector<16xf32>
    %141 = vector.multi_reduction <add>, %140, %cst_57 [1] : vector<16x32xf32> to vector<16xf32>
    %142 = vector.shape_cast %141 : vector<16xf32> to vector<16x1xf32>
    %cst_58 = arith.constant 3.200000e+01 : f32
    %143 = vector.broadcast %cst_58 : f32 to vector<16x1xf32>
    %144 = arith.divf %142, %143 : vector<16x1xf32>
    %145 = vector.broadcast %137 : vector<16x1xf32> to vector<16x32xf32>
    %146 = arith.subf %133, %145 : vector<16x32xf32>
    %cst_59 = arith.constant 9.99999974E-6 : f32
    %147 = vector.broadcast %cst_59 : f32 to vector<16x1xf32>
    %148 = arith.addf %144, %147 : vector<16x1xf32>
    %149 = math.rsqrt %148 : vector<16x1xf32>
    %150 = vector.broadcast %149 : vector<16x1xf32> to vector<16x32xf32>
    %151 = arith.mulf %146, %150 : vector<16x32xf32>
    %c0_60 = arith.constant 0 : index
    %c0_61 = arith.constant 0 : index
    %152 = vector.load %arg11[%c0_60, %c0_61] : memref<1x32xf32, #tpu.memory_space<vmem>>, vector<1x32xf32>
    %153 = vector.broadcast %152 : vector<1x32xf32> to vector<16x32xf32>
    %154 = arith.mulf %151, %153 : vector<16x32xf32>
    %c0_62 = arith.constant 0 : index
    %c0_63 = arith.constant 0 : index
    %155 = vector.load %arg12[%c0_62, %c0_63] : memref<1x32xf32, #tpu.memory_space<vmem>>, vector<1x32xf32>
    %156 = vector.broadcast %155 : vector<1x32xf32> to vector<16x32xf32>
    %157 = arith.addf %154, %156 : vector<16x32xf32>
    %c0_64 = arith.constant 0 : index
    %c0_65 = arith.constant 0 : index
    %158 = vector.load %arg13[%c0_64, %c0_65] : memref<32x32xf32, #tpu.memory_space<vmem>>, vector<32x32xf32>
    %cst_66 = arith.constant dense<0.000000e+00> : vector<16x32xf32>
    %159 = tpu.matmul %157, %158, %cst_66 {dimension_numbers = #tpu.dot_dimension_numbers<[1], [0], [0], [1], [0, 0, 1, 1], [], []>} : vector<16x32xf32>, vector<32x32xf32>, vector<16x32xf32> -> vector<16x32xf32>
    %c0_67 = arith.constant 0 : index
    %c0_68 = arith.constant 0 : index
    %160 = vector.load %arg14[%c0_67, %c0_68] : memref<1x32xf32, #tpu.memory_space<vmem>>, vector<1x32xf32>
    %161 = vector.broadcast %160 : vector<1x32xf32> to vector<16x32xf32>
    %162 = arith.addf %159, %161 : vector<16x32xf32>
    %cst_69 = arith.constant 0.000000e+00 : f32
    %163 = vector.broadcast %cst_69 : f32 to vector<16x32xf32>
    %164 = arith.maximumf %162, %163 : vector<16x32xf32>
    %c0_70 = arith.constant 0 : index
    %c0_71 = arith.constant 0 : index
    %165 = vector.load %arg15[%c0_70, %c0_71] : memref<32x32xf32, #tpu.memory_space<vmem>>, vector<32x32xf32>
    %cst_72 = arith.constant dense<0.000000e+00> : vector<16x32xf32>
    %166 = tpu.matmul %164, %165, %cst_72 {dimension_numbers = #tpu.dot_dimension_numbers<[1], [0], [0], [1], [0, 0, 1, 1], [], []>} : vector<16x32xf32>, vector<32x32xf32>, vector<16x32xf32> -> vector<16x32xf32>
    %c0_73 = arith.constant 0 : index
    %c0_74 = arith.constant 0 : index
    %167 = vector.load %arg16[%c0_73, %c0_74] : memref<1x32xf32, #tpu.memory_space<vmem>>, vector<1x32xf32>
    %168 = vector.broadcast %167 : vector<1x32xf32> to vector<16x32xf32>
    %169 = arith.addf %166, %168 : vector<16x32xf32>
    %170 = arith.addf %133, %169 : vector<16x32xf32>
    %cst_75 = arith.constant dense<0.000000e+00> : vector<16xf32>
    %171 = vector.multi_reduction <add>, %170, %cst_75 [1] : vector<16x32xf32> to vector<16xf32>
    %172 = vector.shape_cast %171 : vector<16xf32> to vector<16x1xf32>
    %cst_76 = arith.constant 3.200000e+01 : f32
    %173 = vector.broadcast %cst_76 : f32 to vector<16x1xf32>
    %174 = arith.divf %172, %173 : vector<16x1xf32>
    %175 = vector.broadcast %174 : vector<16x1xf32> to vector<16x32xf32>
    %176 = arith.subf %170, %175 : vector<16x32xf32>
    %177 = arith.mulf %176, %176 : vector<16x32xf32>
    %cst_77 = arith.constant dense<0.000000e+00> : vector<16xf32>
    %178 = vector.multi_reduction <add>, %177, %cst_77 [1] : vector<16x32xf32> to vector<16xf32>
    %179 = vector.shape_cast %178 : vector<16xf32> to vector<16x1xf32>
    %cst_78 = arith.constant 3.200000e+01 : f32
    %180 = vector.broadcast %cst_78 : f32 to vector<16x1xf32>
    %181 = arith.divf %179, %180 : vector<16x1xf32>
    %182 = vector.broadcast %174 : vector<16x1xf32> to vector<16x32xf32>
    %183 = arith.subf %170, %182 : vector<16x32xf32>
    %cst_79 = arith.constant 9.99999974E-6 : f32
    %184 = vector.broadcast %cst_79 : f32 to vector<16x1xf32>
    %185 = arith.addf %181, %184 : vector<16x1xf32>
    %186 = math.rsqrt %185 : vector<16x1xf32>
    %187 = vector.broadcast %186 : vector<16x1xf32> to vector<16x32xf32>
    %188 = arith.mulf %183, %187 : vector<16x32xf32>
    %c0_80 = arith.constant 0 : index
    %c0_81 = arith.constant 0 : index
    %189 = vector.load %arg17[%c0_80, %c0_81] : memref<1x32xf32, #tpu.memory_space<vmem>>, vector<1x32xf32>
    %190 = vector.broadcast %189 : vector<1x32xf32> to vector<16x32xf32>
    %191 = arith.mulf %188, %190 : vector<16x32xf32>
    %c0_82 = arith.constant 0 : index
    %c0_83 = arith.constant 0 : index
    %192 = vector.load %arg18[%c0_82, %c0_83] : memref<1x32xf32, #tpu.memory_space<vmem>>, vector<1x32xf32>
    %193 = vector.broadcast %192 : vector<1x32xf32> to vector<16x32xf32>
    %194 = arith.addf %191, %193 : vector<16x32xf32>
    %c0_84 = arith.constant 0 : index
    %c0_85 = arith.constant 0 : index
    %195 = vector.load %arg19[%c0_84, %c0_85] : memref<32x96xf32, #tpu.memory_space<vmem>>, vector<32x96xf32>
    %cst_86 = arith.constant dense<0.000000e+00> : vector<16x96xf32>
    %196 = tpu.matmul %194, %195, %cst_86 {dimension_numbers = #tpu.dot_dimension_numbers<[1], [0], [0], [1], [0, 0, 1, 1], [], []>} : vector<16x32xf32>, vector<32x96xf32>, vector<16x96xf32> -> vector<16x96xf32>
    %c0_87 = arith.constant 0 : index
    %c0_88 = arith.constant 0 : index
    %197 = vector.load %arg20[%c0_87, %c0_88] : memref<1x96xf32, #tpu.memory_space<vmem>>, vector<1x96xf32>
    %198 = vector.broadcast %197 : vector<1x96xf32> to vector<16x96xf32>
    %199 = arith.addf %196, %198 : vector<16x96xf32>
    %c0_89 = arith.constant 0 : index
    %c0_90 = arith.constant 0 : index
    %200 = vector.load %arg21[%c0_89, %c0_90] : memref<32x32xf32, #tpu.memory_space<vmem>>, vector<32x32xf32>
    %cst_91 = arith.constant 0.000000e+00 : f32
    %201 = vector.broadcast %cst_91 : f32 to vector<16x32xf32>
    %202 = vector.extract_strided_slice %199 {offsets = [0, 0], sizes = [16, 8], strides = [1, 1]} : vector<16x96xf32> to vector<16x8xf32>
    %203 = vector.extract_strided_slice %199 {offsets = [0, 32], sizes = [16, 8], strides = [1, 1]} : vector<16x96xf32> to vector<16x8xf32>
    %204 = vector.extract_strided_slice %199 {offsets = [0, 64], sizes = [16, 8], strides = [1, 1]} : vector<16x96xf32> to vector<16x8xf32>
    %205 = tpu.transpose %203, [1, 0] : vector<16x8xf32> -> vector<8x16xf32>
    %cst_92 = arith.constant dense<0.000000e+00> : vector<16x16xf32>
    %206 = tpu.matmul %202, %205, %cst_92 {dimension_numbers = #tpu.dot_dimension_numbers<[1], [0], [0], [1], [0, 0, 1, 1], [], []>} : vector<16x8xf32>, vector<8x16xf32>, vector<16x16xf32> -> vector<16x16xf32>
    %cst_93 = arith.constant 0.353553385 : f32
    %207 = vector.broadcast %cst_93 : f32 to vector<16x16xf32>
    %208 = arith.mulf %206, %207 : vector<16x16xf32>
    %cst_94 = arith.constant dense<0xFF800000> : vector<16xf32>
    %209 = vector.multi_reduction <maximumf>, %208, %cst_94 [1] : vector<16x16xf32> to vector<16xf32>
    %210 = vector.shape_cast %209 : vector<16xf32> to vector<16x1xf32>
    %211 = vector.broadcast %210 : vector<16x1xf32> to vector<16x16xf32>
    %212 = arith.subf %208, %211 : vector<16x16xf32>
    %213 = math.exp %212 : vector<16x16xf32>
    %cst_95 = arith.constant dense<0.000000e+00> : vector<16xf32>
    %214 = vector.multi_reduction <add>, %213, %cst_95 [1] : vector<16x16xf32> to vector<16xf32>
    %215 = vector.shape_cast %214 : vector<16xf32> to vector<16x1xf32>
    %216 = tpu.reciprocal %215 {approx = true} : vector<16x1xf32> -> vector<16x1xf32>
    %217 = vector.broadcast %216 : vector<16x1xf32> to vector<16x16xf32>
    %218 = arith.mulf %213, %217 : vector<16x16xf32>
    %cst_96 = arith.constant dense<0.000000e+00> : vector<16x8xf32>
    %219 = tpu.matmul %218, %204, %cst_96 {dimension_numbers = #tpu.dot_dimension_numbers<[1], [0], [0], [1], [0, 0, 1, 1], [], []>} : vector<16x16xf32>, vector<16x8xf32>, vector<16x8xf32> -> vector<16x8xf32>
    %220 = vector.extract_strided_slice %200 {offsets = [0, 0], sizes = [8, 32], strides = [1, 1]} : vector<32x32xf32> to vector<8x32xf32>
    %cst_97 = arith.constant dense<0.000000e+00> : vector<16x32xf32>
    %221 = tpu.matmul %219, %220, %cst_97 {dimension_numbers = #tpu.dot_dimension_numbers<[1], [0], [0], [1], [0, 0, 1, 1], [], []>} : vector<16x8xf32>, vector<8x32xf32>, vector<16x32xf32> -> vector<16x32xf32>
    %222 = arith.addf %201, %221 : vector<16x32xf32>
    %223 = vector.extract_strided_slice %199 {offsets = [0, 8], sizes = [16, 8], strides = [1, 1]} : vector<16x96xf32> to vector<16x8xf32>
    %224 = vector.extract_strided_slice %199 {offsets = [0, 40], sizes = [16, 8], strides = [1, 1]} : vector<16x96xf32> to vector<16x8xf32>
    %225 = vector.extract_strided_slice %199 {offsets = [0, 72], sizes = [16, 8], strides = [1, 1]} : vector<16x96xf32> to vector<16x8xf32>
    %226 = tpu.transpose %224, [1, 0] : vector<16x8xf32> -> vector<8x16xf32>
    %cst_98 = arith.constant dense<0.000000e+00> : vector<16x16xf32>
    %227 = tpu.matmul %223, %226, %cst_98 {dimension_numbers = #tpu.dot_dimension_numbers<[1], [0], [0], [1], [0, 0, 1, 1], [], []>} : vector<16x8xf32>, vector<8x16xf32>, vector<16x16xf32> -> vector<16x16xf32>
    %cst_99 = arith.constant 0.353553385 : f32
    %228 = vector.broadcast %cst_99 : f32 to vector<16x16xf32>
    %229 = arith.mulf %227, %228 : vector<16x16xf32>
    %cst_100 = arith.constant dense<0xFF800000> : vector<16xf32>
    %230 = vector.multi_reduction <maximumf>, %229, %cst_100 [1] : vector<16x16xf32> to vector<16xf32>
    %231 = vector.shape_cast %230 : vector<16xf32> to vector<16x1xf32>
    %232 = vector.broadcast %231 : vector<16x1xf32> to vector<16x16xf32>
    %233 = arith.subf %229, %232 : vector<16x16xf32>
    %234 = math.exp %233 : vector<16x16xf32>
    %cst_101 = arith.constant dense<0.000000e+00> : vector<16xf32>
    %235 = vector.multi_reduction <add>, %234, %cst_101 [1] : vector<16x16xf32> to vector<16xf32>
    %236 = vector.shape_cast %235 : vector<16xf32> to vector<16x1xf32>
    %237 = tpu.reciprocal %236 {approx = true} : vector<16x1xf32> -> vector<16x1xf32>
    %238 = vector.broadcast %237 : vector<16x1xf32> to vector<16x16xf32>
    %239 = arith.mulf %234, %238 : vector<16x16xf32>
    %cst_102 = arith.constant dense<0.000000e+00> : vector<16x8xf32>
    %240 = tpu.matmul %239, %225, %cst_102 {dimension_numbers = #tpu.dot_dimension_numbers<[1], [0], [0], [1], [0, 0, 1, 1], [], []>} : vector<16x16xf32>, vector<16x8xf32>, vector<16x8xf32> -> vector<16x8xf32>
    %241 = vector.extract_strided_slice %200 {offsets = [8, 0], sizes = [8, 32], strides = [1, 1]} : vector<32x32xf32> to vector<8x32xf32>
    %cst_103 = arith.constant dense<0.000000e+00> : vector<16x32xf32>
    %242 = tpu.matmul %240, %241, %cst_103 {dimension_numbers = #tpu.dot_dimension_numbers<[1], [0], [0], [1], [0, 0, 1, 1], [], []>} : vector<16x8xf32>, vector<8x32xf32>, vector<16x32xf32> -> vector<16x32xf32>
    %243 = arith.addf %222, %242 : vector<16x32xf32>
    %244 = vector.extract_strided_slice %199 {offsets = [0, 16], sizes = [16, 8], strides = [1, 1]} : vector<16x96xf32> to vector<16x8xf32>
    %245 = vector.extract_strided_slice %199 {offsets = [0, 48], sizes = [16, 8], strides = [1, 1]} : vector<16x96xf32> to vector<16x8xf32>
    %246 = vector.extract_strided_slice %199 {offsets = [0, 80], sizes = [16, 8], strides = [1, 1]} : vector<16x96xf32> to vector<16x8xf32>
    %247 = tpu.transpose %245, [1, 0] : vector<16x8xf32> -> vector<8x16xf32>
    %cst_104 = arith.constant dense<0.000000e+00> : vector<16x16xf32>
    %248 = tpu.matmul %244, %247, %cst_104 {dimension_numbers = #tpu.dot_dimension_numbers<[1], [0], [0], [1], [0, 0, 1, 1], [], []>} : vector<16x8xf32>, vector<8x16xf32>, vector<16x16xf32> -> vector<16x16xf32>
    %cst_105 = arith.constant 0.353553385 : f32
    %249 = vector.broadcast %cst_105 : f32 to vector<16x16xf32>
    %250 = arith.mulf %248, %249 : vector<16x16xf32>
    %cst_106 = arith.constant dense<0xFF800000> : vector<16xf32>
    %251 = vector.multi_reduction <maximumf>, %250, %cst_106 [1] : vector<16x16xf32> to vector<16xf32>
    %252 = vector.shape_cast %251 : vector<16xf32> to vector<16x1xf32>
    %253 = vector.broadcast %252 : vector<16x1xf32> to vector<16x16xf32>
    %254 = arith.subf %250, %253 : vector<16x16xf32>
    %255 = math.exp %254 : vector<16x16xf32>
    %cst_107 = arith.constant dense<0.000000e+00> : vector<16xf32>
    %256 = vector.multi_reduction <add>, %255, %cst_107 [1] : vector<16x16xf32> to vector<16xf32>
    %257 = vector.shape_cast %256 : vector<16xf32> to vector<16x1xf32>
    %258 = tpu.reciprocal %257 {approx = true} : vector<16x1xf32> -> vector<16x1xf32>
    %259 = vector.broadcast %258 : vector<16x1xf32> to vector<16x16xf32>
    %260 = arith.mulf %255, %259 : vector<16x16xf32>
    %cst_108 = arith.constant dense<0.000000e+00> : vector<16x8xf32>
    %261 = tpu.matmul %260, %246, %cst_108 {dimension_numbers = #tpu.dot_dimension_numbers<[1], [0], [0], [1], [0, 0, 1, 1], [], []>} : vector<16x16xf32>, vector<16x8xf32>, vector<16x8xf32> -> vector<16x8xf32>
    %262 = vector.extract_strided_slice %200 {offsets = [16, 0], sizes = [8, 32], strides = [1, 1]} : vector<32x32xf32> to vector<8x32xf32>
    %cst_109 = arith.constant dense<0.000000e+00> : vector<16x32xf32>
    %263 = tpu.matmul %261, %262, %cst_109 {dimension_numbers = #tpu.dot_dimension_numbers<[1], [0], [0], [1], [0, 0, 1, 1], [], []>} : vector<16x8xf32>, vector<8x32xf32>, vector<16x32xf32> -> vector<16x32xf32>
    %264 = arith.addf %243, %263 : vector<16x32xf32>
    %265 = vector.extract_strided_slice %199 {offsets = [0, 24], sizes = [16, 8], strides = [1, 1]} : vector<16x96xf32> to vector<16x8xf32>
    %266 = vector.extract_strided_slice %199 {offsets = [0, 56], sizes = [16, 8], strides = [1, 1]} : vector<16x96xf32> to vector<16x8xf32>
    %267 = vector.extract_strided_slice %199 {offsets = [0, 88], sizes = [16, 8], strides = [1, 1]} : vector<16x96xf32> to vector<16x8xf32>
    %268 = tpu.transpose %266, [1, 0] : vector<16x8xf32> -> vector<8x16xf32>
    %cst_110 = arith.constant dense<0.000000e+00> : vector<16x16xf32>
    %269 = tpu.matmul %265, %268, %cst_110 {dimension_numbers = #tpu.dot_dimension_numbers<[1], [0], [0], [1], [0, 0, 1, 1], [], []>} : vector<16x8xf32>, vector<8x16xf32>, vector<16x16xf32> -> vector<16x16xf32>
    %cst_111 = arith.constant 0.353553385 : f32
    %270 = vector.broadcast %cst_111 : f32 to vector<16x16xf32>
    %271 = arith.mulf %269, %270 : vector<16x16xf32>
    %cst_112 = arith.constant dense<0xFF800000> : vector<16xf32>
    %272 = vector.multi_reduction <maximumf>, %271, %cst_112 [1] : vector<16x16xf32> to vector<16xf32>
    %273 = vector.shape_cast %272 : vector<16xf32> to vector<16x1xf32>
    %274 = vector.broadcast %273 : vector<16x1xf32> to vector<16x16xf32>
    %275 = arith.subf %271, %274 : vector<16x16xf32>
    %276 = math.exp %275 : vector<16x16xf32>
    %cst_113 = arith.constant dense<0.000000e+00> : vector<16xf32>
    %277 = vector.multi_reduction <add>, %276, %cst_113 [1] : vector<16x16xf32> to vector<16xf32>
    %278 = vector.shape_cast %277 : vector<16xf32> to vector<16x1xf32>
    %279 = tpu.reciprocal %278 {approx = true} : vector<16x1xf32> -> vector<16x1xf32>
    %280 = vector.broadcast %279 : vector<16x1xf32> to vector<16x16xf32>
    %281 = arith.mulf %276, %280 : vector<16x16xf32>
    %cst_114 = arith.constant dense<0.000000e+00> : vector<16x8xf32>
    %282 = tpu.matmul %281, %267, %cst_114 {dimension_numbers = #tpu.dot_dimension_numbers<[1], [0], [0], [1], [0, 0, 1, 1], [], []>} : vector<16x16xf32>, vector<16x8xf32>, vector<16x8xf32> -> vector<16x8xf32>
    %283 = vector.extract_strided_slice %200 {offsets = [24, 0], sizes = [8, 32], strides = [1, 1]} : vector<32x32xf32> to vector<8x32xf32>
    %cst_115 = arith.constant dense<0.000000e+00> : vector<16x32xf32>
    %284 = tpu.matmul %282, %283, %cst_115 {dimension_numbers = #tpu.dot_dimension_numbers<[1], [0], [0], [1], [0, 0, 1, 1], [], []>} : vector<16x8xf32>, vector<8x32xf32>, vector<16x32xf32> -> vector<16x32xf32>
    %285 = arith.addf %264, %284 : vector<16x32xf32>
    %286 = arith.addf %170, %285 : vector<16x32xf32>
    %c0_116 = arith.constant 0 : index
    %c0_117 = arith.constant 0 : index
    %287 = vector.load %arg22[%c0_116, %c0_117] : memref<1x32xf32, #tpu.memory_space<vmem>>, vector<1x32xf32>
    %288 = vector.broadcast %287 : vector<1x32xf32> to vector<16x32xf32>
    %289 = arith.addf %286, %288 : vector<16x32xf32>
    %cst_118 = arith.constant dense<0.000000e+00> : vector<16xf32>
    %290 = vector.multi_reduction <add>, %289, %cst_118 [1] : vector<16x32xf32> to vector<16xf32>
    %291 = vector.shape_cast %290 : vector<16xf32> to vector<16x1xf32>
    %cst_119 = arith.constant 3.200000e+01 : f32
    %292 = vector.broadcast %cst_119 : f32 to vector<16x1xf32>
    %293 = arith.divf %291, %292 : vector<16x1xf32>
    %294 = vector.broadcast %293 : vector<16x1xf32> to vector<16x32xf32>
    %295 = arith.subf %289, %294 : vector<16x32xf32>
    %296 = arith.mulf %295, %295 : vector<16x32xf32>
    %cst_120 = arith.constant dense<0.000000e+00> : vector<16xf32>
    %297 = vector.multi_reduction <add>, %296, %cst_120 [1] : vector<16x32xf32> to vector<16xf32>
    %298 = vector.shape_cast %297 : vector<16xf32> to vector<16x1xf32>
    %cst_121 = arith.constant 3.200000e+01 : f32
    %299 = vector.broadcast %cst_121 : f32 to vector<16x1xf32>
    %300 = arith.divf %298, %299 : vector<16x1xf32>
    %301 = vector.broadcast %293 : vector<16x1xf32> to vector<16x32xf32>
    %302 = arith.subf %289, %301 : vector<16x32xf32>
    %cst_122 = arith.constant 9.99999974E-6 : f32
    %303 = vector.broadcast %cst_122 : f32 to vector<16x1xf32>
    %304 = arith.addf %300, %303 : vector<16x1xf32>
    %305 = math.rsqrt %304 : vector<16x1xf32>
    %306 = vector.broadcast %305 : vector<16x1xf32> to vector<16x32xf32>
    %307 = arith.mulf %302, %306 : vector<16x32xf32>
    %c0_123 = arith.constant 0 : index
    %c0_124 = arith.constant 0 : index
    %308 = vector.load %arg23[%c0_123, %c0_124] : memref<1x32xf32, #tpu.memory_space<vmem>>, vector<1x32xf32>
    %309 = vector.broadcast %308 : vector<1x32xf32> to vector<16x32xf32>
    %310 = arith.mulf %307, %309 : vector<16x32xf32>
    %c0_125 = arith.constant 0 : index
    %c0_126 = arith.constant 0 : index
    %311 = vector.load %arg24[%c0_125, %c0_126] : memref<1x32xf32, #tpu.memory_space<vmem>>, vector<1x32xf32>
    %312 = vector.broadcast %311 : vector<1x32xf32> to vector<16x32xf32>
    %313 = arith.addf %310, %312 : vector<16x32xf32>
    %c0_127 = arith.constant 0 : index
    %c0_128 = arith.constant 0 : index
    %314 = vector.load %arg25[%c0_127, %c0_128] : memref<32x32xf32, #tpu.memory_space<vmem>>, vector<32x32xf32>
    %cst_129 = arith.constant dense<0.000000e+00> : vector<16x32xf32>
    %315 = tpu.matmul %313, %314, %cst_129 {dimension_numbers = #tpu.dot_dimension_numbers<[1], [0], [0], [1], [0, 0, 1, 1], [], []>} : vector<16x32xf32>, vector<32x32xf32>, vector<16x32xf32> -> vector<16x32xf32>
    %c0_130 = arith.constant 0 : index
    %c0_131 = arith.constant 0 : index
    %316 = vector.load %arg26[%c0_130, %c0_131] : memref<1x32xf32, #tpu.memory_space<vmem>>, vector<1x32xf32>
    %317 = vector.broadcast %316 : vector<1x32xf32> to vector<16x32xf32>
    %318 = arith.addf %315, %317 : vector<16x32xf32>
    %cst_132 = arith.constant 0.000000e+00 : f32
    %319 = vector.broadcast %cst_132 : f32 to vector<16x32xf32>
    %320 = arith.maximumf %318, %319 : vector<16x32xf32>
    %c0_133 = arith.constant 0 : index
    %c0_134 = arith.constant 0 : index
    %321 = vector.load %arg27[%c0_133, %c0_134] : memref<32x32xf32, #tpu.memory_space<vmem>>, vector<32x32xf32>
    %cst_135 = arith.constant dense<0.000000e+00> : vector<16x32xf32>
    %322 = tpu.matmul %320, %321, %cst_135 {dimension_numbers = #tpu.dot_dimension_numbers<[1], [0], [0], [1], [0, 0, 1, 1], [], []>} : vector<16x32xf32>, vector<32x32xf32>, vector<16x32xf32> -> vector<16x32xf32>
    %c0_136 = arith.constant 0 : index
    %c0_137 = arith.constant 0 : index
    %323 = vector.load %arg28[%c0_136, %c0_137] : memref<1x32xf32, #tpu.memory_space<vmem>>, vector<1x32xf32>
    %324 = vector.broadcast %323 : vector<1x32xf32> to vector<16x32xf32>
    %325 = arith.addf %322, %324 : vector<16x32xf32>
    %326 = arith.addf %289, %325 : vector<16x32xf32>
    %c0_138 = arith.constant 0 : index
    %c0_139 = arith.constant 0 : index
    %327 = vector.load %arg35[%c0_138, %c0_139] : memref<32x32xf32, #tpu.memory_space<vmem>>, vector<32x32xf32>
    %cst_140 = arith.constant dense<0.000000e+00> : vector<16x32xf32>
    %328 = tpu.matmul %326, %327, %cst_140 {dimension_numbers = #tpu.dot_dimension_numbers<[1], [0], [0], [1], [0, 0, 1, 1], [], []>} : vector<16x32xf32>, vector<32x32xf32>, vector<16x32xf32> -> vector<16x32xf32>
    %c0_141 = arith.constant 0 : index
    %c0_142 = arith.constant 0 : index
    %329 = vector.load %arg36[%c0_141, %c0_142] : memref<1x32xf32, #tpu.memory_space<vmem>>, vector<1x32xf32>
    %330 = vector.broadcast %329 : vector<1x32xf32> to vector<16x32xf32>
    %331 = arith.addf %328, %330 : vector<16x32xf32>
    %cst_143 = arith.constant 0.000000e+00 : f32
    %332 = vector.broadcast %cst_143 : f32 to vector<16x32xf32>
    %333 = arith.maximumf %331, %332 : vector<16x32xf32>
    %c0_144 = arith.constant 0 : index
    %c0_145 = arith.constant 0 : index
    %334 = vector.load %arg37[%c0_144, %c0_145] : memref<32x32xf32, #tpu.memory_space<vmem>>, vector<32x32xf32>
    %cst_146 = arith.constant dense<0.000000e+00> : vector<16x32xf32>
    %335 = tpu.matmul %333, %334, %cst_146 {dimension_numbers = #tpu.dot_dimension_numbers<[1], [0], [0], [1], [0, 0, 1, 1], [], []>} : vector<16x32xf32>, vector<32x32xf32>, vector<16x32xf32> -> vector<16x32xf32>
    %c0_147 = arith.constant 0 : index
    %c0_148 = arith.constant 0 : index
    %336 = vector.load %arg38[%c0_147, %c0_148] : memref<1x32xf32, #tpu.memory_space<vmem>>, vector<1x32xf32>
    %337 = vector.broadcast %336 : vector<1x32xf32> to vector<16x32xf32>
    %338 = arith.addf %335, %337 : vector<16x32xf32>
    %cst_149 = arith.constant 0.000000e+00 : f32
    %339 = vector.broadcast %cst_149 : f32 to vector<16x32xf32>
    %340 = arith.maximumf %338, %339 : vector<16x32xf32>
    %c0_150 = arith.constant 0 : index
    %c0_151 = arith.constant 0 : index
    %341 = vector.load %arg39[%c0_150, %c0_151] : memref<32x3xf32, #tpu.memory_space<vmem>>, vector<32x3xf32>
    %cst_152 = arith.constant dense<0.000000e+00> : vector<16x3xf32>
    %342 = tpu.matmul %340, %341, %cst_152 {dimension_numbers = #tpu.dot_dimension_numbers<[1], [0], [0], [1], [0, 0, 1, 1], [], []>} : vector<16x32xf32>, vector<32x3xf32>, vector<16x3xf32> -> vector<16x3xf32>
    %c0_153 = arith.constant 0 : index
    %c0_154 = arith.constant 0 : index
    %343 = vector.load %arg40[%c0_153, %c0_154] : memref<1x3xf32, #tpu.memory_space<vmem>>, vector<1x3xf32>
    %344 = vector.broadcast %343 : vector<1x3xf32> to vector<16x3xf32>
    %345 = arith.addf %342, %344 : vector<16x3xf32>
    %c0_155 = arith.constant 0 : index
    %c0_156 = arith.constant 0 : index
    %346 = vector.load %arg41[%c0_155, %c0_156] : memref<16x3xf32, #tpu.memory_space<vmem>>, vector<16x3xf32>
    tpu.vector_store %arg41[%c0_155, %c0_156], %345 {strides = array<i32>} : memref<16x3xf32, #tpu.memory_space<vmem>>, vector<16x3xf32>,
    %347 = vector.extract_strided_slice %326 {offsets = [0, 0], sizes = [8, 32], strides = [1, 1]} : vector<16x32xf32> to vector<8x32xf32>
    %cst_157 = arith.constant dense<0.000000e+00> : vector<32xf32>
    %348 = vector.multi_reduction <add>, %347, %cst_157 [0] : vector<8x32xf32> to vector<32xf32>
    %349 = vector.shape_cast %348 : vector<32xf32> to vector<1x32xf32>
    %cst_158 = arith.constant 8.000000e+00 : f32
    %350 = vector.broadcast %cst_158 : f32 to vector<1x32xf32>
    %351 = arith.divf %349, %350 : vector<1x32xf32>
    %c0_159 = arith.constant 0 : index
    %c0_160 = arith.constant 0 : index
    %352 = vector.load %arg29[%c0_159, %c0_160] : memref<32x32xf32, #tpu.memory_space<vmem>>, vector<32x32xf32>
    %cst_161 = arith.constant dense<0.000000e+00> : vector<1x32xf32>
    %353 = tpu.matmul %351, %352, %cst_161 {dimension_numbers = #tpu.dot_dimension_numbers<[1], [0], [0], [1], [0, 0, 1, 1], [], []>} : vector<1x32xf32>, vector<32x32xf32>, vector<1x32xf32> -> vector<1x32xf32>
    %c0_162 = arith.constant 0 : index
    %c0_163 = arith.constant 0 : index
    %354 = vector.load %arg30[%c0_162, %c0_163] : memref<1x32xf32, #tpu.memory_space<vmem>>, vector<1x32xf32>
    %355 = arith.addf %353, %354 : vector<1x32xf32>
    %cst_164 = arith.constant 0.000000e+00 : f32
    %356 = vector.broadcast %cst_164 : f32 to vector<1x32xf32>
    %357 = arith.maximumf %355, %356 : vector<1x32xf32>
    %c0_165 = arith.constant 0 : index
    %c0_166 = arith.constant 0 : index
    %358 = vector.load %arg31[%c0_165, %c0_166] : memref<32x32xf32, #tpu.memory_space<vmem>>, vector<32x32xf32>
    %cst_167 = arith.constant dense<0.000000e+00> : vector<1x32xf32>
    %359 = tpu.matmul %357, %358, %cst_167 {dimension_numbers = #tpu.dot_dimension_numbers<[1], [0], [0], [1], [0, 0, 1, 1], [], []>} : vector<1x32xf32>, vector<32x32xf32>, vector<1x32xf32> -> vector<1x32xf32>
    %c0_168 = arith.constant 0 : index
    %c0_169 = arith.constant 0 : index
    %360 = vector.load %arg32[%c0_168, %c0_169] : memref<1x32xf32, #tpu.memory_space<vmem>>, vector<1x32xf32>
    %361 = arith.addf %359, %360 : vector<1x32xf32>
    %cst_170 = arith.constant 0.000000e+00 : f32
    %362 = vector.broadcast %cst_170 : f32 to vector<1x32xf32>
    %363 = arith.maximumf %361, %362 : vector<1x32xf32>
    %c0_171 = arith.constant 0 : index
    %c0_172 = arith.constant 0 : index
    %364 = vector.load %arg33[%c0_171, %c0_172] : memref<32x7xf32, #tpu.memory_space<vmem>>, vector<32x7xf32>
    %cst_173 = arith.constant dense<0.000000e+00> : vector<1x7xf32>
    %365 = tpu.matmul %363, %364, %cst_173 {dimension_numbers = #tpu.dot_dimension_numbers<[1], [0], [0], [1], [0, 0, 1, 1], [], []>} : vector<1x32xf32>, vector<32x7xf32>, vector<1x7xf32> -> vector<1x7xf32>
    %c0_174 = arith.constant 0 : index
    %c0_175 = arith.constant 0 : index
    %366 = vector.load %arg34[%c0_174, %c0_175] : memref<1x7xf32, #tpu.memory_space<vmem>>, vector<1x7xf32>
    %367 = arith.addf %365, %366 : vector<1x7xf32>
    %c0_176 = arith.constant 0 : index
    %c0_177 = arith.constant 0 : index
    %368 = vector.load %arg42[%c0_176, %c0_177] : memref<1x7xf32, #tpu.memory_space<vmem>>, vector<1x7xf32>
    tpu.vector_store %arg42[%c0_176, %c0_177], %367 {strides = array<i32>} : memref<1x7xf32, #tpu.memory_space<vmem>>, vector<1x7xf32>,
    return
  }
}

</mosaic_0001>

<llo_original>
// kernel: _lambda_.1
$region0: #{_lambda_.1}
  #allocation0 [shape = 'u32[]', space=smem, size = 0x4, offset = 0x4, fixed_abs, tag = 'smem constant byte address 0x4 - core index']
  #allocation1 [shape = 'u32[72,128]{1,0:T(1,128)}', space=vmem, size = 0x9000, scoped, tag = 'internal scratch']
  %s0 = inlined_call_operand.smem [shape: u32[43], index: -1, kind: input, shape index: {}]
  %s1 = sld [smem:[%s0]]
  %s2 = scalar_lea.smem %s0, 1
  %s3 = sld [smem:[%s2]]
  %s4 = scalar_lea.smem %s0, 2
  %s5 = sld [smem:[%s4]]
  %s6 = scalar_lea.smem %s0, 3
  %s7 = sld [smem:[%s6]]
  %s8 = scalar_lea.smem %s0, 4
  %s9 = sld [smem:[%s8]]
  %s10 = scalar_lea.smem %s0, 5
  %s11 = sld [smem:[%s10]]
  %s12 = scalar_lea.smem %s0, 6
  %s13 = sld [smem:[%s12]]
  %s14 = scalar_lea.smem %s0, 7
  %s15 = sld [smem:[%s14]]
  %s16 = scalar_lea.smem %s0, 8
  %s17 = sld [smem:[%s16]]
  %s18 = scalar_lea.smem %s0, 9
  %s19 = sld [smem:[%s18]]
  %s20 = scalar_lea.smem %s0, 10
  %s21 = sld [smem:[%s20]]
  %s22 = scalar_lea.smem %s0, 11
  %s23 = sld [smem:[%s22]]
  %s24 = scalar_lea.smem %s0, 12
  %s25 = sld [smem:[%s24]]
  %s26 = scalar_lea.smem %s0, 13
  %s27 = sld [smem:[%s26]]
  %s28 = scalar_lea.smem %s0, 14
  %s29 = sld [smem:[%s28]]
  %s30 = scalar_lea.smem %s0, 15
  %s31 = sld [smem:[%s30]]
  %s32 = scalar_lea.smem %s0, 16
  %s33 = sld [smem:[%s32]]
  %s34 = scalar_lea.smem %s0, 17
  %s35 = sld [smem:[%s34]]
  %s36 = scalar_lea.smem %s0, 18
  %s37 = sld [smem:[%s36]]
  %s38 = scalar_lea.smem %s0, 19
  %s39 = sld [smem:[%s38]]
  %s40 = scalar_lea.smem %s0, 20
  %s41 = sld [smem:[%s40]]
  %s42 = scalar_lea.smem %s0, 21
  %s43 = sld [smem:[%s42]]
  %s44 = scalar_lea.smem %s0, 22
  %s45 = sld [smem:[%s44]]
  %s46 = scalar_lea.smem %s0, 23
  %s47 = sld [smem:[%s46]]
  %s48 = scalar_lea.smem %s0, 24
  %s49 = sld [smem:[%s48]]
  %s50 = scalar_lea.smem %s0, 25
  %s51 = sld [smem:[%s50]]
  %s52 = scalar_lea.smem %s0, 26
  %s53 = sld [smem:[%s52]]
  %s54 = scalar_lea.smem %s0, 27
  %s55 = sld [smem:[%s54]]
  %s56 = scalar_lea.smem %s0, 28
  %s57 = sld [smem:[%s56]]
  %s58 = scalar_lea.smem %s0, 29
  %s59 = sld [smem:[%s58]]
  %s60 = scalar_lea.smem %s0, 30
  %s61 = sld [smem:[%s60]]
  %s62 = scalar_lea.smem %s0, 31
  %s63 = sld [smem:[%s62]]
  %s64 = scalar_lea.smem %s0, 32
  %s65 = sld [smem:[%s64]]
  %s66 = scalar_lea.smem %s0, 33
  %s67 = sld [smem:[%s66]]
  %s68 = scalar_lea.smem %s0, 34
  %s69 = sld [smem:[%s68]]
  %s70 = scalar_lea.smem %s0, 35
  %s71 = sld [smem:[%s70]]
  %s72 = scalar_lea.smem %s0, 36
  %s73 = sld [smem:[%s72]]
  %s74 = scalar_lea.smem %s0, 37
  %s75 = sld [smem:[%s74]]
  %s76 = scalar_lea.smem %s0, 38
  %s77 = sld [smem:[%s76]]
  %s78 = scalar_lea.smem %s0, 39
  %s79 = sld [smem:[%s78]]
  %s80 = scalar_lea.smem %s0, 40
  %s81 = sld [smem:[%s80]]
  %s82 = scalar_lea.smem %s0, 41
  %s83 = sld [smem:[%s82]]
  %s84 = scalar_lea.smem %s0, 42
  %s85 = sld [smem:[%s84]]
  %86 = xla_tuple %s83, %s85
  %s87 = sld [smem:[#allocation0]]
  $region318: #{_lambda_.1} parent=0
    _
  %s89 = ssub.s32 1, %s87
  %s90 = scalar_select 0, %s89, %s87
  $region1: #{_lambda_.1} parent=0
    #allocation2 [shape = 'u8[4096]{0}', space=vmem, size = 0x1000, scoped, tag = 'input window, operand 1, single buffered']
    #allocation3 [shape = 's32[1]{0}', space=sflag, size = 0x4, scoped, tag = 'scoped memory for _lambda_.1']
    #allocation4 [shape = 'u8[512]{0}', space=vmem, size = 0x400, scoped, tag = 'input window, operand 2, single buffered']
    #allocation5 [shape = 's32[1]{0}', space=sflag, size = 0x4, scoped, tag = 'scoped memory for _lambda_.1']
    #allocation6 [shape = 'u8[512]{0}', space=vmem, size = 0x400, scoped, tag = 'input window, operand 4, single buffered']
    #allocation7 [shape = 'u8[512]{0}', space=vmem, size = 0x400, scoped, tag = 'input window, operand 5, single buffered']
    #allocation8 [shape = 's32[1]{0}', space=sflag, size = 0x4, scoped, tag = 'scoped memory for _lambda_.1']
    #allocation9 [shape = 'u8[512]{0}', space=vmem, size = 0x400, scoped, tag = 'input window, operand 6, single buffered']
    #allocation10 [shape = 'u8[512]{0}', space=vmem, size = 0x400, scoped, tag = 'input window, operand 8, single buffered']
    #allocation11 [shape = 's32[1]{0}', space=sflag, size = 0x4, scoped, tag = 'scoped memory for _lambda_.1']
    #allocation12 [shape = 'u8[512]{0}', space=vmem, size = 0x400, scoped, tag = 'input window, operand 10, single buffered']
    #allocation13 [shape = 'u8[512]{0}', space=vmem, size = 0x400, scoped, tag = 'input window, operand 11, single buffered']
    #allocation14 [shape = 's32[1]{0}', space=sflag, size = 0x4, scoped, tag = 'scoped memory for _lambda_.1']
    #allocation15 [shape = 'u8[512]{0}', space=vmem, size = 0x400, scoped, tag = 'input window, operand 12, single buffered']
    #allocation16 [shape = 'u8[16384]{0}', space=vmem, size = 0x4000, scoped, tag = 'input window, operand 13, single buffered']
    #allocation17 [shape = 's32[1]{0}', space=sflag, size = 0x4, scoped, tag = 'scoped memory for _lambda_.1']
    #allocation18 [shape = 'u8[512]{0}', space=vmem, size = 0x400, scoped, tag = 'input window, operand 14, single buffered']
    #allocation19 [shape = 'u8[16384]{0}', space=vmem, size = 0x4000, scoped, tag = 'input window, operand 15, single buffered']
    #allocation20 [shape = 's32[1]{0}', space=sflag, size = 0x4, scoped, tag = 'scoped memory for _lambda_.1']
    #allocation21 [shape = 'u8[512]{0}', space=vmem, size = 0x400, scoped, tag = 'input window, operand 16, single buffered']
    #allocation22 [shape = 'u8[512]{0}', space=vmem, size = 0x400, scoped, tag = 'input window, operand 17, single buffered']
    #allocation23 [shape = 's32[1]{0}', space=sflag, size = 0x4, scoped, tag = 'scoped memory for _lambda_.1']
    #allocation24 [shape = 'u8[512]{0}', space=vmem, size = 0x400, scoped, tag = 'input window, operand 18, single buffered']
    #allocation25 [shape = 'u8[16384]{0}', space=vmem, size = 0x4000, scoped, tag = 'input window, operand 19, single buffered']
    #allocation26 [shape = 's32[1]{0}', space=sflag, size = 0x4, scoped, tag = 'scoped memory for _lambda_.1']
    #allocation27 [shape = 'u8[512]{0}', space=vmem, size = 0x400, scoped, tag = 'input window, operand 20, single buffered']
    #allocation28 [shape = 'u8[16384]{0}', space=vmem, size = 0x4000, scoped, tag = 'input window, operand 21, single buffered']
    #allocation29 [shape = 's32[1]{0}', space=sflag, size = 0x4, scoped, tag = 'scoped memory for _lambda_.1']
    #allocation30 [shape = 'u8[512]{0}', space=vmem, size = 0x400, scoped, tag = 'input window, operand 22, single buffered']
    #allocation31 [shape = 'u8[512]{0}', space=vmem, size = 0x400, scoped, tag = 'input window, operand 23, single buffered']
    #allocation32 [shape = 's32[1]{0}', space=sflag, size = 0x4, scoped, tag = 'scoped memory for _lambda_.1']
    #allocation33 [shape = 'u8[512]{0}', space=vmem, size = 0x400, scoped, tag = 'input window, operand 24, single buffered']
    #allocation34 [shape = 'u8[16384]{0}', space=vmem, size = 0x4000, scoped, tag = 'input window, operand 25, single buffered']
    #allocation35 [shape = 's32[1]{0}', space=sflag, size = 0x4, scoped, tag = 'scoped memory for _lambda_.1']
    #allocation36 [shape = 'u8[512]{0}', space=vmem, size = 0x400, scoped, tag = 'input window, operand 26, single buffered']
    #allocation37 [shape = 'u8[16384]{0}', space=vmem, size = 0x4000, scoped, tag = 'input window, operand 27, single buffered']
    #allocation38 [shape = 's32[1]{0}', space=sflag, size = 0x4, scoped, tag = 'scoped memory for _lambda_.1']
    #allocation39 [shape = 'u8[512]{0}', space=vmem, size = 0x400, scoped, tag = 'input window, operand 28, single buffered']
    #allocation40 [shape = 'u8[16384]{0}', space=vmem, size = 0x4000, scoped, tag = 'input window, operand 29, single buffered']
    #allocation41 [shape = 's32[1]{0}', space=sflag, size = 0x4, scoped, tag = 'scoped memory for _lambda_.1']
    #allocation42 [shape = 'u8[512]{0}', space=vmem, size = 0x400, scoped, tag = 'input window, operand 30, single buffered']
    #allocation43 [shape = 'u8[16384]{0}', space=vmem, size = 0x4000, scoped, tag = 'input window, operand 31, single buffered']
    #allocation44 [shape = 's32[1]{0}', space=sflag, size = 0x4, scoped, tag = 'scoped memory for _lambda_.1']
    #allocation45 [shape = 'u8[512]{0}', space=vmem, size = 0x400, scoped, tag = 'input window, operand 32, single buffered']
    #allocation46 [shape = 'u8[512]{0}', space=vmem, size = 0x400, scoped, tag = 'input window, operand 34, single buffered']
    #allocation47 [shape = 's32[1]{0}', space=sflag, size = 0x4, scoped, tag = 'scoped memory for _lambda_.1']
    #allocation48 [shape = 'u8[512]{0}', space=vmem, size = 0x400, scoped, tag = 'input window, operand 36, single buffered']
    #allocation49 [shape = 'u8[16384]{0}', space=vmem, size = 0x4000, scoped, tag = 'input window, operand 37, single buffered']
    #allocation50 [shape = 's32[1]{0}', space=sflag, size = 0x4, scoped, tag = 'scoped memory for _lambda_.1']
    #allocation51 [shape = 'u8[512]{0}', space=vmem, size = 0x400, scoped, tag = 'input window, operand 38, single buffered']
    #allocation52 [shape = 'u8[512]{0}', space=vmem, size = 0x400, scoped, tag = 'input window, operand 40, single buffered']
    #allocation53 [shape = 's32[1]{0}', space=sflag, size = 0x4, scoped, tag = 'scoped memory for _lambda_.1']
    %91 = vsyncpa [#allocation3], 0
    %92 = vsyncpa [#allocation5], 0
    %93 = vsyncpa [#allocation8], 0
    %94 = vsyncpa [#allocation11], 0
    %95 = vsyncpa [#allocation14], 0
    %96 = vsyncpa [#allocation17], 0
    %97 = vsyncpa [#allocation20], 0
    %98 = vsyncpa [#allocation23], 0
    %99 = vsyncpa [#allocation26], 0
    %100 = vsyncpa [#allocation29], 0
    %101 = vsyncpa [#allocation32], 0
    %102 = vsyncpa [#allocation35], 0
    %103 = vsyncpa [#allocation38], 0
    %104 = vsyncpa [#allocation41], 0
    %105 = vsyncpa [#allocation44], 0
    %106 = vsyncpa [#allocation47], 0
    %107 = vsyncpa [#allocation50], 0
    %108 = vsyncpa [#allocation53], 0
    // Predicated region
    $region2: #{_lambda_.1} parent=1 // pred_check
      _
    $region3: #{_lambda_.1} parent=1 // pred_check_branch
      %110 = sbr.rel (0) target = $region5
    $region4: #{_lambda_.1} parent=1 // pred_region
      _
    $region5: #{_lambda_.1} parent=1 // pred_fallthru
      _
    // Predicated region
    $region6: #{_lambda_.1} parent=1 // pred_check
      _
    $region7: #{_lambda_.1} parent=1 // pred_check_branch
      %112 = sbr.rel (0) target = $region9
    $region8: #{_lambda_.1} parent=1 // pred_region
      %114 = vsyncadd [#allocation3], 0
      %s116 = sshll.u32 %s3, 4
      %s117 = int_to_ptr.hbm [resolvable:$true] %s116
      %s118 = sshll.u32 [#allocation2], 4
      %s119 = int_to_ptr.vmem [resolvable:$true] %s118
      %121 = dma.hbm_to_vmem [thread:$0]  %s117, 128, %s119, [#allocation3]
    $region9: #{_lambda_.1} parent=1 // pred_fallthru
      _
    // Predicated region
    $region10: #{_lambda_.1} parent=1 // pred_check
      _
    $region11: #{_lambda_.1} parent=1 // pred_check_branch
      %123 = sbr.rel (0) target = $region13
    $region12: #{_lambda_.1} parent=1 // pred_region
      %125 = vsyncadd [#allocation5], 0
      %s127 = sshll.u32 %s5, 4
      %s128 = int_to_ptr.hbm [resolvable:$true] %s127
      %s129 = sshll.u32 [#allocation4], 4
      %s130 = int_to_ptr.vmem [resolvable:$true] %s129
      %132 = dma.hbm_to_vmem [thread:$0]  %s128, 16, %s130, [#allocation5]
    $region13: #{_lambda_.1} parent=1 // pred_fallthru
      _
    // Predicated region
    $region14: #{_lambda_.1} parent=1 // pred_check
      _
    $region15: #{_lambda_.1} parent=1 // pred_check_branch
      %134 = sbr.rel (0) target = $region17
    $region16: #{_lambda_.1} parent=1 // pred_region
      _
    $region17: #{_lambda_.1} parent=1 // pred_fallthru
      _
    // Predicated region
    $region18: #{_lambda_.1} parent=1 // pred_check
      _
    $region19: #{_lambda_.1} parent=1 // pred_check_branch
      %136 = sbr.rel (0) target = $region21
    $region20: #{_lambda_.1} parent=1 // pred_region
      %138 = vsyncadd [#allocation5], 0
      %s140 = sshll.u32 %s9, 4
      %s141 = int_to_ptr.hbm [resolvable:$true] %s140
      %s142 = sshll.u32 [#allocation6], 4
      %s143 = int_to_ptr.vmem [resolvable:$true] %s142
      %145 = dma.hbm_to_vmem [thread:$0]  %s141, 16, %s143, [#allocation5]
    $region21: #{_lambda_.1} parent=1 // pred_fallthru
      _
    // Predicated region
    $region22: #{_lambda_.1} parent=1 // pred_check
      _
    $region23: #{_lambda_.1} parent=1 // pred_check_branch
      %147 = sbr.rel (0) target = $region25
    $region24: #{_lambda_.1} parent=1 // pred_region
      %149 = vsyncadd [#allocation8], 0
      %s151 = sshll.u32 %s11, 4
      %s152 = int_to_ptr.hbm [resolvable:$true] %s151
      %s153 = sshll.u32 [#allocation7], 4
      %s154 = int_to_ptr.vmem [resolvable:$true] %s153
      %156 = dma.hbm_to_vmem [thread:$0]  %s152, 16, %s154, [#allocation8]
    $region25: #{_lambda_.1} parent=1 // pred_fallthru
      _
    // Predicated region
    $region26: #{_lambda_.1} parent=1 // pred_check
      _
    $region27: #{_lambda_.1} parent=1 // pred_check_branch
      %158 = sbr.rel (0) target = $region29
    $region28: #{_lambda_.1} parent=1 // pred_region
      %160 = vsyncadd [#allocation8], 0
      %s162 = sshll.u32 %s13, 4
      %s163 = int_to_ptr.hbm [resolvable:$true] %s162
      %s164 = sshll.u32 [#allocation9], 4
      %s165 = int_to_ptr.vmem [resolvable:$true] %s164
      %167 = dma.hbm_to_vmem [thread:$0]  %s163, 16, %s165, [#allocation8]
    $region29: #{_lambda_.1} parent=1 // pred_fallthru
      _
    // Predicated region
    $region30: #{_lambda_.1} parent=1 // pred_check
      _
    $region31: #{_lambda_.1} parent=1 // pred_check_branch
      %169 = sbr.rel (0) target = $region33
    $region32: #{_lambda_.1} parent=1 // pred_region
      _
    $region33: #{_lambda_.1} parent=1 // pred_fallthru
      _
    // Predicated region
    $region34: #{_lambda_.1} parent=1 // pred_check
      _
    $region35: #{_lambda_.1} parent=1 // pred_check_branch
      %171 = sbr.rel (0) target = $region37
    $region36: #{_lambda_.1} parent=1 // pred_region
      %173 = vsyncadd [#allocation11], 0
      %s175 = sshll.u32 %s17, 4
      %s176 = int_to_ptr.hbm [resolvable:$true] %s175
      %s177 = sshll.u32 [#allocation10], 4
      %s178 = int_to_ptr.vmem [resolvable:$true] %s177
      %180 = dma.hbm_to_vmem [thread:$0]  %s176, 16, %s178, [#allocation11]
    $region37: #{_lambda_.1} parent=1 // pred_fallthru
      _
    // Predicated region
    $region38: #{_lambda_.1} parent=1 // pred_check
      _
    $region39: #{_lambda_.1} parent=1 // pred_check_branch
      %182 = sbr.rel (0) target = $region41
    $region40: #{_lambda_.1} parent=1 // pred_region
      _
    $region41: #{_lambda_.1} parent=1 // pred_fallthru
      _
    // Predicated region
    $region42: #{_lambda_.1} parent=1 // pred_check
      _
    $region43: #{_lambda_.1} parent=1 // pred_check_branch
      %184 = sbr.rel (0) target = $region45
    $region44: #{_lambda_.1} parent=1 // pred_region
      %186 = vsyncadd [#allocation11], 0
      %s188 = sshll.u32 %s21, 4
      %s189 = int_to_ptr.hbm [resolvable:$true] %s188
      %s190 = sshll.u32 [#allocation12], 4
      %s191 = int_to_ptr.vmem [resolvable:$true] %s190
      %193 = dma.hbm_to_vmem [thread:$0]  %s189, 16, %s191, [#allocation11]
    $region45: #{_lambda_.1} parent=1 // pred_fallthru
      _
    // Predicated region
    $region46: #{_lambda_.1} parent=1 // pred_check
      _
    $region47: #{_lambda_.1} parent=1 // pred_check_branch
      %195 = sbr.rel (0) target = $region49
    $region48: #{_lambda_.1} parent=1 // pred_region
      %197 = vsyncadd [#allocation14], 0
      %s199 = sshll.u32 %s23, 4
      %s200 = int_to_ptr.hbm [resolvable:$true] %s199
      %s201 = sshll.u32 [#allocation13], 4
      %s202 = int_to_ptr.vmem [resolvable:$true] %s201
      %204 = dma.hbm_to_vmem [thread:$0]  %s200, 16, %s202, [#allocation14]
    $region49: #{_lambda_.1} parent=1 // pred_fallthru
      _
    // Predicated region
    $region50: #{_lambda_.1} parent=1 // pred_check
      _
    $region51: #{_lambda_.1} parent=1 // pred_check_branch
      %206 = sbr.rel (0) target = $region53
    $region52: #{_lambda_.1} parent=1 // pred_region
      %208 = vsyncadd [#allocation14], 0
      %s210 = sshll.u32 %s25, 4
      %s211 = int_to_ptr.hbm [resolvable:$true] %s210
      %s212 = sshll.u32 [#allocation15], 4
      %s213 = int_to_ptr.vmem [resolvable:$true] %s212
      %215 = dma.hbm_to_vmem [thread:$0]  %s211, 16, %s213, [#allocation14]
    $region53: #{_lambda_.1} parent=1 // pred_fallthru
      _
    // Predicated region
    $region54: #{_lambda_.1} parent=1 // pred_check
      _
    $region55: #{_lambda_.1} parent=1 // pred_check_branch
      %217 = sbr.rel (0) target = $region57
    $region56: #{_lambda_.1} parent=1 // pred_region
      %219 = vsyncadd [#allocation17], 0
      %s220 = sshll.u32 %s27, 4
      %s221 = int_to_ptr.hbm [resolvable:$true] %s220
      %s222 = sshll.u32 [#allocation16], 4
      %s223 = int_to_ptr.vmem [resolvable:$true] %s222
      %228 = dma.hbm_to_vmem [thread:$0]  %s221, 512, %s223, [#allocation17], 128, 128, 8
    $region57: #{_lambda_.1} parent=1 // pred_fallthru
      _
    // Predicated region
    $region58: #{_lambda_.1} parent=1 // pred_check
      _
    $region59: #{_lambda_.1} parent=1 // pred_check_branch
      %230 = sbr.rel (0) target = $region61
    $region60: #{_lambda_.1} parent=1 // pred_region
      %232 = vsyncadd [#allocation17], 0
      %s234 = sshll.u32 %s29, 4
      %s235 = int_to_ptr.hbm [resolvable:$true] %s234
      %s236 = sshll.u32 [#allocation18], 4
      %s237 = int_to_ptr.vmem [resolvable:$true] %s236
      %239 = dma.hbm_to_vmem [thread:$0]  %s235, 16, %s237, [#allocation17]
    $region61: #{_lambda_.1} parent=1 // pred_fallthru
      _
    // Predicated region
    $region62: #{_lambda_.1} parent=1 // pred_check
      _
    $region63: #{_lambda_.1} parent=1 // pred_check_branch
      %241 = sbr.rel (0) target = $region65
    $region64: #{_lambda_.1} parent=1 // pred_region
      %243 = vsyncadd [#allocation20], 0
      %s244 = sshll.u32 %s31, 4
      %s245 = int_to_ptr.hbm [resolvable:$true] %s244
      %s246 = sshll.u32 [#allocation19], 4
      %s247 = int_to_ptr.vmem [resolvable:$true] %s246
      %252 = dma.hbm_to_vmem [thread:$0]  %s245, 512, %s247, [#allocation20], 128, 128, 8
    $region65: #{_lambda_.1} parent=1 // pred_fallthru
      _
    // Predicated region
    $region66: #{_lambda_.1} parent=1 // pred_check
      _
    $region67: #{_lambda_.1} parent=1 // pred_check_branch
      %254 = sbr.rel (0) target = $region69
    $region68: #{_lambda_.1} parent=1 // pred_region
      %256 = vsyncadd [#allocation20], 0
      %s258 = sshll.u32 %s33, 4
      %s259 = int_to_ptr.hbm [resolvable:$true] %s258
      %s260 = sshll.u32 [#allocation21], 4
      %s261 = int_to_ptr.vmem [resolvable:$true] %s260
      %263 = dma.hbm_to_vmem [thread:$0]  %s259, 16, %s261, [#allocation20]
    $region69: #{_lambda_.1} parent=1 // pred_fallthru
      _
    // Predicated region
    $region70: #{_lambda_.1} parent=1 // pred_check
      _
    $region71: #{_lambda_.1} parent=1 // pred_check_branch
      %265 = sbr.rel (0) target = $region73
    $region72: #{_lambda_.1} parent=1 // pred_region
      %267 = vsyncadd [#allocation23], 0
      %s269 = sshll.u32 %s35, 4
      %s270 = int_to_ptr.hbm [resolvable:$true] %s269
      %s271 = sshll.u32 [#allocation22], 4
      %s272 = int_to_ptr.vmem [resolvable:$true] %s271
      %274 = dma.hbm_to_vmem [thread:$0]  %s270, 16, %s272, [#allocation23]
    $region73: #{_lambda_.1} parent=1 // pred_fallthru
      _
    // Predicated region
    $region74: #{_lambda_.1} parent=1 // pred_check
      _
    $region75: #{_lambda_.1} parent=1 // pred_check_branch
      %276 = sbr.rel (0) target = $region77
    $region76: #{_lambda_.1} parent=1 // pred_region
      %278 = vsyncadd [#allocation23], 0
      %s280 = sshll.u32 %s37, 4
      %s281 = int_to_ptr.hbm [resolvable:$true] %s280
      %s282 = sshll.u32 [#allocation24], 4
      %s283 = int_to_ptr.vmem [resolvable:$true] %s282
      %285 = dma.hbm_to_vmem [thread:$0]  %s281, 16, %s283, [#allocation23]
    $region77: #{_lambda_.1} parent=1 // pred_fallthru
      _
    // Predicated region
    $region78: #{_lambda_.1} parent=1 // pred_check
      _
    $region79: #{_lambda_.1} parent=1 // pred_check_branch
      %287 = sbr.rel (0) target = $region81
    $region80: #{_lambda_.1} parent=1 // pred_region
      %289 = vsyncadd [#allocation26], 0
      %s290 = sshll.u32 %s39, 4
      %s291 = int_to_ptr.hbm [resolvable:$true] %s290
      %s292 = sshll.u32 [#allocation25], 4
      %s293 = int_to_ptr.vmem [resolvable:$true] %s292
      %298 = dma.hbm_to_vmem [thread:$0]  %s291, 512, %s293, [#allocation26], 128, 128, 8
    $region81: #{_lambda_.1} parent=1 // pred_fallthru
      _
    // Predicated region
    $region82: #{_lambda_.1} parent=1 // pred_check
      _
    $region83: #{_lambda_.1} parent=1 // pred_check_branch
      %300 = sbr.rel (0) target = $region85
    $region84: #{_lambda_.1} parent=1 // pred_region
      %302 = vsyncadd [#allocation26], 0
      %s304 = sshll.u32 %s41, 4
      %s305 = int_to_ptr.hbm [resolvable:$true] %s304
      %s306 = sshll.u32 [#allocation27], 4
      %s307 = int_to_ptr.vmem [resolvable:$true] %s306
      %309 = dma.hbm_to_vmem [thread:$0]  %s305, 16, %s307, [#allocation26]
    $region85: #{_lambda_.1} parent=1 // pred_fallthru
      _
    // Predicated region
    $region86: #{_lambda_.1} parent=1 // pred_check
      _
    $region87: #{_lambda_.1} parent=1 // pred_check_branch
      %311 = sbr.rel (0) target = $region89
    $region88: #{_lambda_.1} parent=1 // pred_region
      %313 = vsyncadd [#allocation29], 0
      %s314 = sshll.u32 %s43, 4
      %s315 = int_to_ptr.hbm [resolvable:$true] %s314
      %s316 = sshll.u32 [#allocation28], 4
      %s317 = int_to_ptr.vmem [resolvable:$true] %s316
      %322 = dma.hbm_to_vmem [thread:$0]  %s315, 512, %s317, [#allocation29], 128, 128, 8
    $region89: #{_lambda_.1} parent=1 // pred_fallthru
      _
    // Predicated region
    $region90: #{_lambda_.1} parent=1 // pred_check
      _
    $region91: #{_lambda_.1} parent=1 // pred_check_branch
      %324 = sbr.rel (0) target = $region93
    $region92: #{_lambda_.1} parent=1 // pred_region
      %326 = vsyncadd [#allocation29], 0
      %s328 = sshll.u32 %s45, 4
      %s329 = int_to_ptr.hbm [resolvable:$true] %s328
      %s330 = sshll.u32 [#allocation30], 4
      %s331 = int_to_ptr.vmem [resolvable:$true] %s330
      %333 = dma.hbm_to_vmem [thread:$0]  %s329, 16, %s331, [#allocation29]
    $region93: #{_lambda_.1} parent=1 // pred_fallthru
      _
    // Predicated region
    $region94: #{_lambda_.1} parent=1 // pred_check
      _
    $region95: #{_lambda_.1} parent=1 // pred_check_branch
      %335 = sbr.rel (0) target = $region97
    $region96: #{_lambda_.1} parent=1 // pred_region
      %337 = vsyncadd [#allocation32], 0
      %s339 = sshll.u32 %s47, 4
      %s340 = int_to_ptr.hbm [resolvable:$true] %s339
      %s341 = sshll.u32 [#allocation31], 4
      %s342 = int_to_ptr.vmem [resolvable:$true] %s341
      %344 = dma.hbm_to_vmem [thread:$0]  %s340, 16, %s342, [#allocation32]
    $region97: #{_lambda_.1} parent=1 // pred_fallthru
      _
    // Predicated region
    $region98: #{_lambda_.1} parent=1 // pred_check
      _
    $region99: #{_lambda_.1} parent=1 // pred_check_branch
      %346 = sbr.rel (0) target = $region101
    $region100: #{_lambda_.1} parent=1 // pred_region
      %348 = vsyncadd [#allocation32], 0
      %s350 = sshll.u32 %s49, 4
      %s351 = int_to_ptr.hbm [resolvable:$true] %s350
      %s352 = sshll.u32 [#allocation33], 4
      %s353 = int_to_ptr.vmem [resolvable:$true] %s352
      %355 = dma.hbm_to_vmem [thread:$0]  %s351, 16, %s353, [#allocation32]
    $region101: #{_lambda_.1} parent=1 // pred_fallthru
      _
    // Predicated region
    $region102: #{_lambda_.1} parent=1 // pred_check
      _
    $region103: #{_lambda_.1} parent=1 // pred_check_branch
      %357 = sbr.rel (0) target = $region105
    $region104: #{_lambda_.1} parent=1 // pred_region
      %359 = vsyncadd [#allocation35], 0
      %s360 = sshll.u32 %s51, 4
      %s361 = int_to_ptr.hbm [resolvable:$true] %s360
      %s362 = sshll.u32 [#allocation34], 4
      %s363 = int_to_ptr.vmem [resolvable:$true] %s362
      %368 = dma.hbm_to_vmem [thread:$0]  %s361, 512, %s363, [#allocation35], 128, 128, 8
    $region105: #{_lambda_.1} parent=1 // pred_fallthru
      _
    // Predicated region
    $region106: #{_lambda_.1} parent=1 // pred_check
      _
    $region107: #{_lambda_.1} parent=1 // pred_check_branch
      %370 = sbr.rel (0) target = $region109
    $region108: #{_lambda_.1} parent=1 // pred_region
      %372 = vsyncadd [#allocation35], 0
      %s374 = sshll.u32 %s53, 4
      %s375 = int_to_ptr.hbm [resolvable:$true] %s374
      %s376 = sshll.u32 [#allocation36], 4
      %s377 = int_to_ptr.vmem [resolvable:$true] %s376
      %379 = dma.hbm_to_vmem [thread:$0]  %s375, 16, %s377, [#allocation35]
    $region109: #{_lambda_.1} parent=1 // pred_fallthru
      _
    // Predicated region
    $region110: #{_lambda_.1} parent=1 // pred_check
      _
    $region111: #{_lambda_.1} parent=1 // pred_check_branch
      %381 = sbr.rel (0) target = $region113
    $region112: #{_lambda_.1} parent=1 // pred_region
      %383 = vsyncadd [#allocation38], 0
      %s384 = sshll.u32 %s55, 4
      %s385 = int_to_ptr.hbm [resolvable:$true] %s384
      %s386 = sshll.u32 [#allocation37], 4
      %s387 = int_to_ptr.vmem [resolvable:$true] %s386
      %392 = dma.hbm_to_vmem [thread:$0]  %s385, 512, %s387, [#allocation38], 128, 128, 8
    $region113: #{_lambda_.1} parent=1 // pred_fallthru
      _
    // Predicated region
    $region114: #{_lambda_.1} parent=1 // pred_check
      _
    $region115: #{_lambda_.1} parent=1 // pred_check_branch
      %394 = sbr.rel (0) target = $region117
    $region116: #{_lambda_.1} parent=1 // pred_region
      %396 = vsyncadd [#allocation38], 0
      %s398 = sshll.u32 %s57, 4
      %s399 = int_to_ptr.hbm [resolvable:$true] %s398
      %s400 = sshll.u32 [#allocation39], 4
      %s401 = int_to_ptr.vmem [resolvable:$true] %s400
      %403 = dma.hbm_to_vmem [thread:$0]  %s399, 16, %s401, [#allocation38]
    $region117: #{_lambda_.1} parent=1 // pred_fallthru
      _
    // Predicated region
    $region118: #{_lambda_.1} parent=1 // pred_check
      _
    $region119: #{_lambda_.1} parent=1 // pred_check_branch
      %405 = sbr.rel (0) target = $region121
    $region120: #{_lambda_.1} parent=1 // pred_region
      %407 = vsyncadd [#allocation41], 0
      %s408 = sshll.u32 %s59, 4
      %s409 = int_to_ptr.hbm [resolvable:$true] %s408
      %s410 = sshll.u32 [#allocation40], 4
      %s411 = int_to_ptr.vmem [resolvable:$true] %s410
      %416 = dma.hbm_to_vmem [thread:$0]  %s409, 512, %s411, [#allocation41], 128, 128, 8
    $region121: #{_lambda_.1} parent=1 // pred_fallthru
      _
    // Predicated region
    $region122: #{_lambda_.1} parent=1 // pred_check
      _
    $region123: #{_lambda_.1} parent=1 // pred_check_branch
      %418 = sbr.rel (0) target = $region125
    $region124: #{_lambda_.1} parent=1 // pred_region
      %420 = vsyncadd [#allocation41], 0
      %s422 = sshll.u32 %s61, 4
      %s423 = int_to_ptr.hbm [resolvable:$true] %s422
      %s424 = sshll.u32 [#allocation42], 4
      %s425 = int_to_ptr.vmem [resolvable:$true] %s424
      %427 = dma.hbm_to_vmem [thread:$0]  %s423, 16, %s425, [#allocation41]
    $region125: #{_lambda_.1} parent=1 // pred_fallthru
      _
    // Predicated region
    $region126: #{_lambda_.1} parent=1 // pred_check
      _
    $region127: #{_lambda_.1} parent=1 // pred_check_branch
      %429 = sbr.rel (0) target = $region129
    $region128: #{_lambda_.1} parent=1 // pred_region
      %431 = vsyncadd [#allocation44], 0
      %s432 = sshll.u32 %s63, 4
      %s433 = int_to_ptr.hbm [resolvable:$true] %s432
      %s434 = sshll.u32 [#allocation43], 4
      %s435 = int_to_ptr.vmem [resolvable:$true] %s434
      %440 = dma.hbm_to_vmem [thread:$0]  %s433, 512, %s435, [#allocation44], 128, 128, 8
    $region129: #{_lambda_.1} parent=1 // pred_fallthru
      _
    // Predicated region
    $region130: #{_lambda_.1} parent=1 // pred_check
      _
    $region131: #{_lambda_.1} parent=1 // pred_check_branch
      %442 = sbr.rel (0) target = $region133
    $region132: #{_lambda_.1} parent=1 // pred_region
      %444 = vsyncadd [#allocation44], 0
      %s446 = sshll.u32 %s65, 4
      %s447 = int_to_ptr.hbm [resolvable:$true] %s446
      %s448 = sshll.u32 [#allocation45], 4
      %s449 = int_to_ptr.vmem [resolvable:$true] %s448
      %451 = dma.hbm_to_vmem [thread:$0]  %s447, 16, %s449, [#allocation44]
    $region133: #{_lambda_.1} parent=1 // pred_fallthru
      _
    // Predicated region
    $region134: #{_lambda_.1} parent=1 // pred_check
      _
    $region135: #{_lambda_.1} parent=1 // pred_check_branch
      %453 = sbr.rel (0) target = $region137
    $region136: #{_lambda_.1} parent=1 // pred_region
      _
    $region137: #{_lambda_.1} parent=1 // pred_fallthru
      _
    // Predicated region
    $region138: #{_lambda_.1} parent=1 // pred_check
      _
    $region139: #{_lambda_.1} parent=1 // pred_check_branch
      %455 = sbr.rel (0) target = $region141
    $region140: #{_lambda_.1} parent=1 // pred_region
      %457 = vsyncadd [#allocation47], 0
      %s459 = sshll.u32 %s69, 4
      %s460 = int_to_ptr.hbm [resolvable:$true] %s459
      %s461 = sshll.u32 [#allocation46], 4
      %s462 = int_to_ptr.vmem [resolvable:$true] %s461
      %464 = dma.hbm_to_vmem [thread:$0]  %s460, 16, %s462, [#allocation47]
    $region141: #{_lambda_.1} parent=1 // pred_fallthru
      _
    // Predicated region
    $region142: #{_lambda_.1} parent=1 // pred_check
      _
    $region143: #{_lambda_.1} parent=1 // pred_check_branch
      %466 = sbr.rel (0) target = $region145
    $region144: #{_lambda_.1} parent=1 // pred_region
      _
    $region145: #{_lambda_.1} parent=1 // pred_fallthru
      _
    // Predicated region
    $region146: #{_lambda_.1} parent=1 // pred_check
      _
    $region147: #{_lambda_.1} parent=1 // pred_check_branch
      %468 = sbr.rel (0) target = $region149
    $region148: #{_lambda_.1} parent=1 // pred_region
      %470 = vsyncadd [#allocation47], 0
      %s472 = sshll.u32 %s73, 4
      %s473 = int_to_ptr.hbm [resolvable:$true] %s472
      %s474 = sshll.u32 [#allocation48], 4
      %s475 = int_to_ptr.vmem [resolvable:$true] %s474
      %477 = dma.hbm_to_vmem [thread:$0]  %s473, 16, %s475, [#allocation47]
    $region149: #{_lambda_.1} parent=1 // pred_fallthru
      _
    // Predicated region
    $region150: #{_lambda_.1} parent=1 // pred_check
      _
    $region151: #{_lambda_.1} parent=1 // pred_check_branch
      %479 = sbr.rel (0) target = $region153
    $region152: #{_lambda_.1} parent=1 // pred_region
      %481 = vsyncadd [#allocation50], 0
      %s482 = sshll.u32 %s75, 4
      %s483 = int_to_ptr.hbm [resolvable:$true] %s482
      %s484 = sshll.u32 [#allocation49], 4
      %s485 = int_to_ptr.vmem [resolvable:$true] %s484
      %490 = dma.hbm_to_vmem [thread:$0]  %s483, 512, %s485, [#allocation50], 128, 128, 8
    $region153: #{_lambda_.1} parent=1 // pred_fallthru
      _
    // Predicated region
    $region154: #{_lambda_.1} parent=1 // pred_check
      _
    $region155: #{_lambda_.1} parent=1 // pred_check_branch
      %492 = sbr.rel (0) target = $region157
    $region156: #{_lambda_.1} parent=1 // pred_region
      %494 = vsyncadd [#allocation50], 0
      %s496 = sshll.u32 %s77, 4
      %s497 = int_to_ptr.hbm [resolvable:$true] %s496
      %s498 = sshll.u32 [#allocation51], 4
      %s499 = int_to_ptr.vmem [resolvable:$true] %s498
      %501 = dma.hbm_to_vmem [thread:$0]  %s497, 16, %s499, [#allocation50]
    $region157: #{_lambda_.1} parent=1 // pred_fallthru
      _
    // Predicated region
    $region158: #{_lambda_.1} parent=1 // pred_check
      _
    $region159: #{_lambda_.1} parent=1 // pred_check_branch
      %503 = sbr.rel (0) target = $region161
    $region160: #{_lambda_.1} parent=1 // pred_region
      _
    $region161: #{_lambda_.1} parent=1 // pred_fallthru
      _
    // Predicated region
    $region162: #{_lambda_.1} parent=1 // pred_check
      _
    $region163: #{_lambda_.1} parent=1 // pred_check_branch
      %505 = sbr.rel (0) target = $region165
    $region164: #{_lambda_.1} parent=1 // pred_region
      %507 = vsyncadd [#allocation53], 0
      %s509 = sshll.u32 %s81, 4
      %s510 = int_to_ptr.hbm [resolvable:$true] %s509
      %s511 = sshll.u32 [#allocation52], 4
      %s512 = int_to_ptr.vmem [resolvable:$true] %s511
      %514 = dma.hbm_to_vmem [thread:$0]  %s510, 16, %s512, [#allocation53]
    $region165: #{_lambda_.1} parent=1 // pred_fallthru
      _
    // Predicated region
    $region166: #{_lambda_.1} parent=1 // pred_check
      _
    $region167: #{_lambda_.1} parent=1 // pred_check_branch
      %516 = sbr.rel (0) target = $region169
    $region168: #{_lambda_.1} parent=1 // pred_region
      %518 = dma.done [#allocation3], 128
    $region169: #{_lambda_.1} parent=1 // pred_fallthru
      _
    // Predicated region
    $region170: #{_lambda_.1} parent=1 // pred_check
      _
    $region171: #{_lambda_.1} parent=1 // pred_check_branch
      %520 = sbr.rel (0) target = $region173
    $region172: #{_lambda_.1} parent=1 // pred_region
      %522 = dma.done [#allocation5], 16
    $region173: #{_lambda_.1} parent=1 // pred_fallthru
      _
    // Predicated region
    $region174: #{_lambda_.1} parent=1 // pred_check
      _
    $region175: #{_lambda_.1} parent=1 // pred_check_branch
      %524 = sbr.rel (0) target = $region177
    $region176: #{_lambda_.1} parent=1 // pred_region
      %526 = dma.done [#allocation5], 16
    $region177: #{_lambda_.1} parent=1 // pred_fallthru
      _
    // Predicated region
    $region178: #{_lambda_.1} parent=1 // pred_check
      _
    $region179: #{_lambda_.1} parent=1 // pred_check_branch
      %528 = sbr.rel (0) target = $region181
    $region180: #{_lambda_.1} parent=1 // pred_region
      %530 = dma.done [#allocation8], 16
    $region181: #{_lambda_.1} parent=1 // pred_fallthru
      _
    // Predicated region
    $region182: #{_lambda_.1} parent=1 // pred_check
      _
    $region183: #{_lambda_.1} parent=1 // pred_check_branch
      %532 = sbr.rel (0) target = $region185
    $region184: #{_lambda_.1} parent=1 // pred_region
      %534 = dma.done [#allocation8], 16
    $region185: #{_lambda_.1} parent=1 // pred_fallthru
      _
    // Predicated region
    $region186: #{_lambda_.1} parent=1 // pred_check
      _
    $region187: #{_lambda_.1} parent=1 // pred_check_branch
      %536 = sbr.rel (0) target = $region189
    $region188: #{_lambda_.1} parent=1 // pred_region
      %538 = dma.done [#allocation11], 16
    $region189: #{_lambda_.1} parent=1 // pred_fallthru
      _
    // Predicated region
    $region190: #{_lambda_.1} parent=1 // pred_check
      _
    $region191: #{_lambda_.1} parent=1 // pred_check_branch
      %540 = sbr.rel (0) target = $region193
    $region192: #{_lambda_.1} parent=1 // pred_region
      %542 = dma.done [#allocation11], 16
    $region193: #{_lambda_.1} parent=1 // pred_fallthru
      _
    // Predicated region
    $region194: #{_lambda_.1} parent=1 // pred_check
      _
    $region195: #{_lambda_.1} parent=1 // pred_check_branch
      %544 = sbr.rel (0) target = $region197
    $region196: #{_lambda_.1} parent=1 // pred_region
      %546 = dma.done [#allocation14], 16
    $region197: #{_lambda_.1} parent=1 // pred_fallthru
      _
    // Predicated region
    $region198: #{_lambda_.1} parent=1 // pred_check
      _
    $region199: #{_lambda_.1} parent=1 // pred_check_branch
      %548 = sbr.rel (0) target = $region201
    $region200: #{_lambda_.1} parent=1 // pred_region
      %550 = dma.done [#allocation14], 16
    $region201: #{_lambda_.1} parent=1 // pred_fallthru
      _
    // Predicated region
    $region202: #{_lambda_.1} parent=1 // pred_check
      _
    $region203: #{_lambda_.1} parent=1 // pred_check_branch
      %552 = sbr.rel (0) target = $region205
    $region204: #{_lambda_.1} parent=1 // pred_region
      %554 = dma.done [#allocation17], 512
    $region205: #{_lambda_.1} parent=1 // pred_fallthru
      _
    // Predicated region
    $region206: #{_lambda_.1} parent=1 // pred_check
      _
    $region207: #{_lambda_.1} parent=1 // pred_check_branch
      %556 = sbr.rel (0) target = $region209
    $region208: #{_lambda_.1} parent=1 // pred_region
      %558 = dma.done [#allocation17], 16
    $region209: #{_lambda_.1} parent=1 // pred_fallthru
      _
    // Predicated region
    $region210: #{_lambda_.1} parent=1 // pred_check
      _
    $region211: #{_lambda_.1} parent=1 // pred_check_branch
      %560 = sbr.rel (0) target = $region213
    $region212: #{_lambda_.1} parent=1 // pred_region
      %562 = dma.done [#allocation20], 512
    $region213: #{_lambda_.1} parent=1 // pred_fallthru
      _
    // Predicated region
    $region214: #{_lambda_.1} parent=1 // pred_check
      _
    $region215: #{_lambda_.1} parent=1 // pred_check_branch
      %564 = sbr.rel (0) target = $region217
    $region216: #{_lambda_.1} parent=1 // pred_region
      %566 = dma.done [#allocation20], 16
    $region217: #{_lambda_.1} parent=1 // pred_fallthru
      _
    // Predicated region
    $region218: #{_lambda_.1} parent=1 // pred_check
      _
    $region219: #{_lambda_.1} parent=1 // pred_check_branch
      %568 = sbr.rel (0) target = $region221
    $region220: #{_lambda_.1} parent=1 // pred_region
      %570 = dma.done [#allocation23], 16
    $region221: #{_lambda_.1} parent=1 // pred_fallthru
      _
    // Predicated region
    $region222: #{_lambda_.1} parent=1 // pred_check
      _
    $region223: #{_lambda_.1} parent=1 // pred_check_branch
      %572 = sbr.rel (0) target = $region225
    $region224: #{_lambda_.1} parent=1 // pred_region
      %574 = dma.done [#allocation23], 16
    $region225: #{_lambda_.1} parent=1 // pred_fallthru
      _
    // Predicated region
    $region226: #{_lambda_.1} parent=1 // pred_check
      _
    $region227: #{_lambda_.1} parent=1 // pred_check_branch
      %576 = sbr.rel (0) target = $region229
    $region228: #{_lambda_.1} parent=1 // pred_region
      %578 = dma.done [#allocation26], 512
    $region229: #{_lambda_.1} parent=1 // pred_fallthru
      _
    // Predicated region
    $region230: #{_lambda_.1} parent=1 // pred_check
      _
    $region231: #{_lambda_.1} parent=1 // pred_check_branch
      %580 = sbr.rel (0) target = $region233
    $region232: #{_lambda_.1} parent=1 // pred_region
      %582 = dma.done [#allocation26], 16
    $region233: #{_lambda_.1} parent=1 // pred_fallthru
      _
    // Predicated region
    $region234: #{_lambda_.1} parent=1 // pred_check
      _
    $region235: #{_lambda_.1} parent=1 // pred_check_branch
      %584 = sbr.rel (0) target = $region237
    $region236: #{_lambda_.1} parent=1 // pred_region
      %586 = dma.done [#allocation29], 512
    $region237: #{_lambda_.1} parent=1 // pred_fallthru
      _
    // Predicated region
    $region238: #{_lambda_.1} parent=1 // pred_check
      _
    $region239: #{_lambda_.1} parent=1 // pred_check_branch
      %588 = sbr.rel (0) target = $region241
    $region240: #{_lambda_.1} parent=1 // pred_region
      %590 = dma.done [#allocation29], 16
    $region241: #{_lambda_.1} parent=1 // pred_fallthru
      _
    // Predicated region
    $region242: #{_lambda_.1} parent=1 // pred_check
      _
    $region243: #{_lambda_.1} parent=1 // pred_check_branch
      %592 = sbr.rel (0) target = $region245
    $region244: #{_lambda_.1} parent=1 // pred_region
      %594 = dma.done [#allocation32], 16
    $region245: #{_lambda_.1} parent=1 // pred_fallthru
      _
    // Predicated region
    $region246: #{_lambda_.1} parent=1 // pred_check
      _
    $region247: #{_lambda_.1} parent=1 // pred_check_branch
      %596 = sbr.rel (0) target = $region249
    $region248: #{_lambda_.1} parent=1 // pred_region
      %598 = dma.done [#allocation32], 16
    $region249: #{_lambda_.1} parent=1 // pred_fallthru
      _
    // Predicated region
    $region250: #{_lambda_.1} parent=1 // pred_check
      _
    $region251: #{_lambda_.1} parent=1 // pred_check_branch
      %600 = sbr.rel (0) target = $region253
    $region252: #{_lambda_.1} parent=1 // pred_region
      %602 = dma.done [#allocation35], 512
    $region253: #{_lambda_.1} parent=1 // pred_fallthru
      _
    // Predicated region
    $region254: #{_lambda_.1} parent=1 // pred_check
      _
    $region255: #{_lambda_.1} parent=1 // pred_check_branch
      %604 = sbr.rel (0) target = $region257
    $region256: #{_lambda_.1} parent=1 // pred_region
      %606 = dma.done [#allocation35], 16
    $region257: #{_lambda_.1} parent=1 // pred_fallthru
      _
    // Predicated region
    $region258: #{_lambda_.1} parent=1 // pred_check
      _
    $region259: #{_lambda_.1} parent=1 // pred_check_branch
      %608 = sbr.rel (0) target = $region261
    $region260: #{_lambda_.1} parent=1 // pred_region
      %610 = dma.done [#allocation38], 512
    $region261: #{_lambda_.1} parent=1 // pred_fallthru
      _
    // Predicated region
    $region262: #{_lambda_.1} parent=1 // pred_check
      _
    $region263: #{_lambda_.1} parent=1 // pred_check_branch
      %612 = sbr.rel (0) target = $region265
    $region264: #{_lambda_.1} parent=1 // pred_region
      %614 = dma.done [#allocation38], 16
    $region265: #{_lambda_.1} parent=1 // pred_fallthru
      _
    // Predicated region
    $region266: #{_lambda_.1} parent=1 // pred_check
      _
    $region267: #{_lambda_.1} parent=1 // pred_check_branch
      %616 = sbr.rel (0) target = $region269
    $region268: #{_lambda_.1} parent=1 // pred_region
      %618 = dma.done [#allocation41], 512
    $region269: #{_lambda_.1} parent=1 // pred_fallthru
      _
    // Predicated region
    $region270: #{_lambda_.1} parent=1 // pred_check
      _
    $region271: #{_lambda_.1} parent=1 // pred_check_branch
      %620 = sbr.rel (0) target = $region273
    $region272: #{_lambda_.1} parent=1 // pred_region
      %622 = dma.done [#allocation41], 16
    $region273: #{_lambda_.1} parent=1 // pred_fallthru
      _
    // Predicated region
    $region274: #{_lambda_.1} parent=1 // pred_check
      _
    $region275: #{_lambda_.1} parent=1 // pred_check_branch
      %624 = sbr.rel (0) target = $region277
    $region276: #{_lambda_.1} parent=1 // pred_region
      %626 = dma.done [#allocation44], 512
    $region277: #{_lambda_.1} parent=1 // pred_fallthru
      _
    // Predicated region
    $region278: #{_lambda_.1} parent=1 // pred_check
      _
    $region279: #{_lambda_.1} parent=1 // pred_check_branch
      %628 = sbr.rel (0) target = $region281
    $region280: #{_lambda_.1} parent=1 // pred_region
      %630 = dma.done [#allocation44], 16
    $region281: #{_lambda_.1} parent=1 // pred_fallthru
      _
    // Predicated region
    $region282: #{_lambda_.1} parent=1 // pred_check
      _
    $region283: #{_lambda_.1} parent=1 // pred_check_branch
      %632 = sbr.rel (0) target = $region285
    $region284: #{_lambda_.1} parent=1 // pred_region
      %634 = dma.done [#allocation47], 16
    $region285: #{_lambda_.1} parent=1 // pred_fallthru
      _
    // Predicated region
    $region286: #{_lambda_.1} parent=1 // pred_check
      _
    $region287: #{_lambda_.1} parent=1 // pred_check_branch
      %636 = sbr.rel (0) target = $region289
    $region288: #{_lambda_.1} parent=1 // pred_region
      %638 = dma.done [#allocation47], 16
    $region289: #{_lambda_.1} parent=1 // pred_fallthru
      _
    // Predicated region
    $region290: #{_lambda_.1} parent=1 // pred_check
      _
    $region291: #{_lambda_.1} parent=1 // pred_check_branch
      %640 = sbr.rel (0) target = $region293
    $region292: #{_lambda_.1} parent=1 // pred_region
      %642 = dma.done [#allocation50], 512
    $region293: #{_lambda_.1} parent=1 // pred_fallthru
      _
    // Predicated region
    $region294: #{_lambda_.1} parent=1 // pred_check
      _
    $region295: #{_lambda_.1} parent=1 // pred_check_branch
      %644 = sbr.rel (0) target = $region297
    $region296: #{_lambda_.1} parent=1 // pred_region
      %646 = dma.done [#allocation50], 16
    $region297: #{_lambda_.1} parent=1 // pred_fallthru
      _
    // Predicated region
    $region298: #{_lambda_.1} parent=1 // pred_check
      _
    $region299: #{_lambda_.1} parent=1 // pred_check_branch
      %648 = sbr.rel (0) target = $region301
    $region300: #{_lambda_.1} parent=1 // pred_region
      %650 = dma.done [#allocation53], 16
    $region301: #{_lambda_.1} parent=1 // pred_fallthru
      _
    %v651 = vld [vmem:[%s1] sm:$0xff]
    %v652 = vld [vmem:[%s1 + $0x8] sm:$0xff]
    %v653 = vld [vmem:[#allocation2] sm:$0x3f]
    %v654 = vld [vmem:[#allocation4] sm:$0x1]
    %v656 = vperm.slane %v654, 0
    %vm658 = vcmask 48128
    %v660 = vsel %vm658, %v651, 0
    %v663 = vsel %vm658, %v652, 0
    %vm665 = vcmask 1045504
    %v667 = vsel %vm665, %v653, 0
    %669 = vmatpush.msra.mxu0 0.0
    %670 = vmatpush.msra.mxu0 0.0
    %671 = vmatpush.msra.mxu0 0.0
    %672 = vmatpush.msra.mxu0 0.0
    %673 = vmatpush.msra.mxu0 0.0
    %674 = vmatpush.msra.mxu0 0.0
    %675 = vmatpush.msra.mxu0 0.0
    %676 = vmatpush.msra.mxu0 0.0
    %677 = vmatpush.msra.mxu0 0.0
    %678 = vmatpush.msra.mxu0 0.0
    %679 = vmatpush.msra.mxu0 0.0
    %680 = vmatpush.msra.mxu0 0.0
    %681 = vmatpush.msra.mxu0 0.0
    %682 = vmatpush.msra.mxu0 0.0
    %683 = vmatpush.msra.mxu0 0.0
    %684 = vmatpush.msra.mxu0 %v667
    %685 = vmatmul.f32.gmra.mxu0 %v660
    %v686 = vpop.f32.mrf.mxu0
    %v687 = vadd.f32 %v656, %v686
    %688 = vmatmul.f32.gmra.mxu0 %v663
    %v689 = vpop.f32.mrf.mxu0
    %v690 = vadd.f32 %v656, %v689
    %691 = vdwg.mxu0
    %v692 = vmax.f32 %v687, 0.0
    %v693 = vmax.f32 %v690, 0.0
    %v694 = vld [vmem:[%s7] sm:$0xff]
    %v695 = vld [vmem:[%s7 + $0x8] sm:$0xff]
    %v696 = vld [vmem:[%s7 + $0x10] sm:$0xff]
    %v697 = vld [vmem:[%s7 + $0x18] sm:$0xff]
    %v698 = vld [vmem:[#allocation6] sm:$0x1]
    %v700 = vperm.slane %v698, 0
    %vm702 = vcmask 261120
    %v704 = vsel %vm702, %v692, 0
    %v707 = vsel %vm702, %v693, 0
    %709 = vmatpush.msra.mxu0 0.0
    %710 = vmatpush.msra.mxu0 0.0
    %711 = vmatpush.msra.mxu0 0.0
    %712 = vmatpush.msra.mxu0 0.0
    %713 = vmatpush.msra.mxu0 0.0
    %714 = vmatpush.msra.mxu0 0.0
    %715 = vmatpush.msra.mxu0 0.0
    %716 = vmatpush.msra.mxu0 0.0
    %717 = vmatpush.msra.mxu0 0.0
    %718 = vmatpush.msra.mxu0 0.0
    %719 = vmatpush.msra.mxu0 0.0
    %720 = vmatpush.msra.mxu0 0.0
    %721 = vmatpush.msra.mxu0 %v697
    %722 = vmatpush.msra.mxu0 %v696
    %723 = vmatpush.msra.mxu0 %v695
    %724 = vmatpush.msra.mxu0 %v694
    %725 = vmatmul.f32.gmra.mxu0 %v704
    %v726 = vpop.f32.mrf.mxu0
    %v727 = vadd.f32 %v700, %v726
    %728 = vmatmul.f32.gmra.mxu0 %v707
    %v729 = vpop.f32.mrf.mxu0
    %v730 = vadd.f32 %v700, %v729
    %731 = vdwg.mxu0
    %v732 = vmax.f32 %v727, 0.0
    %v733 = vmax.f32 %v730, 0.0
    %v734 = vsel %vm702, %v732, 0.0
    %735 = vadd.xlane.f32.xlu0 %v734
    %v736 = vpop.xlane.xlu0 %735
    %v737 = vsel %vm702, %v733, 0.0
    %738 = vadd.xlane.f32.xlu0 %v737
    %v739 = vpop.xlane.xlu0 %738
    %v740 = vrcp.pop 32.0
    %v741 = vmul.f32 32.0, %v740
    %v742 = vsub.f32 1.0, %v741
    %v743 = vmul.f32 %v740, %v742
    %v744 = vadd.f32 %v740, %v743
    %vm745 = vweird.f32 %v740
    %v746 = vsel %vm745, %v740, %v744
    %v747 = vmul.f32 %v736, %v746
    %v748 = vmul.f32 %v739, %v746
    %v749 = vsub.f32 %v732, %v747
    %v750 = vsub.f32 %v733, %v748
    %v751 = vmul.f32 %v749, %v749
    %v752 = vmul.f32 %v750, %v750
    %v753 = vsel %vm702, %v751, 0.0
    %754 = vadd.xlane.f32.xlu0 %v753
    %v755 = vpop.xlane.xlu0 %754
    %v756 = vsel %vm702, %v752, 0.0
    %757 = vadd.xlane.f32.xlu0 %v756
    %v758 = vpop.xlane.xlu0 %757
    %v759 = vmul.f32 %v755, %v746
    %v760 = vmul.f32 %v758, %v746
    %v761 = vadd.f32 %v759, 1e-05
    %v762 = vadd.f32 %v760, 1e-05
    %v763 = vrsqrt.pop %v761
    %v764 = vmul.f32 %v763, %v761
    %v765 = vmul.f32 %v764, %v763
    %v766 = vmul.f32 0.5, %v765
    %v767 = vsub.f32 1.5, %v766
    %v768 = vmul.f32 %v763, %v767
    %vm769 = vweird.f32 %v761
    %vm770 = vweird.f32 %v763
    %vm771 = vmor %vm769, %vm770
    %v772 = vsel %vm771, %v763, %v768
    %v773 = vrsqrt.pop %v762
    %v774 = vmul.f32 %v773, %v762
    %v775 = vmul.f32 %v774, %v773
    %v776 = vmul.f32 0.5, %v775
    %v777 = vsub.f32 1.5, %v776
    %v778 = vmul.f32 %v773, %v777
    %vm779 = vweird.f32 %v762
    %vm780 = vweird.f32 %v773
    %vm781 = vmor %vm779, %vm780
    %v782 = vsel %vm781, %v773, %v778
    %v783 = vmul.f32 %v749, %v772
    %v784 = vmul.f32 %v750, %v782
    %v785 = vld [vmem:[#allocation7] sm:$0x1]
    %v787 = vperm.slane %v785, 0
    %v789 = vmul.f32 %v783, %v787
    %v790 = vmul.f32 %v784, %v787
    %v791 = vld [vmem:[#allocation9] sm:$0x1]
    %v793 = vperm.slane %v791, 0
    %v795 = vadd.f32 %v789, %v793
    %v796 = vadd.f32 %v790, %v793
    %v797 = vld [vmem:[%s15] sm:$0xff]
    %v798 = vld [vmem:[%s15 + $0x8] sm:$0xff]
    %v799 = vld [vmem:[%s15 + $0x10] sm:$0xff]
    %v800 = vld [vmem:[%s15 + $0x18] sm:$0xff]
    %v801 = vld [vmem:[#allocation10] sm:$0x1]
    %v803 = vperm.slane %v801, 0
    %v806 = vsel %vm702, %v795, 0
    %v809 = vsel %vm702, %v796, 0
    %811 = vmatpush.msra.mxu0 0.0
    %812 = vmatpush.msra.mxu0 0.0
    %813 = vmatpush.msra.mxu0 0.0
    %814 = vmatpush.msra.mxu0 0.0
    %815 = vmatpush.msra.mxu0 0.0
    %816 = vmatpush.msra.mxu0 0.0
    %817 = vmatpush.msra.mxu0 0.0
    %818 = vmatpush.msra.mxu0 0.0
    %819 = vmatpush.msra.mxu0 0.0
    %820 = vmatpush.msra.mxu0 0.0
    %821 = vmatpush.msra.mxu0 0.0
    %822 = vmatpush.msra.mxu0 0.0
    %823 = vmatpush.msra.mxu0 %v800
    %824 = vmatpush.msra.mxu0 %v799
    %825 = vmatpush.msra.mxu0 %v798
    %826 = vmatpush.msra.mxu0 %v797
    %827 = vmatmul.f32.gmra.mxu0 %v806
    %v828 = vpop.f32.mrf.mxu0
    %v829 = vadd.f32 %v803, %v828
    %830 = vmatmul.f32.gmra.mxu0 %v809
    %v831 = vpop.f32.mrf.mxu0
    %v832 = vadd.f32 %v803, %v831
    %833 = vdwg.mxu0
    %v834 = vld [vmem:[%s19] sm:$0xff]
    %v835 = vld [vmem:[%s19 + $0x8] sm:$0xff]
    %v836 = vld [vmem:[%s19 + $0x10] sm:$0xff]
    %v837 = vld [vmem:[%s19 + $0x18] sm:$0xff]
    %840 = vrot.lane.b32.xlu0 %v829, 96
    %v841 = vpop.permute.xlu0 %840
    %842 = vrot.lane.b32.xlu0 %v832, 96
    %v843 = vpop.permute.xlu0 %842
    %vm844 = vcmask 64512
    %v845 = vsel %vm844, %v829, 0
    %v847 = vsel %vm844, %v832, 0
    %v849 = vsel %vm844, %v841, 0
    %v851 = vsel %vm844, %v843, 0
    %853 = vmatpush.xpose.msra.mxu0 0.0
    %854 = vmatpush.xpose.msra.mxu0 0.0
    %855 = vmatpush.xpose.msra.mxu0 0.0
    %856 = vmatpush.xpose.msra.mxu0 0.0
    %857 = vmatpush.xpose.msra.mxu0 0.0
    %858 = vmatpush.xpose.msra.mxu0 0.0
    %859 = vmatpush.xpose.msra.mxu0 0.0
    %860 = vmatpush.xpose.msra.mxu0 0.0
    %861 = vmatpush.xpose.msra.mxu0 0.0
    %862 = vmatpush.xpose.msra.mxu0 0.0
    %863 = vmatpush.xpose.msra.mxu0 0.0
    %864 = vmatpush.xpose.msra.mxu0 0.0
    %865 = vmatpush.xpose.msra.mxu0 0.0
    %866 = vmatpush.xpose.msra.mxu0 0.0
    %867 = vmatpush.xpose.msra.mxu0 %v851
    %868 = vmatpush.xpose.msra.mxu0 %v849
    %869 = vmatmul.f32.gmra.mxu0 %v845
    %v870 = vpop.f32.mrf.mxu0
    %v871 = vadd.f32 0.0, %v870
    %872 = vmatmul.f32.gmra.mxu0 %v847
    %v873 = vpop.f32.mrf.mxu0
    %v874 = vadd.f32 0.0, %v873
    %875 = vdwg.mxu0
    %v876 = vmul.f32 %v871, 0.35355338
    %v877 = vmul.f32 %v874, 0.35355338
    %vm878 = vcmask 130048
    %v879 = vsel %vm878, %v876, -inf
    %880 = vmax.xlane.f32.xlu0 %v879
    %v881 = vpop.xlane.xlu0 %880
    %v882 = vsel %vm878, %v877, -inf
    %883 = vmax.xlane.f32.xlu0 %v882
    %v884 = vpop.xlane.xlu0 %883
    %v885 = vsub.f32 %v876, %v881
    %v886 = vsub.f32 %v877, %v884
    %v887 = vmul.f32 %v885, 1.442695
    %v888 = vpow.pop %v887
    %v889 = vmul.f32 %v886, 1.442695
    %v890 = vpow.pop %v889
    %v891 = vsel %vm878, %v888, 0.0
    %892 = vadd.xlane.f32.xlu0 %v891
    %v893 = vpop.xlane.xlu0 %892
    %v894 = vsel %vm878, %v890, 0.0
    %895 = vadd.xlane.f32.xlu0 %v894
    %v896 = vpop.xlane.xlu0 %895
    %v897 = vrcp.pop %v893
    %v898 = vrcp.pop %v896
    %v899 = vmul.f32 %v888, %v897
    %v900 = vmul.f32 %v890, %v898
    %901 = vrot.lane.b32.xlu0 %v829, 64
    %v902 = vpop.permute.xlu0 %901
    %903 = vrot.lane.b32.xlu0 %v832, 64
    %v904 = vpop.permute.xlu0 %903
    %v908 = vsel %vm878, %v899, 0
    %v911 = vsel %vm878, %v900, 0
    %913 = vmatpush.msra.mxu0 0.0
    %914 = vmatpush.msra.mxu0 0.0
    %915 = vmatpush.msra.mxu0 0.0
    %916 = vmatpush.msra.mxu0 0.0
    %917 = vmatpush.msra.mxu0 0.0
    %918 = vmatpush.msra.mxu0 0.0
    %919 = vmatpush.msra.mxu0 0.0
    %920 = vmatpush.msra.mxu0 0.0
    %921 = vmatpush.msra.mxu0 0.0
    %922 = vmatpush.msra.mxu0 0.0
    %923 = vmatpush.msra.mxu0 0.0
    %924 = vmatpush.msra.mxu0 0.0
    %925 = vmatpush.msra.mxu0 0.0
    %926 = vmatpush.msra.mxu0 0.0
    %927 = vmatpush.msra.mxu0 %v904
    %928 = vmatpush.msra.mxu0 %v902
    %929 = vmatmul.f32.gmra.mxu0 %v908
    %v930 = vpop.f32.mrf.mxu0
    %v931 = vadd.f32 0.0, %v930
    %932 = vmatmul.f32.gmra.mxu0 %v911
    %v933 = vpop.f32.mrf.mxu0
    %v934 = vadd.f32 0.0, %v933
    %935 = vdwg.mxu0
    %936 = vrot.lane.b32.xlu0 %v829, 120
    %v937 = vpop.permute.xlu0 %936
    %938 = vrot.lane.b32.xlu0 %v832, 120
    %v939 = vpop.permute.xlu0 %938
    %940 = vrot.lane.b32.xlu0 %v829, 88
    %v941 = vpop.permute.xlu0 %940
    %942 = vrot.lane.b32.xlu0 %v832, 88
    %v943 = vpop.permute.xlu0 %942
    %v944 = vsel %vm844, %v937, 0
    %v946 = vsel %vm844, %v939, 0
    %v948 = vsel %vm844, %v941, 0
    %v950 = vsel %vm844, %v943, 0
    %952 = vmatpush.xpose.msra.mxu0 0.0
    %953 = vmatpush.xpose.msra.mxu0 0.0
    %954 = vmatpush.xpose.msra.mxu0 0.0
    %955 = vmatpush.xpose.msra.mxu0 0.0
    %956 = vmatpush.xpose.msra.mxu0 0.0
    %957 = vmatpush.xpose.msra.mxu0 0.0
    %958 = vmatpush.xpose.msra.mxu0 0.0
    %959 = vmatpush.xpose.msra.mxu0 0.0
    %960 = vmatpush.xpose.msra.mxu0 0.0
    %961 = vmatpush.xpose.msra.mxu0 0.0
    %962 = vmatpush.xpose.msra.mxu0 0.0
    %963 = vmatpush.xpose.msra.mxu0 0.0
    %964 = vmatpush.xpose.msra.mxu0 0.0
    %965 = vmatpush.xpose.msra.mxu0 0.0
    %966 = vmatpush.xpose.msra.mxu0 %v950
    %967 = vmatpush.xpose.msra.mxu0 %v948
    %968 = vmatmul.f32.gmra.mxu0 %v944
    %v969 = vpop.f32.mrf.mxu0
    %v970 = vadd.f32 0.0, %v969
    %971 = vmatmul.f32.gmra.mxu0 %v946
    %v972 = vpop.f32.mrf.mxu0
    %v973 = vadd.f32 0.0, %v972
    %974 = vdwg.mxu0
    %v975 = vmul.f32 %v970, 0.35355338
    %v976 = vmul.f32 %v973, 0.35355338
    %v977 = vsel %vm878, %v975, -inf
    %978 = vmax.xlane.f32.xlu0 %v977
    %v979 = vpop.xlane.xlu0 %978
    %v980 = vsel %vm878, %v976, -inf
    %981 = vmax.xlane.f32.xlu0 %v980
    %v982 = vpop.xlane.xlu0 %981
    %v983 = vsub.f32 %v975, %v979
    %v984 = vsub.f32 %v976, %v982
    %v985 = vmul.f32 %v983, 1.442695
    %v986 = vpow.pop %v985
    %v987 = vmul.f32 %v984, 1.442695
    %v988 = vpow.pop %v987
    %v989 = vsel %vm878, %v986, 0.0
    %990 = vadd.xlane.f32.xlu0 %v989
    %v991 = vpop.xlane.xlu0 %990
    %v992 = vsel %vm878, %v988, 0.0
    %993 = vadd.xlane.f32.xlu0 %v992
    %v994 = vpop.xlane.xlu0 %993
    %v995 = vrcp.pop %v991
    %v996 = vrcp.pop %v994
    %v997 = vmul.f32 %v986, %v995
    %v998 = vmul.f32 %v988, %v996
    %999 = vrot.lane.b32.xlu0 %v829, 56
    %v1000 = vpop.permute.xlu0 %999
    %1001 = vrot.lane.b32.xlu0 %v832, 56
    %v1002 = vpop.permute.xlu0 %1001
    %v1006 = vsel %vm878, %v997, 0
    %v1009 = vsel %vm878, %v998, 0
    %1011 = vmatpush.msra.mxu0 0.0
    %1012 = vmatpush.msra.mxu0 0.0
    %1013 = vmatpush.msra.mxu0 0.0
    %1014 = vmatpush.msra.mxu0 0.0
    %1015 = vmatpush.msra.mxu0 0.0
    %1016 = vmatpush.msra.mxu0 0.0
    %1017 = vmatpush.msra.mxu0 0.0
    %1018 = vmatpush.msra.mxu0 0.0
    %1019 = vmatpush.msra.mxu0 0.0
    %1020 = vmatpush.msra.mxu0 0.0
    %1021 = vmatpush.msra.mxu0 0.0
    %1022 = vmatpush.msra.mxu0 0.0
    %1023 = vmatpush.msra.mxu0 0.0
    %1024 = vmatpush.msra.mxu0 0.0
    %1025 = vmatpush.msra.mxu0 %v1002
    %1026 = vmatpush.msra.mxu0 %v1000
    %1027 = vmatmul.f32.gmra.mxu0 %v1006
    %v1028 = vpop.f32.mrf.mxu0
    %v1029 = vadd.f32 0.0, %v1028
    %1030 = vmatmul.f32.gmra.mxu0 %v1009
    %v1031 = vpop.f32.mrf.mxu0
    %v1032 = vadd.f32 0.0, %v1031
    %1033 = vdwg.mxu0
    %v1035 = vsel %vm844, %v1029, 0
    %v1038 = vsel %vm844, %v1032, 0
    %1040 = vmatpush.msra.mxu0 0.0
    %1041 = vmatpush.msra.mxu0 0.0
    %1042 = vmatpush.msra.mxu0 0.0
    %1043 = vmatpush.msra.mxu0 0.0
    %1044 = vmatpush.msra.mxu0 0.0
    %1045 = vmatpush.msra.mxu0 0.0
    %1046 = vmatpush.msra.mxu0 0.0
    %1047 = vmatpush.msra.mxu0 0.0
    %1048 = vmatpush.msra.mxu0 0.0
    %1049 = vmatpush.msra.mxu0 0.0
    %1050 = vmatpush.msra.mxu0 0.0
    %1051 = vmatpush.msra.mxu0 0.0
    %1052 = vmatpush.msra.mxu0 0.0
    %1053 = vmatpush.msra.mxu0 0.0
    %1054 = vmatpush.msra.mxu0 0.0
    %1055 = vmatpush.msra.mxu0 %v835
    %1056 = vmatmul.f32.gmra.mxu0 %v1035
    %v1057 = vpop.f32.mrf.mxu0
    %v1058 = vadd.f32 0.0, %v1057
    %1059 = vmatmul.f32.gmra.mxu0 %v1038
    %v1060 = vpop.f32.mrf.mxu0
    %v1061 = vadd.f32 0.0, %v1060
    %1062 = vdwg.mxu0
    %v1064 = vsel %vm844, %v931, 0
    %v1067 = vsel %vm844, %v934, 0
    %1069 = vmatpush.msra.mxu0 0.0
    %1070 = vmatpush.msra.mxu0 0.0
    %1071 = vmatpush.msra.mxu0 0.0
    %1072 = vmatpush.msra.mxu0 0.0
    %1073 = vmatpush.msra.mxu0 0.0
    %1074 = vmatpush.msra.mxu0 0.0
    %1075 = vmatpush.msra.mxu0 0.0
    %1076 = vmatpush.msra.mxu0 0.0
    %1077 = vmatpush.msra.mxu0 0.0
    %1078 = vmatpush.msra.mxu0 0.0
    %1079 = vmatpush.msra.mxu0 0.0
    %1080 = vmatpush.msra.mxu0 0.0
    %1081 = vmatpush.msra.mxu0 0.0
    %1082 = vmatpush.msra.mxu0 0.0
    %1083 = vmatpush.msra.mxu0 0.0
    %1084 = vmatpush.msra.mxu0 %v834
    %1085 = vmatmul.f32.gmra.mxu0 %v1064
    %v1086 = vpop.f32.mrf.mxu0
    %v1087 = vadd.f32 %v1058, %v1086
    %1088 = vmatmul.f32.gmra.mxu0 %v1067
    %v1089 = vpop.f32.mrf.mxu0
    %v1090 = vadd.f32 %v1061, %v1089
    %1091 = vdwg.mxu0
    %1092 = vrot.lane.b32.xlu0 %v829, 112
    %v1093 = vpop.permute.xlu0 %1092
    %1094 = vrot.lane.b32.xlu0 %v832, 112
    %v1095 = vpop.permute.xlu0 %1094
    %1096 = vrot.lane.b32.xlu0 %v829, 80
    %v1097 = vpop.permute.xlu0 %1096
    %1098 = vrot.lane.b32.xlu0 %v832, 80
    %v1099 = vpop.permute.xlu0 %1098
    %v1100 = vsel %vm844, %v1093, 0
    %v1102 = vsel %vm844, %v1095, 0
    %v1104 = vsel %vm844, %v1097, 0
    %v1106 = vsel %vm844, %v1099, 0
    %1108 = vmatpush.xpose.msra.mxu0 0.0
    %1109 = vmatpush.xpose.msra.mxu0 0.0
    %1110 = vmatpush.xpose.msra.mxu0 0.0
    %1111 = vmatpush.xpose.msra.mxu0 0.0
    %1112 = vmatpush.xpose.msra.mxu0 0.0
    %1113 = vmatpush.xpose.msra.mxu0 0.0
    %1114 = vmatpush.xpose.msra.mxu0 0.0
    %1115 = vmatpush.xpose.msra.mxu0 0.0
    %1116 = vmatpush.xpose.msra.mxu0 0.0
    %1117 = vmatpush.xpose.msra.mxu0 0.0
    %1118 = vmatpush.xpose.msra.mxu0 0.0
    %1119 = vmatpush.xpose.msra.mxu0 0.0
    %1120 = vmatpush.xpose.msra.mxu0 0.0
    %1121 = vmatpush.xpose.msra.mxu0 0.0
    %1122 = vmatpush.xpose.msra.mxu0 %v1106
    %1123 = vmatpush.xpose.msra.mxu0 %v1104
    %1124 = vmatmul.f32.gmra.mxu0 %v1100
    %v1125 = vpop.f32.mrf.mxu0
    %v1126 = vadd.f32 0.0, %v1125
    %1127 = vmatmul.f32.gmra.mxu0 %v1102
    %v1128 = vpop.f32.mrf.mxu0
    %v1129 = vadd.f32 0.0, %v1128
    %1130 = vdwg.mxu0
    %v1131 = vmul.f32 %v1126, 0.35355338
    %v1132 = vmul.f32 %v1129, 0.35355338
    %v1133 = vsel %vm878, %v1131, -inf
    %1134 = vmax.xlane.f32.xlu0 %v1133
    %v1135 = vpop.xlane.xlu0 %1134
    %v1136 = vsel %vm878, %v1132, -inf
    %1137 = vmax.xlane.f32.xlu0 %v1136
    %v1138 = vpop.xlane.xlu0 %1137
    %v1139 = vsub.f32 %v1131, %v1135
    %v1140 = vsub.f32 %v1132, %v1138
    %v1141 = vmul.f32 %v1139, 1.442695
    %v1142 = vpow.pop %v1141
    %v1143 = vmul.f32 %v1140, 1.442695
    %v1144 = vpow.pop %v1143
    %v1145 = vsel %vm878, %v1142, 0.0
    %1146 = vadd.xlane.f32.xlu0 %v1145
    %v1147 = vpop.xlane.xlu0 %1146
    %v1148 = vsel %vm878, %v1144, 0.0
    %1149 = vadd.xlane.f32.xlu0 %v1148
    %v1150 = vpop.xlane.xlu0 %1149
    %v1151 = vrcp.pop %v1147
    %v1152 = vrcp.pop %v1150
    %v1153 = vmul.f32 %v1142, %v1151
    %v1154 = vmul.f32 %v1144, %v1152
    %1155 = vrot.lane.b32.xlu0 %v829, 48
    %v1156 = vpop.permute.xlu0 %1155
    %1157 = vrot.lane.b32.xlu0 %v832, 48
    %v1158 = vpop.permute.xlu0 %1157
    %v1162 = vsel %vm878, %v1153, 0
    %v1165 = vsel %vm878, %v1154, 0
    %1167 = vmatpush.msra.mxu0 0.0
    %1168 = vmatpush.msra.mxu0 0.0
    %1169 = vmatpush.msra.mxu0 0.0
    %1170 = vmatpush.msra.mxu0 0.0
    %1171 = vmatpush.msra.mxu0 0.0
    %1172 = vmatpush.msra.mxu0 0.0
    %1173 = vmatpush.msra.mxu0 0.0
    %1174 = vmatpush.msra.mxu0 0.0
    %1175 = vmatpush.msra.mxu0 0.0
    %1176 = vmatpush.msra.mxu0 0.0
    %1177 = vmatpush.msra.mxu0 0.0
    %1178 = vmatpush.msra.mxu0 0.0
    %1179 = vmatpush.msra.mxu0 0.0
    %1180 = vmatpush.msra.mxu0 0.0
    %1181 = vmatpush.msra.mxu0 %v1158
    %1182 = vmatpush.msra.mxu0 %v1156
    %1183 = vmatmul.f32.gmra.mxu0 %v1162
    %v1184 = vpop.f32.mrf.mxu0
    %v1185 = vadd.f32 0.0, %v1184
    %1186 = vmatmul.f32.gmra.mxu0 %v1165
    %v1187 = vpop.f32.mrf.mxu0
    %v1188 = vadd.f32 0.0, %v1187
    %1189 = vdwg.mxu0
    %v1191 = vsel %vm844, %v1185, 0
    %v1194 = vsel %vm844, %v1188, 0
    %1196 = vmatpush.msra.mxu0 0.0
    %1197 = vmatpush.msra.mxu0 0.0
    %1198 = vmatpush.msra.mxu0 0.0
    %1199 = vmatpush.msra.mxu0 0.0
    %1200 = vmatpush.msra.mxu0 0.0
    %1201 = vmatpush.msra.mxu0 0.0
    %1202 = vmatpush.msra.mxu0 0.0
    %1203 = vmatpush.msra.mxu0 0.0
    %1204 = vmatpush.msra.mxu0 0.0
    %1205 = vmatpush.msra.mxu0 0.0
    %1206 = vmatpush.msra.mxu0 0.0
    %1207 = vmatpush.msra.mxu0 0.0
    %1208 = vmatpush.msra.mxu0 0.0
    %1209 = vmatpush.msra.mxu0 0.0
    %1210 = vmatpush.msra.mxu0 0.0
    %1211 = vmatpush.msra.mxu0 %v836
    %1212 = vmatmul.f32.gmra.mxu0 %v1191
    %v1213 = vpop.f32.mrf.mxu0
    %v1214 = vadd.f32 0.0, %v1213
    %1215 = vmatmul.f32.gmra.mxu0 %v1194
    %v1216 = vpop.f32.mrf.mxu0
    %v1217 = vadd.f32 0.0, %v1216
    %1218 = vdwg.mxu0
    %v1219 = vadd.f32 %v1087, %v1214
    %v1220 = vadd.f32 %v1090, %v1217
    %1221 = vrot.lane.b32.xlu0 %v829, 104
    %v1222 = vpop.permute.xlu0 %1221
    %1223 = vrot.lane.b32.xlu0 %v832, 104
    %v1224 = vpop.permute.xlu0 %1223
    %1225 = vrot.lane.b32.xlu0 %v829, 72
    %v1226 = vpop.permute.xlu0 %1225
    %1227 = vrot.lane.b32.xlu0 %v832, 72
    %v1228 = vpop.permute.xlu0 %1227
    %v1229 = vsel %vm844, %v1222, 0
    %v1231 = vsel %vm844, %v1224, 0
    %v1233 = vsel %vm844, %v1226, 0
    %v1235 = vsel %vm844, %v1228, 0
    %1237 = vmatpush.xpose.msra.mxu0 0.0
    %1238 = vmatpush.xpose.msra.mxu0 0.0
    %1239 = vmatpush.xpose.msra.mxu0 0.0
    %1240 = vmatpush.xpose.msra.mxu0 0.0
    %1241 = vmatpush.xpose.msra.mxu0 0.0
    %1242 = vmatpush.xpose.msra.mxu0 0.0
    %1243 = vmatpush.xpose.msra.mxu0 0.0
    %1244 = vmatpush.xpose.msra.mxu0 0.0
    %1245 = vmatpush.xpose.msra.mxu0 0.0
    %1246 = vmatpush.xpose.msra.mxu0 0.0
    %1247 = vmatpush.xpose.msra.mxu0 0.0
    %1248 = vmatpush.xpose.msra.mxu0 0.0
    %1249 = vmatpush.xpose.msra.mxu0 0.0
    %1250 = vmatpush.xpose.msra.mxu0 0.0
    %1251 = vmatpush.xpose.msra.mxu0 %v1235
    %1252 = vmatpush.xpose.msra.mxu0 %v1233
    %1253 = vmatmul.f32.gmra.mxu0 %v1229
    %v1254 = vpop.f32.mrf.mxu0
    %v1255 = vadd.f32 0.0, %v1254
    %1256 = vmatmul.f32.gmra.mxu0 %v1231
    %v1257 = vpop.f32.mrf.mxu0
    %v1258 = vadd.f32 0.0, %v1257
    %1259 = vdwg.mxu0
    %v1260 = vmul.f32 %v1255, 0.35355338
    %v1261 = vmul.f32 %v1258, 0.35355338
    %v1262 = vsel %vm878, %v1260, -inf
    %1263 = vmax.xlane.f32.xlu0 %v1262
    %v1264 = vpop.xlane.xlu0 %1263
    %v1265 = vsel %vm878, %v1261, -inf
    %1266 = vmax.xlane.f32.xlu0 %v1265
    %v1267 = vpop.xlane.xlu0 %1266
    %v1268 = vsub.f32 %v1260, %v1264
    %v1269 = vsub.f32 %v1261, %v1267
    %v1270 = vmul.f32 %v1268, 1.442695
    %v1271 = vpow.pop %v1270
    %v1272 = vmul.f32 %v1269, 1.442695
    %v1273 = vpow.pop %v1272
    %v1274 = vsel %vm878, %v1271, 0.0
    %1275 = vadd.xlane.f32.xlu0 %v1274
    %v1276 = vpop.xlane.xlu0 %1275
    %v1277 = vsel %vm878, %v1273, 0.0
    %1278 = vadd.xlane.f32.xlu0 %v1277
    %v1279 = vpop.xlane.xlu0 %1278
    %v1280 = vrcp.pop %v1276
    %v1281 = vrcp.pop %v1279
    %v1282 = vmul.f32 %v1271, %v1280
    %v1283 = vmul.f32 %v1273, %v1281
    %1284 = vrot.lane.b32.xlu0 %v829, 40
    %v1285 = vpop.permute.xlu0 %1284
    %1286 = vrot.lane.b32.xlu0 %v832, 40
    %v1287 = vpop.permute.xlu0 %1286
    %v1291 = vsel %vm878, %v1282, 0
    %v1294 = vsel %vm878, %v1283, 0
    %1296 = vmatpush.msra.mxu0 0.0
    %1297 = vmatpush.msra.mxu0 0.0
    %1298 = vmatpush.msra.mxu0 0.0
    %1299 = vmatpush.msra.mxu0 0.0
    %1300 = vmatpush.msra.mxu0 0.0
    %1301 = vmatpush.msra.mxu0 0.0
    %1302 = vmatpush.msra.mxu0 0.0
    %1303 = vmatpush.msra.mxu0 0.0
    %1304 = vmatpush.msra.mxu0 0.0
    %1305 = vmatpush.msra.mxu0 0.0
    %1306 = vmatpush.msra.mxu0 0.0
    %1307 = vmatpush.msra.mxu0 0.0
    %1308 = vmatpush.msra.mxu0 0.0
    %1309 = vmatpush.msra.mxu0 0.0
    %1310 = vmatpush.msra.mxu0 %v1287
    %1311 = vmatpush.msra.mxu0 %v1285
    %1312 = vmatmul.f32.gmra.mxu0 %v1291
    %v1313 = vpop.f32.mrf.mxu0
    %v1314 = vadd.f32 0.0, %v1313
    %1315 = vmatmul.f32.gmra.mxu0 %v1294
    %v1316 = vpop.f32.mrf.mxu0
    %v1317 = vadd.f32 0.0, %v1316
    %1318 = vdwg.mxu0
    %v1320 = vsel %vm844, %v1314, 0
    %v1323 = vsel %vm844, %v1317, 0
    %1325 = vmatpush.msra.mxu0 0.0
    %1326 = vmatpush.msra.mxu0 0.0
    %1327 = vmatpush.msra.mxu0 0.0
    %1328 = vmatpush.msra.mxu0 0.0
    %1329 = vmatpush.msra.mxu0 0.0
    %1330 = vmatpush.msra.mxu0 0.0
    %1331 = vmatpush.msra.mxu0 0.0
    %1332 = vmatpush.msra.mxu0 0.0
    %1333 = vmatpush.msra.mxu0 0.0
    %1334 = vmatpush.msra.mxu0 0.0
    %1335 = vmatpush.msra.mxu0 0.0
    %1336 = vmatpush.msra.mxu0 0.0
    %1337 = vmatpush.msra.mxu0 0.0
    %1338 = vmatpush.msra.mxu0 0.0
    %1339 = vmatpush.msra.mxu0 0.0
    %1340 = vmatpush.msra.mxu0 %v837
    %1341 = vmatmul.f32.gmra.mxu0 %v1320
    %v1342 = vpop.f32.mrf.mxu0
    %v1343 = vadd.f32 0.0, %v1342
    %1344 = vmatmul.f32.gmra.mxu0 %v1323
    %v1345 = vpop.f32.mrf.mxu0
    %v1346 = vadd.f32 0.0, %v1345
    %1347 = vdwg.mxu0
    %v1348 = vadd.f32 %v1219, %v1343
    %v1349 = vadd.f32 %v1220, %v1346
    %v1350 = vadd.f32 %v732, %v1348
    %v1351 = vadd.f32 %v733, %v1349
    %v1352 = vld [vmem:[#allocation12] sm:$0x1]
    %v1354 = vperm.slane %v1352, 0
    %v1356 = vadd.f32 %v1350, %v1354
    %v1357 = vadd.f32 %v1351, %v1354
    %v1358 = vsel %vm702, %v1356, 0.0
    %1359 = vadd.xlane.f32.xlu0 %v1358
    %v1360 = vpop.xlane.xlu0 %1359
    %v1361 = vsel %vm702, %v1357, 0.0
    %1362 = vadd.xlane.f32.xlu0 %v1361
    %v1363 = vpop.xlane.xlu0 %1362
    %v1364 = vmul.f32 %v1360, %v746
    %v1365 = vmul.f32 %v1363, %v746
    %v1366 = vsub.f32 %v1356, %v1364
    %v1367 = vsub.f32 %v1357, %v1365
    %v1368 = vmul.f32 %v1366, %v1366
    %v1369 = vmul.f32 %v1367, %v1367
    %v1370 = vsel %vm702, %v1368, 0.0
    %1371 = vadd.xlane.f32.xlu0 %v1370
    %v1372 = vpop.xlane.xlu0 %1371
    %v1373 = vsel %vm702, %v1369, 0.0
    %1374 = vadd.xlane.f32.xlu0 %v1373
    %v1375 = vpop.xlane.xlu0 %1374
    %v1376 = vmul.f32 %v1372, %v746
    %v1377 = vmul.f32 %v1375, %v746
    %v1378 = vadd.f32 %v1376, 1e-05
    %v1379 = vadd.f32 %v1377, 1e-05
    %v1380 = vrsqrt.pop %v1378
    %v1381 = vmul.f32 %v1380, %v1378
    %v1382 = vmul.f32 %v1381, %v1380
    %v1383 = vmul.f32 0.5, %v1382
    %v1384 = vsub.f32 1.5, %v1383
    %v1385 = vmul.f32 %v1380, %v1384
    %vm1386 = vweird.f32 %v1378
    %vm1387 = vweird.f32 %v1380
    %vm1388 = vmor %vm1386, %vm1387
    %v1389 = vsel %vm1388, %v1380, %v1385
    %v1390 = vrsqrt.pop %v1379
    %v1391 = vmul.f32 %v1390, %v1379
    %v1392 = vmul.f32 %v1391, %v1390
    %v1393 = vmul.f32 0.5, %v1392
    %v1394 = vsub.f32 1.5, %v1393
    %v1395 = vmul.f32 %v1390, %v1394
    %vm1396 = vweird.f32 %v1379
    %vm1397 = vweird.f32 %v1390
    %vm1398 = vmor %vm1396, %vm1397
    %v1399 = vsel %vm1398, %v1390, %v1395
    %v1400 = vmul.f32 %v1366, %v1389
    %v1401 = vmul.f32 %v1367, %v1399
    %v1402 = vld [vmem:[#allocation13] sm:$0x1]
    %v1404 = vperm.slane %v1402, 0
    %v1406 = vmul.f32 %v1400, %v1404
    %v1407 = vmul.f32 %v1401, %v1404
    %v1408 = vld [vmem:[#allocation15] sm:$0x1]
    %v1410 = vperm.slane %v1408, 0
    %v1412 = vadd.f32 %v1406, %v1410
    %v1413 = vadd.f32 %v1407, %v1410
    %v1414 = vld [vmem:[#allocation16] sm:$0xff]
    %v1415 = vld [vmem:[#allocation16 + $0x8] sm:$0xff]
    %v1416 = vld [vmem:[#allocation16 + $0x10] sm:$0xff]
    %v1417 = vld [vmem:[#allocation16 + $0x18] sm:$0xff]
    %v1418 = vld [vmem:[#allocation18] sm:$0x1]
    %v1420 = vperm.slane %v1418, 0
    %v1423 = vsel %vm702, %v1412, 0
    %v1426 = vsel %vm702, %v1413, 0
    %1428 = vmatpush.msra.mxu0 0.0
    %1429 = vmatpush.msra.mxu0 0.0
    %1430 = vmatpush.msra.mxu0 0.0
    %1431 = vmatpush.msra.mxu0 0.0
    %1432 = vmatpush.msra.mxu0 0.0
    %1433 = vmatpush.msra.mxu0 0.0
    %1434 = vmatpush.msra.mxu0 0.0
    %1435 = vmatpush.msra.mxu0 0.0
    %1436 = vmatpush.msra.mxu0 0.0
    %1437 = vmatpush.msra.mxu0 0.0
    %1438 = vmatpush.msra.mxu0 0.0
    %1439 = vmatpush.msra.mxu0 0.0
    %1440 = vmatpush.msra.mxu0 %v1417
    %1441 = vmatpush.msra.mxu0 %v1416
    %1442 = vmatpush.msra.mxu0 %v1415
    %1443 = vmatpush.msra.mxu0 %v1414
    %1444 = vmatmul.f32.gmra.mxu0 %v1423
    %v1445 = vpop.f32.mrf.mxu0
    %v1446 = vadd.f32 %v1420, %v1445
    %1447 = vmatmul.f32.gmra.mxu0 %v1426
    %v1448 = vpop.f32.mrf.mxu0
    %v1449 = vadd.f32 %v1420, %v1448
    %1450 = vdwg.mxu0
    %v1451 = vmax.f32 %v1446, 0.0
    %v1452 = vmax.f32 %v1449, 0.0
    %v1453 = vld [vmem:[#allocation19] sm:$0xff]
    %v1454 = vld [vmem:[#allocation19 + $0x8] sm:$0xff]
    %v1455 = vld [vmem:[#allocation19 + $0x10] sm:$0xff]
    %v1456 = vld [vmem:[#allocation19 + $0x18] sm:$0xff]
    %v1457 = vld [vmem:[#allocation21] sm:$0x1]
    %v1459 = vperm.slane %v1457, 0
    %v1462 = vsel %vm702, %v1451, 0
    %v1465 = vsel %vm702, %v1452, 0
    %1467 = vmatpush.msra.mxu0 0.0
    %1468 = vmatpush.msra.mxu0 0.0
    %1469 = vmatpush.msra.mxu0 0.0
    %1470 = vmatpush.msra.mxu0 0.0
    %1471 = vmatpush.msra.mxu0 0.0
    %1472 = vmatpush.msra.mxu0 0.0
    %1473 = vmatpush.msra.mxu0 0.0
    %1474 = vmatpush.msra.mxu0 0.0
    %1475 = vmatpush.msra.mxu0 0.0
    %1476 = vmatpush.msra.mxu0 0.0
    %1477 = vmatpush.msra.mxu0 0.0
    %1478 = vmatpush.msra.mxu0 0.0
    %1479 = vmatpush.msra.mxu0 %v1456
    %1480 = vmatpush.msra.mxu0 %v1455
    %1481 = vmatpush.msra.mxu0 %v1454
    %1482 = vmatpush.msra.mxu0 %v1453
    %1483 = vmatmul.f32.gmra.mxu0 %v1462
    %v1484 = vpop.f32.mrf.mxu0
    %v1485 = vadd.f32 %v1459, %v1484
    %1486 = vmatmul.f32.gmra.mxu0 %v1465
    %v1487 = vpop.f32.mrf.mxu0
    %v1488 = vadd.f32 %v1459, %v1487
    %1489 = vdwg.mxu0
    %v1490 = vadd.f32 %v1356, %v1485
    %v1491 = vadd.f32 %v1357, %v1488
    %v1492 = vsel %vm702, %v1490, 0.0
    %1493 = vadd.xlane.f32.xlu0 %v1492
    %v1494 = vpop.xlane.xlu0 %1493
    %v1495 = vsel %vm702, %v1491, 0.0
    %1496 = vadd.xlane.f32.xlu0 %v1495
    %v1497 = vpop.xlane.xlu0 %1496
    %v1498 = vmul.f32 %v1494, %v746
    %v1499 = vmul.f32 %v1497, %v746
    %v1500 = vsub.f32 %v1490, %v1498
    %v1501 = vsub.f32 %v1491, %v1499
    %v1502 = vmul.f32 %v1500, %v1500
    %v1503 = vmul.f32 %v1501, %v1501
    %v1504 = vsel %vm702, %v1502, 0.0
    %1505 = vadd.xlane.f32.xlu0 %v1504
    %v1506 = vpop.xlane.xlu0 %1505
    %v1507 = vsel %vm702, %v1503, 0.0
    %1508 = vadd.xlane.f32.xlu0 %v1507
    %v1509 = vpop.xlane.xlu0 %1508
    %v1510 = vmul.f32 %v1506, %v746
    %v1511 = vmul.f32 %v1509, %v746
    %v1512 = vadd.f32 %v1510, 1e-05
    %v1513 = vadd.f32 %v1511, 1e-05
    %v1514 = vrsqrt.pop %v1512
    %v1515 = vmul.f32 %v1514, %v1512
    %v1516 = vmul.f32 %v1515, %v1514
    %v1517 = vmul.f32 0.5, %v1516
    %v1518 = vsub.f32 1.5, %v1517
    %v1519 = vmul.f32 %v1514, %v1518
    %vm1520 = vweird.f32 %v1512
    %vm1521 = vweird.f32 %v1514
    %vm1522 = vmor %vm1520, %vm1521
    %v1523 = vsel %vm1522, %v1514, %v1519
    %v1524 = vrsqrt.pop %v1513
    %v1525 = vmul.f32 %v1524, %v1513
    %v1526 = vmul.f32 %v1525, %v1524
    %v1527 = vmul.f32 0.5, %v1526
    %v1528 = vsub.f32 1.5, %v1527
    %v1529 = vmul.f32 %v1524, %v1528
    %vm1530 = vweird.f32 %v1513
    %vm1531 = vweird.f32 %v1524
    %vm1532 = vmor %vm1530, %vm1531
    %v1533 = vsel %vm1532, %v1524, %v1529
    %v1534 = vmul.f32 %v1500, %v1523
    %v1535 = vmul.f32 %v1501, %v1533
    %v1536 = vld [vmem:[#allocation22] sm:$0x1]
    %v1538 = vperm.slane %v1536, 0
    %v1540 = vmul.f32 %v1534, %v1538
    %v1541 = vmul.f32 %v1535, %v1538
    %v1542 = vld [vmem:[#allocation24] sm:$0x1]
    %v1544 = vperm.slane %v1542, 0
    %v1546 = vadd.f32 %v1540, %v1544
    %v1547 = vadd.f32 %v1541, %v1544
    %v1548 = vld [vmem:[#allocation25] sm:$0xff]
    %v1549 = vld [vmem:[#allocation25 + $0x8] sm:$0xff]
    %v1550 = vld [vmem:[#allocation25 + $0x10] sm:$0xff]
    %v1551 = vld [vmem:[#allocation25 + $0x18] sm:$0xff]
    %v1552 = vld [vmem:[#allocation27] sm:$0x1]
    %v1554 = vperm.slane %v1552, 0
    %v1557 = vsel %vm702, %v1546, 0
    %v1560 = vsel %vm702, %v1547, 0
    %1562 = vmatpush.msra.mxu0 0.0
    %1563 = vmatpush.msra.mxu0 0.0
    %1564 = vmatpush.msra.mxu0 0.0
    %1565 = vmatpush.msra.mxu0 0.0
    %1566 = vmatpush.msra.mxu0 0.0
    %1567 = vmatpush.msra.mxu0 0.0
    %1568 = vmatpush.msra.mxu0 0.0
    %1569 = vmatpush.msra.mxu0 0.0
    %1570 = vmatpush.msra.mxu0 0.0
    %1571 = vmatpush.msra.mxu0 0.0
    %1572 = vmatpush.msra.mxu0 0.0
    %1573 = vmatpush.msra.mxu0 0.0
    %1574 = vmatpush.msra.mxu0 %v1551
    %1575 = vmatpush.msra.mxu0 %v1550
    %1576 = vmatpush.msra.mxu0 %v1549
    %1577 = vmatpush.msra.mxu0 %v1548
    %1578 = vmatmul.f32.gmra.mxu0 %v1557
    %v1579 = vpop.f32.mrf.mxu0
    %v1580 = vadd.f32 %v1554, %v1579
    %1581 = vmatmul.f32.gmra.mxu0 %v1560
    %v1582 = vpop.f32.mrf.mxu0
    %v1583 = vadd.f32 %v1554, %v1582
    %1584 = vdwg.mxu0
    %v1585 = vld [vmem:[#allocation28] sm:$0xff]
    %v1586 = vld [vmem:[#allocation28 + $0x8] sm:$0xff]
    %v1587 = vld [vmem:[#allocation28 + $0x10] sm:$0xff]
    %v1588 = vld [vmem:[#allocation28 + $0x18] sm:$0xff]
    %1591 = vrot.lane.b32.xlu0 %v1580, 96
    %v1592 = vpop.permute.xlu0 %1591
    %1593 = vrot.lane.b32.xlu0 %v1583, 96
    %v1594 = vpop.permute.xlu0 %1593
    %v1595 = vsel %vm844, %v1580, 0
    %v1597 = vsel %vm844, %v1583, 0
    %v1599 = vsel %vm844, %v1592, 0
    %v1601 = vsel %vm844, %v1594, 0
    %1603 = vmatpush.xpose.msra.mxu0 0.0
    %1604 = vmatpush.xpose.msra.mxu0 0.0
    %1605 = vmatpush.xpose.msra.mxu0 0.0
    %1606 = vmatpush.xpose.msra.mxu0 0.0
    %1607 = vmatpush.xpose.msra.mxu0 0.0
    %1608 = vmatpush.xpose.msra.mxu0 0.0
    %1609 = vmatpush.xpose.msra.mxu0 0.0
    %1610 = vmatpush.xpose.msra.mxu0 0.0
    %1611 = vmatpush.xpose.msra.mxu0 0.0
    %1612 = vmatpush.xpose.msra.mxu0 0.0
    %1613 = vmatpush.xpose.msra.mxu0 0.0
    %1614 = vmatpush.xpose.msra.mxu0 0.0
    %1615 = vmatpush.xpose.msra.mxu0 0.0
    %1616 = vmatpush.xpose.msra.mxu0 0.0
    %1617 = vmatpush.xpose.msra.mxu0 %v1601
    %1618 = vmatpush.xpose.msra.mxu0 %v1599
    %1619 = vmatmul.f32.gmra.mxu0 %v1595
    %v1620 = vpop.f32.mrf.mxu0
    %v1621 = vadd.f32 0.0, %v1620
    %1622 = vmatmul.f32.gmra.mxu0 %v1597
    %v1623 = vpop.f32.mrf.mxu0
    %v1624 = vadd.f32 0.0, %v1623
    %1625 = vdwg.mxu0
    %v1626 = vmul.f32 %v1621, 0.35355338
    %v1627 = vmul.f32 %v1624, 0.35355338
    %v1628 = vsel %vm878, %v1626, -inf
    %1629 = vmax.xlane.f32.xlu0 %v1628
    %v1630 = vpop.xlane.xlu0 %1629
    %v1631 = vsel %vm878, %v1627, -inf
    %1632 = vmax.xlane.f32.xlu0 %v1631
    %v1633 = vpop.xlane.xlu0 %1632
    %v1634 = vsub.f32 %v1626, %v1630
    %v1635 = vsub.f32 %v1627, %v1633
    %v1636 = vmul.f32 %v1634, 1.442695
    %v1637 = vpow.pop %v1636
    %v1638 = vmul.f32 %v1635, 1.442695
    %v1639 = vpow.pop %v1638
    %v1640 = vsel %vm878, %v1637, 0.0
    %1641 = vadd.xlane.f32.xlu0 %v1640
    %v1642 = vpop.xlane.xlu0 %1641
    %v1643 = vsel %vm878, %v1639, 0.0
    %1644 = vadd.xlane.f32.xlu0 %v1643
    %v1645 = vpop.xlane.xlu0 %1644
    %v1646 = vrcp.pop %v1642
    %v1647 = vrcp.pop %v1645
    %v1648 = vmul.f32 %v1637, %v1646
    %v1649 = vmul.f32 %v1639, %v1647
    %1650 = vrot.lane.b32.xlu0 %v1580, 64
    %v1651 = vpop.permute.xlu0 %1650
    %1652 = vrot.lane.b32.xlu0 %v1583, 64
    %v1653 = vpop.permute.xlu0 %1652
    %v1657 = vsel %vm878, %v1648, 0
    %v1660 = vsel %vm878, %v1649, 0
    %1662 = vmatpush.msra.mxu0 0.0
    %1663 = vmatpush.msra.mxu0 0.0
    %1664 = vmatpush.msra.mxu0 0.0
    %1665 = vmatpush.msra.mxu0 0.0
    %1666 = vmatpush.msra.mxu0 0.0
    %1667 = vmatpush.msra.mxu0 0.0
    %1668 = vmatpush.msra.mxu0 0.0
    %1669 = vmatpush.msra.mxu0 0.0
    %1670 = vmatpush.msra.mxu0 0.0
    %1671 = vmatpush.msra.mxu0 0.0
    %1672 = vmatpush.msra.mxu0 0.0
    %1673 = vmatpush.msra.mxu0 0.0
    %1674 = vmatpush.msra.mxu0 0.0
    %1675 = vmatpush.msra.mxu0 0.0
    %1676 = vmatpush.msra.mxu0 %v1653
    %1677 = vmatpush.msra.mxu0 %v1651
    %1678 = vmatmul.f32.gmra.mxu0 %v1657
    %v1679 = vpop.f32.mrf.mxu0
    %v1680 = vadd.f32 0.0, %v1679
    %1681 = vmatmul.f32.gmra.mxu0 %v1660
    %v1682 = vpop.f32.mrf.mxu0
    %v1683 = vadd.f32 0.0, %v1682
    %1684 = vdwg.mxu0
    %1685 = vrot.lane.b32.xlu0 %v1580, 120
    %v1686 = vpop.permute.xlu0 %1685
    %1687 = vrot.lane.b32.xlu0 %v1583, 120
    %v1688 = vpop.permute.xlu0 %1687
    %1689 = vrot.lane.b32.xlu0 %v1580, 88
    %v1690 = vpop.permute.xlu0 %1689
    %1691 = vrot.lane.b32.xlu0 %v1583, 88
    %v1692 = vpop.permute.xlu0 %1691
    %v1693 = vsel %vm844, %v1686, 0
    %v1695 = vsel %vm844, %v1688, 0
    %v1697 = vsel %vm844, %v1690, 0
    %v1699 = vsel %vm844, %v1692, 0
    %1701 = vmatpush.xpose.msra.mxu0 0.0
    %1702 = vmatpush.xpose.msra.mxu0 0.0
    %1703 = vmatpush.xpose.msra.mxu0 0.0
    %1704 = vmatpush.xpose.msra.mxu0 0.0
    %1705 = vmatpush.xpose.msra.mxu0 0.0
    %1706 = vmatpush.xpose.msra.mxu0 0.0
    %1707 = vmatpush.xpose.msra.mxu0 0.0
    %1708 = vmatpush.xpose.msra.mxu0 0.0
    %1709 = vmatpush.xpose.msra.mxu0 0.0
    %1710 = vmatpush.xpose.msra.mxu0 0.0
    %1711 = vmatpush.xpose.msra.mxu0 0.0
    %1712 = vmatpush.xpose.msra.mxu0 0.0
    %1713 = vmatpush.xpose.msra.mxu0 0.0
    %1714 = vmatpush.xpose.msra.mxu0 0.0
    %1715 = vmatpush.xpose.msra.mxu0 %v1699
    %1716 = vmatpush.xpose.msra.mxu0 %v1697
    %1717 = vmatmul.f32.gmra.mxu0 %v1693
    %v1718 = vpop.f32.mrf.mxu0
    %v1719 = vadd.f32 0.0, %v1718
    %1720 = vmatmul.f32.gmra.mxu0 %v1695
    %v1721 = vpop.f32.mrf.mxu0
    %v1722 = vadd.f32 0.0, %v1721
    %1723 = vdwg.mxu0
    %v1724 = vmul.f32 %v1719, 0.35355338
    %v1725 = vmul.f32 %v1722, 0.35355338
    %v1726 = vsel %vm878, %v1724, -inf
    %1727 = vmax.xlane.f32.xlu0 %v1726
    %v1728 = vpop.xlane.xlu0 %1727
    %v1729 = vsel %vm878, %v1725, -inf
    %1730 = vmax.xlane.f32.xlu0 %v1729
    %v1731 = vpop.xlane.xlu0 %1730
    %v1732 = vsub.f32 %v1724, %v1728
    %v1733 = vsub.f32 %v1725, %v1731
    %v1734 = vmul.f32 %v1732, 1.442695
    %v1735 = vpow.pop %v1734
    %v1736 = vmul.f32 %v1733, 1.442695
    %v1737 = vpow.pop %v1736
    %v1738 = vsel %vm878, %v1735, 0.0
    %1739 = vadd.xlane.f32.xlu0 %v1738
    %v1740 = vpop.xlane.xlu0 %1739
    %v1741 = vsel %vm878, %v1737, 0.0
    %1742 = vadd.xlane.f32.xlu0 %v1741
    %v1743 = vpop.xlane.xlu0 %1742
    %v1744 = vrcp.pop %v1740
    %v1745 = vrcp.pop %v1743
    %v1746 = vmul.f32 %v1735, %v1744
    %v1747 = vmul.f32 %v1737, %v1745
    %1748 = vrot.lane.b32.xlu0 %v1580, 56
    %v1749 = vpop.permute.xlu0 %1748
    %1750 = vrot.lane.b32.xlu0 %v1583, 56
    %v1751 = vpop.permute.xlu0 %1750
    %v1755 = vsel %vm878, %v1746, 0
    %v1758 = vsel %vm878, %v1747, 0
    %1760 = vmatpush.msra.mxu0 0.0
    %1761 = vmatpush.msra.mxu0 0.0
    %1762 = vmatpush.msra.mxu0 0.0
    %1763 = vmatpush.msra.mxu0 0.0
    %1764 = vmatpush.msra.mxu0 0.0
    %1765 = vmatpush.msra.mxu0 0.0
    %1766 = vmatpush.msra.mxu0 0.0
    %1767 = vmatpush.msra.mxu0 0.0
    %1768 = vmatpush.msra.mxu0 0.0
    %1769 = vmatpush.msra.mxu0 0.0
    %1770 = vmatpush.msra.mxu0 0.0
    %1771 = vmatpush.msra.mxu0 0.0
    %1772 = vmatpush.msra.mxu0 0.0
    %1773 = vmatpush.msra.mxu0 0.0
    %1774 = vmatpush.msra.mxu0 %v1751
    %1775 = vmatpush.msra.mxu0 %v1749
    %1776 = vmatmul.f32.gmra.mxu0 %v1755
    %v1777 = vpop.f32.mrf.mxu0
    %v1778 = vadd.f32 0.0, %v1777
    %1779 = vmatmul.f32.gmra.mxu0 %v1758
    %v1780 = vpop.f32.mrf.mxu0
    %v1781 = vadd.f32 0.0, %v1780
    %1782 = vdwg.mxu0
    %v1784 = vsel %vm844, %v1778, 0
    %v1787 = vsel %vm844, %v1781, 0
    %1789 = vmatpush.msra.mxu0 0.0
    %1790 = vmatpush.msra.mxu0 0.0
    %1791 = vmatpush.msra.mxu0 0.0
    %1792 = vmatpush.msra.mxu0 0.0
    %1793 = vmatpush.msra.mxu0 0.0
    %1794 = vmatpush.msra.mxu0 0.0
    %1795 = vmatpush.msra.mxu0 0.0
    %1796 = vmatpush.msra.mxu0 0.0
    %1797 = vmatpush.msra.mxu0 0.0
    %1798 = vmatpush.msra.mxu0 0.0
    %1799 = vmatpush.msra.mxu0 0.0
    %1800 = vmatpush.msra.mxu0 0.0
    %1801 = vmatpush.msra.mxu0 0.0
    %1802 = vmatpush.msra.mxu0 0.0
    %1803 = vmatpush.msra.mxu0 0.0
    %1804 = vmatpush.msra.mxu0 %v1586
    %1805 = vmatmul.f32.gmra.mxu0 %v1784
    %v1806 = vpop.f32.mrf.mxu0
    %v1807 = vadd.f32 0.0, %v1806
    %1808 = vmatmul.f32.gmra.mxu0 %v1787
    %v1809 = vpop.f32.mrf.mxu0
    %v1810 = vadd.f32 0.0, %v1809
    %1811 = vdwg.mxu0
    %v1813 = vsel %vm844, %v1680, 0
    %v1816 = vsel %vm844, %v1683, 0
    %1818 = vmatpush.msra.mxu0 0.0
    %1819 = vmatpush.msra.mxu0 0.0
    %1820 = vmatpush.msra.mxu0 0.0
    %1821 = vmatpush.msra.mxu0 0.0
    %1822 = vmatpush.msra.mxu0 0.0
    %1823 = vmatpush.msra.mxu0 0.0
    %1824 = vmatpush.msra.mxu0 0.0
    %1825 = vmatpush.msra.mxu0 0.0
    %1826 = vmatpush.msra.mxu0 0.0
    %1827 = vmatpush.msra.mxu0 0.0
    %1828 = vmatpush.msra.mxu0 0.0
    %1829 = vmatpush.msra.mxu0 0.0
    %1830 = vmatpush.msra.mxu0 0.0
    %1831 = vmatpush.msra.mxu0 0.0
    %1832 = vmatpush.msra.mxu0 0.0
    %1833 = vmatpush.msra.mxu0 %v1585
    %1834 = vmatmul.f32.gmra.mxu0 %v1813
    %v1835 = vpop.f32.mrf.mxu0
    %v1836 = vadd.f32 %v1807, %v1835
    %1837 = vmatmul.f32.gmra.mxu0 %v1816
    %v1838 = vpop.f32.mrf.mxu0
    %v1839 = vadd.f32 %v1810, %v1838
    %1840 = vdwg.mxu0
    %1841 = vrot.lane.b32.xlu0 %v1580, 112
    %v1842 = vpop.permute.xlu0 %1841
    %1843 = vrot.lane.b32.xlu0 %v1583, 112
    %v1844 = vpop.permute.xlu0 %1843
    %1845 = vrot.lane.b32.xlu0 %v1580, 80
    %v1846 = vpop.permute.xlu0 %1845
    %1847 = vrot.lane.b32.xlu0 %v1583, 80
    %v1848 = vpop.permute.xlu0 %1847
    %v1849 = vsel %vm844, %v1842, 0
    %v1851 = vsel %vm844, %v1844, 0
    %v1853 = vsel %vm844, %v1846, 0
    %v1855 = vsel %vm844, %v1848, 0
    %1857 = vmatpush.xpose.msra.mxu0 0.0
    %1858 = vmatpush.xpose.msra.mxu0 0.0
    %1859 = vmatpush.xpose.msra.mxu0 0.0
    %1860 = vmatpush.xpose.msra.mxu0 0.0
    %1861 = vmatpush.xpose.msra.mxu0 0.0
    %1862 = vmatpush.xpose.msra.mxu0 0.0
    %1863 = vmatpush.xpose.msra.mxu0 0.0
    %1864 = vmatpush.xpose.msra.mxu0 0.0
    %1865 = vmatpush.xpose.msra.mxu0 0.0
    %1866 = vmatpush.xpose.msra.mxu0 0.0
    %1867 = vmatpush.xpose.msra.mxu0 0.0
    %1868 = vmatpush.xpose.msra.mxu0 0.0
    %1869 = vmatpush.xpose.msra.mxu0 0.0
    %1870 = vmatpush.xpose.msra.mxu0 0.0
    %1871 = vmatpush.xpose.msra.mxu0 %v1855
    %1872 = vmatpush.xpose.msra.mxu0 %v1853
    %1873 = vmatmul.f32.gmra.mxu0 %v1849
    %v1874 = vpop.f32.mrf.mxu0
    %v1875 = vadd.f32 0.0, %v1874
    %1876 = vmatmul.f32.gmra.mxu0 %v1851
    %v1877 = vpop.f32.mrf.mxu0
    %v1878 = vadd.f32 0.0, %v1877
    %1879 = vdwg.mxu0
    %v1880 = vmul.f32 %v1875, 0.35355338
    %v1881 = vmul.f32 %v1878, 0.35355338
    %v1882 = vsel %vm878, %v1880, -inf
    %1883 = vmax.xlane.f32.xlu0 %v1882
    %v1884 = vpop.xlane.xlu0 %1883
    %v1885 = vsel %vm878, %v1881, -inf
    %1886 = vmax.xlane.f32.xlu0 %v1885
    %v1887 = vpop.xlane.xlu0 %1886
    %v1888 = vsub.f32 %v1880, %v1884
    %v1889 = vsub.f32 %v1881, %v1887
    %v1890 = vmul.f32 %v1888, 1.442695
    %v1891 = vpow.pop %v1890
    %v1892 = vmul.f32 %v1889, 1.442695
    %v1893 = vpow.pop %v1892
    %v1894 = vsel %vm878, %v1891, 0.0
    %1895 = vadd.xlane.f32.xlu0 %v1894
    %v1896 = vpop.xlane.xlu0 %1895
    %v1897 = vsel %vm878, %v1893, 0.0
    %1898 = vadd.xlane.f32.xlu0 %v1897
    %v1899 = vpop.xlane.xlu0 %1898
    %v1900 = vrcp.pop %v1896
    %v1901 = vrcp.pop %v1899
    %v1902 = vmul.f32 %v1891, %v1900
    %v1903 = vmul.f32 %v1893, %v1901
    %1904 = vrot.lane.b32.xlu0 %v1580, 48
    %v1905 = vpop.permute.xlu0 %1904
    %1906 = vrot.lane.b32.xlu0 %v1583, 48
    %v1907 = vpop.permute.xlu0 %1906
    %v1911 = vsel %vm878, %v1902, 0
    %v1914 = vsel %vm878, %v1903, 0
    %1916 = vmatpush.msra.mxu0 0.0
    %1917 = vmatpush.msra.mxu0 0.0
    %1918 = vmatpush.msra.mxu0 0.0
    %1919 = vmatpush.msra.mxu0 0.0
    %1920 = vmatpush.msra.mxu0 0.0
    %1921 = vmatpush.msra.mxu0 0.0
    %1922 = vmatpush.msra.mxu0 0.0
    %1923 = vmatpush.msra.mxu0 0.0
    %1924 = vmatpush.msra.mxu0 0.0
    %1925 = vmatpush.msra.mxu0 0.0
    %1926 = vmatpush.msra.mxu0 0.0
    %1927 = vmatpush.msra.mxu0 0.0
    %1928 = vmatpush.msra.mxu0 0.0
    %1929 = vmatpush.msra.mxu0 0.0
    %1930 = vmatpush.msra.mxu0 %v1907
    %1931 = vmatpush.msra.mxu0 %v1905
    %1932 = vmatmul.f32.gmra.mxu0 %v1911
    %v1933 = vpop.f32.mrf.mxu0
    %v1934 = vadd.f32 0.0, %v1933
    %1935 = vmatmul.f32.gmra.mxu0 %v1914
    %v1936 = vpop.f32.mrf.mxu0
    %v1937 = vadd.f32 0.0, %v1936
    %1938 = vdwg.mxu0
    %v1940 = vsel %vm844, %v1934, 0
    %v1943 = vsel %vm844, %v1937, 0
    %1945 = vmatpush.msra.mxu0 0.0
    %1946 = vmatpush.msra.mxu0 0.0
    %1947 = vmatpush.msra.mxu0 0.0
    %1948 = vmatpush.msra.mxu0 0.0
    %1949 = vmatpush.msra.mxu0 0.0
    %1950 = vmatpush.msra.mxu0 0.0
    %1951 = vmatpush.msra.mxu0 0.0
    %1952 = vmatpush.msra.mxu0 0.0
    %1953 = vmatpush.msra.mxu0 0.0
    %1954 = vmatpush.msra.mxu0 0.0
    %1955 = vmatpush.msra.mxu0 0.0
    %1956 = vmatpush.msra.mxu0 0.0
    %1957 = vmatpush.msra.mxu0 0.0
    %1958 = vmatpush.msra.mxu0 0.0
    %1959 = vmatpush.msra.mxu0 0.0
    %1960 = vmatpush.msra.mxu0 %v1587
    %1961 = vmatmul.f32.gmra.mxu0 %v1940
    %v1962 = vpop.f32.mrf.mxu0
    %v1963 = vadd.f32 0.0, %v1962
    %1964 = vmatmul.f32.gmra.mxu0 %v1943
    %v1965 = vpop.f32.mrf.mxu0
    %v1966 = vadd.f32 0.0, %v1965
    %1967 = vdwg.mxu0
    %v1968 = vadd.f32 %v1836, %v1963
    %v1969 = vadd.f32 %v1839, %v1966
    %1970 = vrot.lane.b32.xlu0 %v1580, 104
    %v1971 = vpop.permute.xlu0 %1970
    %1972 = vrot.lane.b32.xlu0 %v1583, 104
    %v1973 = vpop.permute.xlu0 %1972
    %1974 = vrot.lane.b32.xlu0 %v1580, 72
    %v1975 = vpop.permute.xlu0 %1974
    %1976 = vrot.lane.b32.xlu0 %v1583, 72
    %v1977 = vpop.permute.xlu0 %1976
    %v1978 = vsel %vm844, %v1971, 0
    %v1980 = vsel %vm844, %v1973, 0
    %v1982 = vsel %vm844, %v1975, 0
    %v1984 = vsel %vm844, %v1977, 0
    %1986 = vmatpush.xpose.msra.mxu0 0.0
    %1987 = vmatpush.xpose.msra.mxu0 0.0
    %1988 = vmatpush.xpose.msra.mxu0 0.0
    %1989 = vmatpush.xpose.msra.mxu0 0.0
    %1990 = vmatpush.xpose.msra.mxu0 0.0
    %1991 = vmatpush.xpose.msra.mxu0 0.0
    %1992 = vmatpush.xpose.msra.mxu0 0.0
    %1993 = vmatpush.xpose.msra.mxu0 0.0
    %1994 = vmatpush.xpose.msra.mxu0 0.0
    %1995 = vmatpush.xpose.msra.mxu0 0.0
    %1996 = vmatpush.xpose.msra.mxu0 0.0
    %1997 = vmatpush.xpose.msra.mxu0 0.0
    %1998 = vmatpush.xpose.msra.mxu0 0.0
    %1999 = vmatpush.xpose.msra.mxu0 0.0
    %2000 = vmatpush.xpose.msra.mxu0 %v1984
    %2001 = vmatpush.xpose.msra.mxu0 %v1982
    %2002 = vmatmul.f32.gmra.mxu0 %v1978
    %v2003 = vpop.f32.mrf.mxu0
    %v2004 = vadd.f32 0.0, %v2003
    %2005 = vmatmul.f32.gmra.mxu0 %v1980
    %v2006 = vpop.f32.mrf.mxu0
    %v2007 = vadd.f32 0.0, %v2006
    %2008 = vdwg.mxu0
    %v2009 = vmul.f32 %v2004, 0.35355338
    %v2010 = vmul.f32 %v2007, 0.35355338
    %v2011 = vsel %vm878, %v2009, -inf
    %2012 = vmax.xlane.f32.xlu0 %v2011
    %v2013 = vpop.xlane.xlu0 %2012
    %v2014 = vsel %vm878, %v2010, -inf
    %2015 = vmax.xlane.f32.xlu0 %v2014
    %v2016 = vpop.xlane.xlu0 %2015
    %v2017 = vsub.f32 %v2009, %v2013
    %v2018 = vsub.f32 %v2010, %v2016
    %v2019 = vmul.f32 %v2017, 1.442695
    %v2020 = vpow.pop %v2019
    %v2021 = vmul.f32 %v2018, 1.442695
    %v2022 = vpow.pop %v2021
    %v2023 = vsel %vm878, %v2020, 0.0
    %2024 = vadd.xlane.f32.xlu0 %v2023
    %v2025 = vpop.xlane.xlu0 %2024
    %v2026 = vsel %vm878, %v2022, 0.0
    %2027 = vadd.xlane.f32.xlu0 %v2026
    %v2028 = vpop.xlane.xlu0 %2027
    %v2029 = vrcp.pop %v2025
    %v2030 = vrcp.pop %v2028
    %v2031 = vmul.f32 %v2020, %v2029
    %v2032 = vmul.f32 %v2022, %v2030
    %2033 = vrot.lane.b32.xlu0 %v1580, 40
    %v2034 = vpop.permute.xlu0 %2033
    %2035 = vrot.lane.b32.xlu0 %v1583, 40
    %v2036 = vpop.permute.xlu0 %2035
    %v2040 = vsel %vm878, %v2031, 0
    %v2043 = vsel %vm878, %v2032, 0
    %2045 = vmatpush.msra.mxu0 0.0
    %2046 = vmatpush.msra.mxu0 0.0
    %2047 = vmatpush.msra.mxu0 0.0
    %2048 = vmatpush.msra.mxu0 0.0
    %2049 = vmatpush.msra.mxu0 0.0
    %2050 = vmatpush.msra.mxu0 0.0
    %2051 = vmatpush.msra.mxu0 0.0
    %2052 = vmatpush.msra.mxu0 0.0
    %2053 = vmatpush.msra.mxu0 0.0
    %2054 = vmatpush.msra.mxu0 0.0
    %2055 = vmatpush.msra.mxu0 0.0
    %2056 = vmatpush.msra.mxu0 0.0
    %2057 = vmatpush.msra.mxu0 0.0
    %2058 = vmatpush.msra.mxu0 0.0
    %2059 = vmatpush.msra.mxu0 %v2036
    %2060 = vmatpush.msra.mxu0 %v2034
    %2061 = vmatmul.f32.gmra.mxu0 %v2040
    %v2062 = vpop.f32.mrf.mxu0
    %v2063 = vadd.f32 0.0, %v2062
    %2064 = vmatmul.f32.gmra.mxu0 %v2043
    %v2065 = vpop.f32.mrf.mxu0
    %v2066 = vadd.f32 0.0, %v2065
    %2067 = vdwg.mxu0
    %v2069 = vsel %vm844, %v2063, 0
    %v2072 = vsel %vm844, %v2066, 0
    %2074 = vmatpush.msra.mxu0 0.0
    %2075 = vmatpush.msra.mxu0 0.0
    %2076 = vmatpush.msra.mxu0 0.0
    %2077 = vmatpush.msra.mxu0 0.0
    %2078 = vmatpush.msra.mxu0 0.0
    %2079 = vmatpush.msra.mxu0 0.0
    %2080 = vmatpush.msra.mxu0 0.0
    %2081 = vmatpush.msra.mxu0 0.0
    %2082 = vmatpush.msra.mxu0 0.0
    %2083 = vmatpush.msra.mxu0 0.0
    %2084 = vmatpush.msra.mxu0 0.0
    %2085 = vmatpush.msra.mxu0 0.0
    %2086 = vmatpush.msra.mxu0 0.0
    %2087 = vmatpush.msra.mxu0 0.0
    %2088 = vmatpush.msra.mxu0 0.0
    %2089 = vmatpush.msra.mxu0 %v1588
    %2090 = vmatmul.f32.gmra.mxu0 %v2069
    %v2091 = vpop.f32.mrf.mxu0
    %v2092 = vadd.f32 0.0, %v2091
    %2093 = vmatmul.f32.gmra.mxu0 %v2072
    %v2094 = vpop.f32.mrf.mxu0
    %v2095 = vadd.f32 0.0, %v2094
    %2096 = vdwg.mxu0
    %v2097 = vadd.f32 %v1968, %v2092
    %v2098 = vadd.f32 %v1969, %v2095
    %v2099 = vadd.f32 %v1490, %v2097
    %v2100 = vadd.f32 %v1491, %v2098
    %v2101 = vld [vmem:[#allocation30] sm:$0x1]
    %v2103 = vperm.slane %v2101, 0
    %v2105 = vadd.f32 %v2099, %v2103
    %v2106 = vadd.f32 %v2100, %v2103
    %v2107 = vsel %vm702, %v2105, 0.0
    %2108 = vadd.xlane.f32.xlu0 %v2107
    %v2109 = vpop.xlane.xlu0 %2108
    %v2110 = vsel %vm702, %v2106, 0.0
    %2111 = vadd.xlane.f32.xlu0 %v2110
    %v2112 = vpop.xlane.xlu0 %2111
    %v2113 = vmul.f32 %v2109, %v746
    %v2114 = vmul.f32 %v2112, %v746
    %v2115 = vsub.f32 %v2105, %v2113
    %v2116 = vsub.f32 %v2106, %v2114
    %v2117 = vmul.f32 %v2115, %v2115
    %v2118 = vmul.f32 %v2116, %v2116
    %v2119 = vsel %vm702, %v2117, 0.0
    %2120 = vadd.xlane.f32.xlu0 %v2119
    %v2121 = vpop.xlane.xlu0 %2120
    %v2122 = vsel %vm702, %v2118, 0.0
    %2123 = vadd.xlane.f32.xlu0 %v2122
    %v2124 = vpop.xlane.xlu0 %2123
    %v2125 = vmul.f32 %v2121, %v746
    %v2126 = vmul.f32 %v2124, %v746
    %v2127 = vadd.f32 %v2125, 1e-05
    %v2128 = vadd.f32 %v2126, 1e-05
    %v2129 = vrsqrt.pop %v2127
    %v2130 = vmul.f32 %v2129, %v2127
    %v2131 = vmul.f32 %v2130, %v2129
    %v2132 = vmul.f32 0.5, %v2131
    %v2133 = vsub.f32 1.5, %v2132
    %v2134 = vmul.f32 %v2129, %v2133
    %vm2135 = vweird.f32 %v2127
    %vm2136 = vweird.f32 %v2129
    %vm2137 = vmor %vm2135, %vm2136
    %v2138 = vsel %vm2137, %v2129, %v2134
    %v2139 = vrsqrt.pop %v2128
    %v2140 = vmul.f32 %v2139, %v2128
    %v2141 = vmul.f32 %v2140, %v2139
    %v2142 = vmul.f32 0.5, %v2141
    %v2143 = vsub.f32 1.5, %v2142
    %v2144 = vmul.f32 %v2139, %v2143
    %vm2145 = vweird.f32 %v2128
    %vm2146 = vweird.f32 %v2139
    %vm2147 = vmor %vm2145, %vm2146
    %v2148 = vsel %vm2147, %v2139, %v2144
    %v2149 = vmul.f32 %v2115, %v2138
    %v2150 = vmul.f32 %v2116, %v2148
    %v2151 = vld [vmem:[#allocation31] sm:$0x1]
    %v2153 = vperm.slane %v2151, 0
    %v2155 = vmul.f32 %v2149, %v2153
    %v2156 = vmul.f32 %v2150, %v2153
    %v2157 = vld [vmem:[#allocation33] sm:$0x1]
    %v2159 = vperm.slane %v2157, 0
    %v2161 = vadd.f32 %v2155, %v2159
    %v2162 = vadd.f32 %v2156, %v2159
    %v2163 = vld [vmem:[#allocation34] sm:$0xff]
    %v2164 = vld [vmem:[#allocation34 + $0x8] sm:$0xff]
    %v2165 = vld [vmem:[#allocation34 + $0x10] sm:$0xff]
    %v2166 = vld [vmem:[#allocation34 + $0x18] sm:$0xff]
    %v2167 = vld [vmem:[#allocation36] sm:$0x1]
    %v2169 = vperm.slane %v2167, 0
    %v2172 = vsel %vm702, %v2161, 0
    %v2175 = vsel %vm702, %v2162, 0
    %2177 = vmatpush.msra.mxu0 0.0
    %2178 = vmatpush.msra.mxu0 0.0
    %2179 = vmatpush.msra.mxu0 0.0
    %2180 = vmatpush.msra.mxu0 0.0
    %2181 = vmatpush.msra.mxu0 0.0
    %2182 = vmatpush.msra.mxu0 0.0
    %2183 = vmatpush.msra.mxu0 0.0
    %2184 = vmatpush.msra.mxu0 0.0
    %2185 = vmatpush.msra.mxu0 0.0
    %2186 = vmatpush.msra.mxu0 0.0
    %2187 = vmatpush.msra.mxu0 0.0
    %2188 = vmatpush.msra.mxu0 0.0
    %2189 = vmatpush.msra.mxu0 %v2166
    %2190 = vmatpush.msra.mxu0 %v2165
    %2191 = vmatpush.msra.mxu0 %v2164
    %2192 = vmatpush.msra.mxu0 %v2163
    %2193 = vmatmul.f32.gmra.mxu0 %v2172
    %v2194 = vpop.f32.mrf.mxu0
    %v2195 = vadd.f32 %v2169, %v2194
    %2196 = vmatmul.f32.gmra.mxu0 %v2175
    %v2197 = vpop.f32.mrf.mxu0
    %v2198 = vadd.f32 %v2169, %v2197
    %2199 = vdwg.mxu0
    %v2200 = vmax.f32 %v2195, 0.0
    %v2201 = vmax.f32 %v2198, 0.0
    %v2202 = vld [vmem:[#allocation37] sm:$0xff]
    %v2203 = vld [vmem:[#allocation37 + $0x8] sm:$0xff]
    %v2204 = vld [vmem:[#allocation37 + $0x10] sm:$0xff]
    %v2205 = vld [vmem:[#allocation37 + $0x18] sm:$0xff]
    %v2206 = vld [vmem:[#allocation39] sm:$0x1]
    %v2208 = vperm.slane %v2206, 0
    %v2211 = vsel %vm702, %v2200, 0
    %v2214 = vsel %vm702, %v2201, 0
    %2216 = vmatpush.msra.mxu0 0.0
    %2217 = vmatpush.msra.mxu0 0.0
    %2218 = vmatpush.msra.mxu0 0.0
    %2219 = vmatpush.msra.mxu0 0.0
    %2220 = vmatpush.msra.mxu0 0.0
    %2221 = vmatpush.msra.mxu0 0.0
    %2222 = vmatpush.msra.mxu0 0.0
    %2223 = vmatpush.msra.mxu0 0.0
    %2224 = vmatpush.msra.mxu0 0.0
    %2225 = vmatpush.msra.mxu0 0.0
    %2226 = vmatpush.msra.mxu0 0.0
    %2227 = vmatpush.msra.mxu0 0.0
    %2228 = vmatpush.msra.mxu0 %v2205
    %2229 = vmatpush.msra.mxu0 %v2204
    %2230 = vmatpush.msra.mxu0 %v2203
    %2231 = vmatpush.msra.mxu0 %v2202
    %2232 = vmatmul.f32.gmra.mxu0 %v2211
    %v2233 = vpop.f32.mrf.mxu0
    %v2234 = vadd.f32 %v2208, %v2233
    %2235 = vmatmul.f32.gmra.mxu0 %v2214
    %v2236 = vpop.f32.mrf.mxu0
    %v2237 = vadd.f32 %v2208, %v2236
    %2238 = vdwg.mxu0
    %v2239 = vadd.f32 %v2105, %v2234
    %v2240 = vadd.f32 %v2106, %v2237
    %v2241 = vld [vmem:[%s71] sm:$0xff]
    %v2242 = vld [vmem:[%s71 + $0x8] sm:$0xff]
    %v2243 = vld [vmem:[%s71 + $0x10] sm:$0xff]
    %v2244 = vld [vmem:[%s71 + $0x18] sm:$0xff]
    %v2245 = vld [vmem:[#allocation48] sm:$0x1]
    %v2247 = vperm.slane %v2245, 0
    %v2250 = vsel %vm702, %v2239, 0
    %v2253 = vsel %vm702, %v2240, 0
    %2255 = vmatpush.msra.mxu0 0.0
    %2256 = vmatpush.msra.mxu0 0.0
    %2257 = vmatpush.msra.mxu0 0.0
    %2258 = vmatpush.msra.mxu0 0.0
    %2259 = vmatpush.msra.mxu0 0.0
    %2260 = vmatpush.msra.mxu0 0.0
    %2261 = vmatpush.msra.mxu0 0.0
    %2262 = vmatpush.msra.mxu0 0.0
    %2263 = vmatpush.msra.mxu0 0.0
    %2264 = vmatpush.msra.mxu0 0.0
    %2265 = vmatpush.msra.mxu0 0.0
    %2266 = vmatpush.msra.mxu0 0.0
    %2267 = vmatpush.msra.mxu0 %v2244
    %2268 = vmatpush.msra.mxu0 %v2243
    %2269 = vmatpush.msra.mxu0 %v2242
    %2270 = vmatpush.msra.mxu0 %v2241
    %2271 = vmatmul.f32.gmra.mxu0 %v2250
    %v2272 = vpop.f32.mrf.mxu0
    %v2273 = vadd.f32 %v2247, %v2272
    %2274 = vmatmul.f32.gmra.mxu0 %v2253
    %v2275 = vpop.f32.mrf.mxu0
    %v2276 = vadd.f32 %v2247, %v2275
    %2277 = vdwg.mxu0
    %v2278 = vmax.f32 %v2273, 0.0
    %v2279 = vmax.f32 %v2276, 0.0
    %v2280 = vld [vmem:[#allocation49] sm:$0xff]
    %v2281 = vld [vmem:[#allocation49 + $0x8] sm:$0xff]
    %v2282 = vld [vmem:[#allocation49 + $0x10] sm:$0xff]
    %v2283 = vld [vmem:[#allocation49 + $0x18] sm:$0xff]
    %v2284 = vld [vmem:[#allocation51] sm:$0x1]
    %v2286 = vperm.slane %v2284, 0
    %v2289 = vsel %vm702, %v2278, 0
    %v2292 = vsel %vm702, %v2279, 0
    %2294 = vmatpush.msra.mxu0 0.0
    %2295 = vmatpush.msra.mxu0 0.0
    %2296 = vmatpush.msra.mxu0 0.0
    %2297 = vmatpush.msra.mxu0 0.0
    %2298 = vmatpush.msra.mxu0 0.0
    %2299 = vmatpush.msra.mxu0 0.0
    %2300 = vmatpush.msra.mxu0 0.0
    %2301 = vmatpush.msra.mxu0 0.0
    %2302 = vmatpush.msra.mxu0 0.0
    %2303 = vmatpush.msra.mxu0 0.0
    %2304 = vmatpush.msra.mxu0 0.0
    %2305 = vmatpush.msra.mxu0 0.0
    %2306 = vmatpush.msra.mxu0 %v2283
    %2307 = vmatpush.msra.mxu0 %v2282
    %2308 = vmatpush.msra.mxu0 %v2281
    %2309 = vmatpush.msra.mxu0 %v2280
    %2310 = vmatmul.f32.gmra.mxu0 %v2289
    %v2311 = vpop.f32.mrf.mxu0
    %v2312 = vadd.f32 %v2286, %v2311
    %2313 = vmatmul.f32.gmra.mxu0 %v2292
    %v2314 = vpop.f32.mrf.mxu0
    %v2315 = vadd.f32 %v2286, %v2314
    %2316 = vdwg.mxu0
    %v2317 = vmax.f32 %v2312, 0.0
    %v2318 = vmax.f32 %v2315, 0.0
    %v2319 = vld [vmem:[%s79] sm:$0xff]
    %v2320 = vld [vmem:[%s79 + $0x8] sm:$0xff]
    %v2321 = vld [vmem:[%s79 + $0x10] sm:$0xff]
    %v2322 = vld [vmem:[%s79 + $0x18] sm:$0xff]
    %v2323 = vld [vmem:[#allocation52] sm:$0x1]
    %v2325 = vperm.slane %v2323, 0
    %v2328 = vsel %vm702, %v2317, 0
    %v2331 = vsel %vm702, %v2318, 0
    %2333 = vmatpush.msra.mxu0 0.0
    %2334 = vmatpush.msra.mxu0 0.0
    %2335 = vmatpush.msra.mxu0 0.0
    %2336 = vmatpush.msra.mxu0 0.0
    %2337 = vmatpush.msra.mxu0 0.0
    %2338 = vmatpush.msra.mxu0 0.0
    %2339 = vmatpush.msra.mxu0 0.0
    %2340 = vmatpush.msra.mxu0 0.0
    %2341 = vmatpush.msra.mxu0 0.0
    %2342 = vmatpush.msra.mxu0 0.0
    %2343 = vmatpush.msra.mxu0 0.0
    %2344 = vmatpush.msra.mxu0 0.0
    %2345 = vmatpush.msra.mxu0 %v2322
    %2346 = vmatpush.msra.mxu0 %v2321
    %2347 = vmatpush.msra.mxu0 %v2320
    %2348 = vmatpush.msra.mxu0 %v2319
    %2349 = vmatmul.f32.gmra.mxu0 %v2328
    %v2350 = vpop.f32.mrf.mxu0
    %v2351 = vadd.f32 %v2325, %v2350
    %2352 = vmatmul.f32.gmra.mxu0 %v2331
    %v2353 = vpop.f32.mrf.mxu0
    %v2354 = vadd.f32 %v2325, %v2353
    %2355 = vdwg.mxu0
    %vm2356 = vcmask 23552
    %2357 = vst.msk [vmem:[%s83] sm:$0xff] %vm2356, %v2351
    %2358 = vst.msk [vmem:[%s83 + $0x8] sm:$0xff] %vm2356, %v2354
    %v2359 = vsel %vm702, %v2239, 0.0
    %v2360 = vrot.slane %v2359, 4
    %v2361 = vadd.f32 %v2359, %v2360
    %v2362 = vrot.slane %v2361, 2
    %v2363 = vadd.f32 %v2361, %v2362
    %v2364 = vrot.slane %v2363, 1
    %v2365 = vadd.f32 %v2363, %v2364
    %v2366 = vrcp.pop 8.0
    %v2367 = vmul.f32 8.0, %v2366
    %v2368 = vsub.f32 1.0, %v2367
    %v2369 = vmul.f32 %v2366, %v2368
    %v2370 = vadd.f32 %v2366, %v2369
    %vm2371 = vweird.f32 %v2366
    %v2372 = vsel %vm2371, %v2366, %v2370
    %v2373 = vmul.f32 %v2365, %v2372
    %v2374 = vld [vmem:[#allocation40] sm:$0xff]
    %v2375 = vld [vmem:[#allocation40 + $0x8] sm:$0xff]
    %v2376 = vld [vmem:[#allocation40 + $0x10] sm:$0xff]
    %v2377 = vld [vmem:[#allocation40 + $0x18] sm:$0xff]
    %v2378 = vld [vmem:[#allocation42] sm:$0x1]
    %v2380 = vsel %vm702, %v2373, 0
    %2382 = vmatpush.msra.mxu0 0.0
    %2383 = vmatpush.msra.mxu0 0.0
    %2384 = vmatpush.msra.mxu0 0.0
    %2385 = vmatpush.msra.mxu0 0.0
    %2386 = vmatpush.msra.mxu0 0.0
    %2387 = vmatpush.msra.mxu0 0.0
    %2388 = vmatpush.msra.mxu0 0.0
    %2389 = vmatpush.msra.mxu0 0.0
    %2390 = vmatpush.msra.mxu0 0.0
    %2391 = vmatpush.msra.mxu0 0.0
    %2392 = vmatpush.msra.mxu0 0.0
    %2393 = vmatpush.msra.mxu0 0.0
    %2394 = vmatpush.msra.mxu0 %v2377
    %2395 = vmatpush.msra.mxu0 %v2376
    %2396 = vmatpush.msra.mxu0 %v2375
    %2397 = vmatpush.msra.mxu0 %v2374
    %2398 = vmatmul.f32.gmra.mxu0 %v2380
    %v2399 = vpop.f32.mrf.mxu0
    %v2400 = vadd.f32 %v2378, %v2399
    %2401 = vdwg.mxu0
    %v2402 = vmax.f32 %v2400, 0.0
    %v2403 = vld [vmem:[#allocation43] sm:$0xff]
    %v2404 = vld [vmem:[#allocation43 + $0x8] sm:$0xff]
    %v2405 = vld [vmem:[#allocation43 + $0x10] sm:$0xff]
    %v2406 = vld [vmem:[#allocation43 + $0x18] sm:$0xff]
    %v2407 = vld [vmem:[#allocation45] sm:$0x1]
    %v2409 = vsel %vm702, %v2402, 0
    %2411 = vmatpush.msra.mxu0 0.0
    %2412 = vmatpush.msra.mxu0 0.0
    %2413 = vmatpush.msra.mxu0 0.0
    %2414 = vmatpush.msra.mxu0 0.0
    %2415 = vmatpush.msra.mxu0 0.0
    %2416 = vmatpush.msra.mxu0 0.0
    %2417 = vmatpush.msra.mxu0 0.0
    %2418 = vmatpush.msra.mxu0 0.0
    %2419 = vmatpush.msra.mxu0 0.0
    %2420 = vmatpush.msra.mxu0 0.0
    %2421 = vmatpush.msra.mxu0 0.0
    %2422 = vmatpush.msra.mxu0 0.0
    %2423 = vmatpush.msra.mxu0 %v2406
    %2424 = vmatpush.msra.mxu0 %v2405
    %2425 = vmatpush.msra.mxu0 %v2404
    %2426 = vmatpush.msra.mxu0 %v2403
    %2427 = vmatmul.f32.gmra.mxu0 %v2409
    %v2428 = vpop.f32.mrf.mxu0
    %v2429 = vadd.f32 %v2407, %v2428
    %2430 = vdwg.mxu0
    %v2431 = vmax.f32 %v2429, 0.0
    %v2432 = vld [vmem:[%s67] sm:$0xff]
    %v2433 = vld [vmem:[%s67 + $0x8] sm:$0xff]
    %v2434 = vld [vmem:[%s67 + $0x10] sm:$0xff]
    %v2435 = vld [vmem:[%s67 + $0x18] sm:$0xff]
    %v2436 = vld [vmem:[#allocation46] sm:$0x1]
    %v2438 = vsel %vm702, %v2431, 0
    %2440 = vmatpush.msra.mxu0 0.0
    %2441 = vmatpush.msra.mxu0 0.0
    %2442 = vmatpush.msra.mxu0 0.0
    %2443 = vmatpush.msra.mxu0 0.0
    %2444 = vmatpush.msra.mxu0 0.0
    %2445 = vmatpush.msra.mxu0 0.0
    %2446 = vmatpush.msra.mxu0 0.0
    %2447 = vmatpush.msra.mxu0 0.0
    %2448 = vmatpush.msra.mxu0 0.0
    %2449 = vmatpush.msra.mxu0 0.0
    %2450 = vmatpush.msra.mxu0 0.0
    %2451 = vmatpush.msra.mxu0 0.0
    %2452 = vmatpush.msra.mxu0 %v2435
    %2453 = vmatpush.msra.mxu0 %v2434
    %2454 = vmatpush.msra.mxu0 %v2433
    %2455 = vmatpush.msra.mxu0 %v2432
    %2456 = vmatmul.f32.gmra.mxu0 %v2438
    %v2457 = vpop.f32.mrf.mxu0
    %v2458 = vadd.f32 %v2436, %v2457
    %2459 = vdwg.mxu0
    %vm2460 = vcmask 49152
    %2461 = vst.msk [vmem:[%s85] sm:$0x1] %vm2460, %v2458
    // Predicated region
    $region302: #{_lambda_.1} parent=1 // pred_check
      _
    $region303: #{_lambda_.1} parent=1 // pred_check_branch
      %2463 = sbr.rel (0) target = $region305
    $region304: #{_lambda_.1} parent=1 // pred_region
      _
    $region305: #{_lambda_.1} parent=1 // pred_fallthru
      _
    // Predicated region
    $region306: #{_lambda_.1} parent=1 // pred_check
      _
    $region307: #{_lambda_.1} parent=1 // pred_check_branch
      %2465 = sbr.rel (0) target = $region309
    $region308: #{_lambda_.1} parent=1 // pred_region
      _
    $region309: #{_lambda_.1} parent=1 // pred_fallthru
      _
    // Predicated region
    $region310: #{_lambda_.1} parent=1 // pred_check
      _
    $region311: #{_lambda_.1} parent=1 // pred_check_branch
      %2467 = sbr.rel (0) target = $region313
    $region312: #{_lambda_.1} parent=1 // pred_region
      _
    $region313: #{_lambda_.1} parent=1 // pred_fallthru
      _
    // Predicated region
    $region314: #{_lambda_.1} parent=1 // pred_check
      _
    $region315: #{_lambda_.1} parent=1 // pred_check_branch
      %2469 = sbr.rel (0) target = $region317
    $region316: #{_lambda_.1} parent=1 // pred_region
      _
    $region317: #{_lambda_.1} parent=1 // pred_fallthru
      _
    %2470 = vsyncpa [#allocation3], 1
    %2471 = vsyncpa [#allocation5], 1
    %2472 = vsyncpa [#allocation8], 1
    %2473 = vsyncpa [#allocation11], 1
    %2474 = vsyncpa [#allocation14], 1
    %2475 = vsyncpa [#allocation17], 1
    %2476 = vsyncpa [#allocation20], 1
    %2477 = vsyncpa [#allocation23], 1
    %2478 = vsyncpa [#allocation26], 1
    %2479 = vsyncpa [#allocation29], 1
    %2480 = vsyncpa [#allocation32], 1
    %2481 = vsyncpa [#allocation35], 1
    %2482 = vsyncpa [#allocation38], 1
    %2483 = vsyncpa [#allocation41], 1
    %2484 = vsyncpa [#allocation44], 1
    %2485 = vsyncpa [#allocation47], 1
    %2486 = vsyncpa [#allocation50], 1
    %2487 = vsyncpa [#allocation53], 1

</llo_original>
